<compile_context>
chip_gen: v5e
topology: v5e:2x2
jax: 0.10.0
libtpu: 0.0.40
codegen_flags: <defaults>
</compile_context>

<pallas_src>
import functools
import math

import jax
import jax.numpy as jnp
from jax.experimental import pallas as pl
from jax.experimental.pallas import tpu as pltpu


# --------------------------------------------------------------------------
# Small helpers
# --------------------------------------------------------------------------
def _round_up(x, m):
    return (x + m - 1) // m * m


def _layernorm(x, g, b, eps):
    mean = jnp.mean(x, axis=-1, keepdims=True)
    xc = x - mean
    var = jnp.mean(xc * xc, axis=-1, keepdims=True)
    return xc * jax.lax.rsqrt(var + eps) * g + b


def _gelu_tanh(x):
    c = 0.7978845608028654  # sqrt(2/pi)
    return 0.5 * x * (1.0 + jnp.tanh(c * (x + 0.044715 * x * x * x)))


def _tpu_hw():
    """Best-effort (physical VMEM bytes, #TensorCores sharing the grid)."""
    vmem = None
    try:
        vmem = int(pltpu.get_tpu_info().vmem_capacity_bytes)
    except Exception:
        vmem = None
    kind = ""
    try:
        kind = jax.devices()[0].device_kind.lower()
    except Exception:
        pass
    is_v7 = ("v7" in kind) or ("7x" in kind)
    if vmem is None:
        vmem = (64 if is_v7 else 128) * 1024 * 1024
    two_cores = is_v7 or ("v5p" in kind) or ("v4" in kind)
    return vmem, (2 if two_cores else 1)


# --------------------------------------------------------------------------
# Fused kernel: patch-embed + all encoder layers + flatten head
#   grid = (num_bn_tiles, num_layers); BN axis "parallel", layer axis "arbitrary"
# --------------------------------------------------------------------------
def _fused_encoder_kernel(
    patches_ref,                       # [TBN, P, plen]          bf16
    wp_ref, bp_ref, wpos_ref,          # [plen,D] bf16, [1,D] f32, [P,D] f32
    wqkv_ref, wo_ref,                  # [1,D,E] bf16, [1,H*dv,D] bf16
    wff1_ref, wff2_ref,                # [1,D,dffp] bf16, [1,dffp,D] bf16
    vecs_ref,                          # [1,8,VW] f32 packed per-layer vectors
    headw_ref, headb_ref,              # [P,D,Op] bf16, [1,Op] f32
    y_ref,                             # out: [TBN, Op] f32
    *scratch,                          # src [TBN,P,D] f32 (+ scores [H,TBN,P,P] f32)
    H, dk, dv, E, dffp, scale, res_attn, eps):
    src_ref = scratch[0]
    score_ref = scratch[1] if res_attn else None

    layer = pl.program_id(1)
    num_layers = pl.num_programs(1)
    tbn, P, plen = patches_ref.shape
    D = wp_ref.shape[1]
    Op = headb_ref.shape[1]
    T = tbn * P
    bf16 = jnp.bfloat16

    # ---- first layer iteration: patch embedding + positional encoding ----
    @pl.when(layer == 0)
    def _embed():
        x2 = patches_ref[...].reshape(T, plen)
        u = jnp.dot(x2, wp_ref[...], preferred_element_type=jnp.float32)
        u = u + bp_ref[...]
        src_ref[...] = u.reshape(tbn, P, D) + wpos_ref[...][None]
        if res_attn:
            score_ref[...] = jnp.zeros_like(score_ref)

    # ---- unpack the single per-layer "small vectors" block (one DMA) ----
    vecs = vecs_ref[0]                     # [8, VW] f32
    bqkv = vecs[0:1, :E]
    bo   = vecs[1:2, :D]
    ln1g = vecs[2:3, :D]
    ln1b = vecs[3:4, :D]
    bff1 = vecs[4:5, :dffp]
    bff2 = vecs[5:6, :D]
    ln2g = vecs[6:7, :D]
    ln2b = vecs[7:8, :D]

    # ---- one encoder layer (all intermediates VMEM-resident) ----
    src2 = src_ref[...].reshape(T, D)      # f32

    # fused Q/K/V projection: single bf16 MXU matmul, f32 accumulation
    qkv = jnp.dot(src2.astype(bf16), wqkv_ref[0],
                  preferred_element_type=jnp.float32) + bqkv

    head_outs = []
    for h in range(H):
        q_h = qkv[:, h * dk:(h + 1) * dk].astype(bf16).reshape(tbn, P, dk)
        k_h = qkv[:, H * dk + h * dk:H * dk + (h + 1) * dk].astype(bf16).reshape(tbn, P, dk)
        v_h = qkv[:, 2 * H * dk + h * dv:2 * H * dk + (h + 1) * dv].astype(bf16).reshape(tbn, P, dv)

        s = jnp.einsum("bpd,bqd->bpq", q_h, k_h,
                       preferred_element_type=jnp.float32) * scale
        if res_attn:
            # residual pre-softmax scores from previous layer (zeros at layer 0)
            s = s + score_ref[h]
            score_ref[h] = s
        m = jnp.max(s, axis=-1, keepdims=True)
        e = jnp.exp(s - m)
        a = e * pl.reciprocal(jnp.sum(e, axis=-1, keepdims=True), approx=True)
        head_outs.append(jnp.einsum("bpq,bqd->bpd", a.astype(bf16), v_h,
                                    preferred_element_type=jnp.float32))
    attn = jnp.concatenate(head_outs, axis=-1).reshape(T, H * dv)

    o = jnp.dot(attn.astype(bf16), wo_ref[0],
                preferred_element_type=jnp.float32) + bo
    src2 = _layernorm(src2 + o, ln1g, ln1b, eps)              # post-norm 1

    ff = jnp.dot(src2.astype(bf16), wff1_ref[0],
                 preferred_element_type=jnp.float32) + bff1
    ff = _gelu_tanh(ff)
    ff = jnp.dot(ff.astype(bf16), wff2_ref[0],
                 preferred_element_type=jnp.float32) + bff2
    src2 = _layernorm(src2 + ff, ln2g, ln2b, eps)             # post-norm 2

    src_ref[...] = src2.reshape(tbn, P, D)

    # ---- last layer iteration: Flatten_Head (lane-dense, Op padded to 128) ----
    @pl.when(layer == num_layers - 1)
    def _head():
        acc = jnp.zeros((tbn, Op), jnp.float32)
        for p in range(P):
            acc = acc + jnp.dot(src_ref[:, p, :].astype(bf16), headw_ref[p],
                                preferred_element_type=jnp.float32)
        y_ref[...] = acc + headb_ref[...]


def fused_encoder_and_head(patches, params, cfg):
    """patches: [BN, P, plen] -> [BN, out_lens]  (single fused pallas_call)."""
    BN, P, plen = patches.shape
    D = cfg["num_hidden"]
    H = cfg["num_heads"]
    dk = cfg["num_hidden_key_per_head"]
    dv = cfg["num_hidden_value_per_head"]
    dff = cfg["num_hidden_ff"]
    NL = cfg["num_layers"]
    O = cfg["out_lens"]
    res_attn = bool(cfg["res_attn_scores"])
    E = H * (2 * dk + dv)

    # lane-dense padding of matmul output dims (padding is mathematically inert)
    dffp = _round_up(dff, 128)
    Op = _round_up(O, 128)
    VW = _round_up(max(E, dffp, D), 128)

    bf16, f32 = jnp.bfloat16, jnp.float32

    # ---- weight padding / casting (trace-time, once per jit call) ----
    wp = params["W_P"].astype(bf16)
    wqkv = params["Wqkv"].astype(bf16)
    wo = params["Wo"].astype(bf16)
    wff1 = jnp.pad(params["Wff1"], ((0, 0), (0, 0), (0, dffp - dff))).astype(bf16)
    wff2 = jnp.pad(params["Wff2"], ((0, 0), (0, dffp - dff), (0, 0))).astype(bf16)
    # Flatten_Head flattens [D, P] with D major; re-order to [P, D, O] so the
    # kernel does per-patch [TBN,D]@[D,Op] MXU matmuls with no in-kernel transpose.
    head_w3 = jnp.pad(params["head_W"].reshape(D, P, O).transpose(1, 0, 2),
                      ((0, 0), (0, 0), (0, Op - O))).astype(bf16)
    head_b = jnp.pad(params["head_b"], ((0, 0), (0, Op - O))).astype(f32)

    def _row(v):                              # [NL,1,w] -> [NL,1,VW] f32
        return jnp.pad(v.astype(f32), ((0, 0), (0, 0), (0, VW - v.shape[-1])))
    vecs = jnp.concatenate(
        [_row(params["bqkv"]), _row(params["bo"]),
         _row(params["ln1_g"]), _row(params["ln1_b"]),
         _row(params["bff1"]), _row(params["bff2"]),
         _row(params["ln2_g"]), _row(params["ln2_b"])], axis=1)   # [NL,8,VW]

    # ---- per-generation VMEM budget and BN-tile (tbn) selection ----
    phys_vmem, num_tc = _tpu_hw()
    vmem_limit = min(phys_vmem - 8 * 1024 * 1024, 112 * 1024 * 1024)
    budget = int(vmem_limit * 0.6)            # headroom for compiler temps

    layer_w = 2 * 2 * (D * E + H * dv * D + 2 * D * dffp) + 2 * 4 * 8 * VW
    const_w = 2 * (plen * D + P * D * Op) + 4 * (D + P * D + Op)
    fixed = layer_w + const_w

    def vmem_need(t):
        scratch_b = t * P * D * 4 + (H * t * P * P * 4 if res_attn else 0)
        io = 2 * (t * P * plen * 2 + t * Op * 4)
        temps = 4 * t * P * (E + dffp + H * dv + 2 * D)
        return fixed + scratch_b + io + temps

    cands = ([BN] if BN <= 1024 else []) + [c for c in (256, 128, 64, 32, 16, 8) if c < BN]
    tbn = None
    for c in cands:
        if vmem_need(c) <= budget:
            tbn = c
            break
    if tbn is None:
        tbn = max(1, min(BN, 8))
    # 2-TensorCore parts: give both cores work on the "parallel" BN axis
    if num_tc >= 2 and tbn >= BN and BN >= 16:
        tbn = _round_up((BN + 1) // 2, 8)

    bn_pad = _round_up(BN, tbn)
    if bn_pad != BN:
        patches = jnp.pad(patches, ((0, bn_pad - BN), (0, 0), (0, 0)))
    patches = patches.astype(bf16)

    scale = 1.0 / math.sqrt(dk)
    kernel = functools.partial(_fused_encoder_kernel, H=H, dk=dk, dv=dv, E=E,
                               dffp=dffp, scale=scale, res_attn=res_attn,
                               eps=1e-5)

    grid = (bn_pad // tbn, NL)
    per_layer3 = lambda i, l: (l, 0, 0)
    const2 = lambda i, l: (0, 0)
    const3 = lambda i, l: (0, 0, 0)

    in_specs = [
        pl.BlockSpec((tbn, P, plen), lambda i, l: (i, 0, 0)),   # patches (bf16)
        pl.BlockSpec((plen, D), const2),                        # W_P (bf16)
        pl.BlockSpec((1, D), const2),                           # b_P (f32)
        pl.BlockSpec((P, D), const2),                           # W_pos (f32)
        pl.BlockSpec((1, D, E), per_layer3),                    # Wqkv (bf16)
        pl.BlockSpec((1, H * dv, D), per_layer3),               # Wo (bf16)
        pl.BlockSpec((1, D, dffp), per_layer3),                 # Wff1 (bf16)
        pl.BlockSpec((1, dffp, D), per_layer3),                 # Wff2 (bf16)
        pl.BlockSpec((1, 8, VW), per_layer3),                   # packed vectors
        pl.BlockSpec((P, D, Op), const3),                       # head_W (bf16)
        pl.BlockSpec((1, Op), const2),                          # head_b (f32)
    ]
    out_specs = pl.BlockSpec((tbn, Op), lambda i, l: (i, 0))

    scratch_shapes = [pltpu.VMEM((tbn, P, D), f32)]
    if res_attn:
        scratch_shapes.append(pltpu.VMEM((H, tbn, P, P), f32))

    operands = (patches, wp, params["b_P"], params["W_pos"],
                wqkv, wo, wff1, wff2, vecs, head_w3, head_b)

    # Advisory cost estimate so XLA overlaps the remaining JAX glue.
    tokens = bn_pad * P
    flops_layer = (2 * tokens * D * E
                   + 2 * bn_pad * H * P * P * (dk + dv)
                   + 2 * tokens * (H * dv) * D
                   + 4 * tokens * D * dffp)
    flops = 2 * tokens * plen * D + NL * flops_layer + 2 * bn_pad * P * D * Op
    transc = NL * (bn_pad * H * P * P + tokens * dffp)
    bytes_accessed = (sum(int(a.size) * a.dtype.itemsize for a in operands)
                      + bn_pad * Op * 4)

    y = pl.pallas_call(
        kernel,
        grid=grid,
        out_shape=jax.ShapeDtypeStruct((bn_pad, Op), f32),
        in_specs=in_specs,
        out_specs=out_specs,
        scratch_shapes=scratch_shapes,
        compiler_params=pltpu.CompilerParams(
            dimension_semantics=("parallel", "arbitrary"),
            vmem_limit_bytes=int(vmem_limit)),
        cost_estimate=pl.CostEstimate(flops=int(flops),
                                      transcendentals=int(transc),
                                      bytes_accessed=int(bytes_accessed)),
    )(*operands)
    return y[:BN, :O]


# --------------------------------------------------------------------------
# Parameter construction (deterministic, synthetic; layer params pre-stacked)
# --------------------------------------------------------------------------
def init_params(key, cfg):
    D = cfg["num_hidden"]
    H = cfg["num_heads"]
    dk = cfg["num_hidden_key_per_head"]
    dv = cfg["num_hidden_value_per_head"]
    dff = cfg["num_hidden_ff"]
    P = cfg["num_patches"]
    plen = cfg["patch_lens"]
    N = cfg["num_nodes"]
    out_lens = cfg["out_lens"]
    NL = cfg["num_layers"]
    E = H * (2 * dk + dv)

    keys = jax.random.split(key, 7)

    def dense(k, shape, scale=0.02):
        return (scale * jax.random.normal(k, shape)).astype(jnp.float32)

    return {
        "revin_w": jnp.ones((N,), jnp.float32),
        "revin_b": jnp.zeros((N,), jnp.float32),
        "W_P": dense(keys[0], (plen, D)),
        "b_P": jnp.zeros((1, D), jnp.float32),
        "W_pos": dense(keys[1], (P, D)),
        "head_W": dense(keys[2], (D * P, out_lens)),
        "head_b": jnp.zeros((1, out_lens), jnp.float32),
        # per-layer params stacked along a leading layer axis; Q/K/V fused
        # along the output lanes as [Q heads | K heads | V heads] (head-major).
        "Wqkv": dense(keys[3], (NL, D, E)),
        "bqkv": jnp.zeros((NL, 1, E), jnp.float32),
        "Wo": dense(keys[4], (NL, H * dv, D)),
        "bo": jnp.zeros((NL, 1, D), jnp.float32),
        "ln1_g": jnp.ones((NL, 1, D), jnp.float32),
        "ln1_b": jnp.zeros((NL, 1, D), jnp.float32),
        "Wff1": dense(keys[5], (NL, D, dff)),
        "bff1": jnp.zeros((NL, 1, dff), jnp.float32),
        "Wff2": dense(keys[6], (NL, dff, D)),
        "bff2": jnp.zeros((NL, 1, D), jnp.float32),
        "ln2_g": jnp.ones((NL, 1, D), jnp.float32),
        "ln2_b": jnp.zeros((NL, 1, D), jnp.float32),
    }


# --------------------------------------------------------------------------
# Forward pass (RevIN / patching glue in JAX, everything else in one kernel)
# --------------------------------------------------------------------------
def predictor_forward(params, x, cfg):
    # x: [B, in_lens, num_nodes]
    B, L, N = x.shape
    P = cfg["num_patches"]
    plen = cfg["patch_lens"]
    stride = cfg["stride"]
    out_lens = cfg["out_lens"]
    eps = 1e-5

    # ---- RevIN 'norm': stats over the time dim, per (batch, node) ----
    mean = jnp.mean(x, axis=1, keepdims=True)                      # [B,1,N]
    stdev = jnp.sqrt(jnp.var(x, axis=1, keepdims=True) + eps)      # [B,1,N]
    xn = (x - mean) / stdev
    xn = xn * params["revin_w"] + params["revin_b"]

    # ---- permute + ReplicationPad1d((0, stride)) + unfold -> patches ----
    xp = jnp.transpose(xn, (0, 2, 1))                              # [B,N,L]
    xp = jnp.concatenate([xp, jnp.repeat(xp[..., -1:], stride, axis=-1)], axis=-1)
    starts = jnp.arange(P) * stride
    idx = starts[:, None] + jnp.arange(plen)[None, :]              # [P, plen]
    patches = xp[..., idx]                                         # [B,N,P,plen]

    BN = B * N
    patches = patches.reshape(BN, P, plen).astype(jnp.float32)

    # ---- fused: patch-embed + encoder layers + Flatten_Head ----
    y = fused_encoder_and_head(patches, params, cfg)               # [BN, out_lens]
    y = y.reshape(B, N, out_lens).transpose(0, 2, 1)               # [B, out_lens, N]

    # ---- RevIN 'denorm' ----
    y = (y - params["revin_b"]) / (params["revin_w"] + eps * eps)
    y = y * stdev + mean
    return y


# --------------------------------------------------------------------------
# Main
# --------------------------------------------------------------------------
if __name__ == "__main__":
    # Small, forward-consistent configuration
    in_lens, patch_lens, stride = 16, 4, 2
    num_patches = int((in_lens - patch_lens) / stride + 1) + 1     # 8
    cfg = dict(
        num_nodes=4,
        in_lens=in_lens,
        out_lens=8,
        num_layers=2,
        num_heads=2,
        num_hidden=32,
        num_hidden_key_per_head=16,
        num_hidden_value_per_head=16,
        num_hidden_ff=64,
        patch_lens=patch_lens,
        stride=stride,
        num_patches=num_patches,
        res_attn_scores=True,
    )

    key = jax.random.PRNGKey(0)
    k_x, k_p = jax.random.split(key)
    x = jax.random.normal(k_x, (2, cfg["in_lens"], cfg["num_nodes"]), dtype=jnp.float32)
    params = init_params(k_p, cfg)

    fwd = jax.jit(lambda p, xx: predictor_forward(p, xx, cfg))
    y = jax.block_until_ready(fwd(params, x))

    assert y.shape == (2, cfg["out_lens"], cfg["num_nodes"]), y.shape
    assert bool(jnp.all(jnp.isfinite(y)))
    print("KERNEL_OK")
</pallas_src>

<mosaic_0001>
module attributes {stable_mosaic.version = 11 : i64} {
  func.func @_fused_encoder_kernel(%arg0: i32, %arg1: i32, %arg2: memref<8x8x4xbf16, #tpu.memory_space<vmem>>, %arg3: memref<4x32xbf16, #tpu.memory_space<vmem>>, %arg4: memref<1x32xf32, #tpu.memory_space<vmem>>, %arg5: memref<8x32xf32, #tpu.memory_space<vmem>>, %arg6: memref<1x32x96xbf16, #tpu.memory_space<vmem>>, %arg7: memref<1x32x32xbf16, #tpu.memory_space<vmem>>, %arg8: memref<1x32x128xbf16, #tpu.memory_space<vmem>>, %arg9: memref<1x128x32xbf16, #tpu.memory_space<vmem>>, %arg10: memref<1x8x128xf32, #tpu.memory_space<vmem>>, %arg11: memref<8x32x128xbf16, #tpu.memory_space<vmem>>, %arg12: memref<1x128xf32, #tpu.memory_space<vmem>>, %arg13: memref<8x128xf32, #tpu.memory_space<vmem>>, %arg14: memref<8x8x32xf32, #tpu.memory_space<vmem>>, %arg15: memref<2x8x8x8xf32, #tpu.memory_space<vmem>>) attributes {dimension_semantics = [#tpu.dimension_semantics<parallel>, #tpu.dimension_semantics<arbitrary>], iteration_bounds = array<i64: 1, 2>, scalar_prefetch = 0 : i64, scratch_operands = 2 : i64, tpu.core_type = #tpu.core_type<tc>, window_params = [{transform_indices = @transform_0, window_bounds = array<i64: 8, 8, 4>}, {pipeline_mode = #tpu.pipeline_mode<synchronous>, transform_indices = @transform_1, window_bounds = array<i64: 4, 32>}, {pipeline_mode = #tpu.pipeline_mode<synchronous>, transform_indices = @transform_2, window_bounds = array<i64: 1, 32>}, {pipeline_mode = #tpu.pipeline_mode<synchronous>, transform_indices = @transform_3, window_bounds = array<i64: 8, 32>}, {transform_indices = @transform_4, window_bounds = array<i64: 1, 32, 96>}, {transform_indices = @transform_5, window_bounds = array<i64: 1, 32, 32>}, {transform_indices = @transform_6, window_bounds = array<i64: 1, 32, 128>}, {transform_indices = @transform_7, window_bounds = array<i64: 1, 128, 32>}, {transform_indices = @transform_8, window_bounds = array<i64: 1, 8, 128>}, {pipeline_mode = #tpu.pipeline_mode<synchronous>, transform_indices = @transform_9, window_bounds = array<i64: 8, 32, 128>}, {pipeline_mode = #tpu.pipeline_mode<synchronous>, transform_indices = @transform_10, window_bounds = array<i64: 1, 128>}, {transform_indices = @transform_11, window_bounds = array<i64: 8, 128>}]} {
    %c0_i32 = arith.constant 0 : i32
    %0 = arith.cmpi eq, %arg1, %c0_i32 : i32
    %1 = arith.extui %0 : i1 to i32
    %c0_i32_0 = arith.constant 0 : i32
    %2 = arith.cmpi ne, %1, %c0_i32_0 : i32
    scf.if %2 {
      %c0_64 = arith.constant 0 : index
      %c0_65 = arith.constant 0 : index
      %c0_66 = arith.constant 0 : index
      %161 = vector.load %arg2[%c0_64, %c0_65, %c0_66] : memref<8x8x4xbf16, #tpu.memory_space<vmem>>, vector<8x8x4xbf16>
      %162 = vector.shape_cast %161 : vector<8x8x4xbf16> to vector<64x4xbf16>
      %c0_67 = arith.constant 0 : index
      %c0_68 = arith.constant 0 : index
      %163 = vector.load %arg3[%c0_67, %c0_68] : memref<4x32xbf16, #tpu.memory_space<vmem>>, vector<4x32xbf16>
      %cst_69 = arith.constant dense<0.000000e+00> : vector<64x32xf32>
      %164 = tpu.matmul %162, %163, %cst_69 {dimension_numbers = #tpu.dot_dimension_numbers<[1], [0], [0], [1], [0, 0, 1, 1], [], []>} : vector<64x4xbf16>, vector<4x32xbf16>, vector<64x32xf32> -> vector<64x32xf32>
      %c0_70 = arith.constant 0 : index
      %c0_71 = arith.constant 0 : index
      %165 = vector.load %arg4[%c0_70, %c0_71] : memref<1x32xf32, #tpu.memory_space<vmem>>, vector<1x32xf32>
      %166 = vector.broadcast %165 : vector<1x32xf32> to vector<64x32xf32>
      %167 = arith.addf %164, %166 : vector<64x32xf32>
      %168 = vector.shape_cast %167 : vector<64x32xf32> to vector<8x8x32xf32>
      %c0_72 = arith.constant 0 : index
      %c0_73 = arith.constant 0 : index
      %169 = vector.load %arg5[%c0_72, %c0_73] : memref<8x32xf32, #tpu.memory_space<vmem>>, vector<8x32xf32>
      %170 = vector.shape_cast %169 : vector<8x32xf32> to vector<1x8x32xf32>
      %171 = vector.broadcast %170 : vector<1x8x32xf32> to vector<8x8x32xf32>
      %172 = arith.addf %168, %171 : vector<8x8x32xf32>
      %c0_74 = arith.constant 0 : index
      %c0_75 = arith.constant 0 : index
      %c0_76 = arith.constant 0 : index
      %173 = vector.load %arg14[%c0_74, %c0_75, %c0_76] : memref<8x8x32xf32, #tpu.memory_space<vmem>>, vector<8x8x32xf32>
      tpu.vector_store %arg14[%c0_74, %c0_75, %c0_76], %172 {strides = array<i32>} : memref<8x8x32xf32, #tpu.memory_space<vmem>>, vector<8x8x32xf32>,
      %cst_77 = arith.constant 0.000000e+00 : f32
      %174 = vector.broadcast %cst_77 : f32 to vector<2x8x8x8xf32>
      %c0_78 = arith.constant 0 : index
      %c0_79 = arith.constant 0 : index
      %c0_80 = arith.constant 0 : index
      %c0_81 = arith.constant 0 : index
      %175 = vector.load %arg15[%c0_78, %c0_79, %c0_80, %c0_81] : memref<2x8x8x8xf32, #tpu.memory_space<vmem>>, vector<2x8x8x8xf32>
      tpu.vector_store %arg15[%c0_78, %c0_79, %c0_80, %c0_81], %174 {strides = array<i32>} : memref<2x8x8x8xf32, #tpu.memory_space<vmem>>, vector<2x8x8x8xf32>,
    } else {
    }
    %c0 = arith.constant 0 : index
    %c0_1 = arith.constant 0 : index
    %c0_2 = arith.constant 0 : index
    %3 = vector.load %arg10[%c0, %c0_1, %c0_2] : memref<1x8x128xf32, #tpu.memory_space<vmem>>, vector<1x8x128xf32>
    %4 = vector.shape_cast %3 : vector<1x8x128xf32> to vector<8x128xf32>
    %5 = vector.extract_strided_slice %4 {offsets = [0, 0], sizes = [1, 96], strides = [1, 1]} : vector<8x128xf32> to vector<1x96xf32>
    %6 = vector.extract_strided_slice %4 {offsets = [1, 0], sizes = [1, 32], strides = [1, 1]} : vector<8x128xf32> to vector<1x32xf32>
    %7 = vector.extract_strided_slice %4 {offsets = [2, 0], sizes = [1, 32], strides = [1, 1]} : vector<8x128xf32> to vector<1x32xf32>
    %8 = vector.extract_strided_slice %4 {offsets = [3, 0], sizes = [1, 32], strides = [1, 1]} : vector<8x128xf32> to vector<1x32xf32>
    %9 = vector.extract_strided_slice %4 {offsets = [4, 0], sizes = [1, 128], strides = [1, 1]} : vector<8x128xf32> to vector<1x128xf32>
    %10 = vector.extract_strided_slice %4 {offsets = [5, 0], sizes = [1, 32], strides = [1, 1]} : vector<8x128xf32> to vector<1x32xf32>
    %11 = vector.extract_strided_slice %4 {offsets = [6, 0], sizes = [1, 32], strides = [1, 1]} : vector<8x128xf32> to vector<1x32xf32>
    %12 = vector.extract_strided_slice %4 {offsets = [7, 0], sizes = [1, 32], strides = [1, 1]} : vector<8x128xf32> to vector<1x32xf32>
    %c0_3 = arith.constant 0 : index
    %c0_4 = arith.constant 0 : index
    %c0_5 = arith.constant 0 : index
    %13 = vector.load %arg14[%c0_3, %c0_4, %c0_5] : memref<8x8x32xf32, #tpu.memory_space<vmem>>, vector<8x8x32xf32>
    %14 = vector.shape_cast %13 : vector<8x8x32xf32> to vector<64x32xf32>
    %15 = arith.truncf %14 : vector<64x32xf32> to vector<64x32xbf16>
    %c0_6 = arith.constant 0 : index
    %c0_7 = arith.constant 0 : index
    %c0_8 = arith.constant 0 : index
    %16 = vector.load %arg6[%c0_6, %c0_7, %c0_8] : memref<1x32x96xbf16, #tpu.memory_space<vmem>>, vector<1x32x96xbf16>
    %17 = vector.shape_cast %16 : vector<1x32x96xbf16> to vector<32x96xbf16>
    %cst = arith.constant dense<0.000000e+00> : vector<64x96xf32>
    %18 = tpu.matmul %15, %17, %cst {dimension_numbers = #tpu.dot_dimension_numbers<[1], [0], [0], [1], [0, 0, 1, 1], [], []>} : vector<64x32xbf16>, vector<32x96xbf16>, vector<64x96xf32> -> vector<64x96xf32>
    %19 = vector.broadcast %5 : vector<1x96xf32> to vector<64x96xf32>
    %20 = arith.addf %18, %19 : vector<64x96xf32>
    %21 = vector.extract_strided_slice %20 {offsets = [0, 0], sizes = [64, 16], strides = [1, 1]} : vector<64x96xf32> to vector<64x16xf32>
    %22 = arith.truncf %21 : vector<64x16xf32> to vector<64x16xbf16>
    %23 = vector.shape_cast %22 : vector<64x16xbf16> to vector<8x8x16xbf16>
    %24 = vector.extract_strided_slice %20 {offsets = [0, 32], sizes = [64, 16], strides = [1, 1]} : vector<64x96xf32> to vector<64x16xf32>
    %25 = arith.truncf %24 : vector<64x16xf32> to vector<64x16xbf16>
    %26 = vector.shape_cast %25 : vector<64x16xbf16> to vector<8x8x16xbf16>
    %27 = vector.extract_strided_slice %20 {offsets = [0, 64], sizes = [64, 16], strides = [1, 1]} : vector<64x96xf32> to vector<64x16xf32>
    %28 = arith.truncf %27 : vector<64x16xf32> to vector<64x16xbf16>
    %29 = vector.shape_cast %28 : vector<64x16xbf16> to vector<8x8x16xbf16>
    "tpu.trace_start"() <{level = 10 : i32, message = "bpd,bqd->bpq"}> : () -> ()
    %cst_9 = arith.constant dense<0.000000e+00> : vector<8x8x8xf32>
    %30 = tpu.matmul %23, %26, %cst_9 {dimension_numbers = #tpu.dot_dimension_numbers<[2], [2], [1], [1], [0, 0, 0, 1, 1, 1], [0], [0]>} : vector<8x8x16xbf16>, vector<8x8x16xbf16>, vector<8x8x8xf32> -> vector<8x8x8xf32>
    "tpu.trace_stop"() : () -> ()
    %cst_10 = arith.constant 2.500000e-01 : f32
    %31 = vector.broadcast %cst_10 : f32 to vector<8x8x8xf32>
    %32 = arith.mulf %30, %31 : vector<8x8x8xf32>
    %c0_11 = arith.constant 0 : index
    %c0_12 = arith.constant 0 : index
    %c0_13 = arith.constant 0 : index
    %c0_14 = arith.constant 0 : index
    %33 = vector.load %arg15[%c0_11, %c0_12, %c0_13, %c0_14] : memref<2x8x8x8xf32, #tpu.memory_space<vmem>>, vector<1x8x8x8xf32>
    %34 = vector.shape_cast %33 : vector<1x8x8x8xf32> to vector<8x8x8xf32>
    %35 = arith.addf %32, %34 : vector<8x8x8xf32>
    %c0_15 = arith.constant 0 : index
    %c0_16 = arith.constant 0 : index
    %c0_17 = arith.constant 0 : index
    %c0_18 = arith.constant 0 : index
    %36 = vector.load %arg15[%c0_15, %c0_16, %c0_17, %c0_18] : memref<2x8x8x8xf32, #tpu.memory_space<vmem>>, vector<1x8x8x8xf32>
    %37 = vector.shape_cast %36 : vector<1x8x8x8xf32> to vector<8x8x8xf32>
    %38 = vector.shape_cast %35 : vector<8x8x8xf32> to vector<1x8x8x8xf32>
    tpu.vector_store %arg15[%c0_15, %c0_16, %c0_17, %c0_18], %38 {strides = array<i32>} : memref<2x8x8x8xf32, #tpu.memory_space<vmem>>, vector<1x8x8x8xf32>,
    %cst_19 = arith.constant dense<0xFF800000> : vector<8x8xf32>
    %39 = vector.multi_reduction <maximumf>, %35, %cst_19 [2] : vector<8x8x8xf32> to vector<8x8xf32>
    %40 = vector.shape_cast %39 : vector<8x8xf32> to vector<8x8x1xf32>
    %41 = vector.broadcast %40 : vector<8x8x1xf32> to vector<8x8x8xf32>
    %42 = arith.subf %35, %41 : vector<8x8x8xf32>
    %43 = math.exp %42 : vector<8x8x8xf32>
    %cst_20 = arith.constant dense<0.000000e+00> : vector<8x8xf32>
    %44 = vector.multi_reduction <add>, %43, %cst_20 [2] : vector<8x8x8xf32> to vector<8x8xf32>
    %45 = vector.shape_cast %44 : vector<8x8xf32> to vector<8x8x1xf32>
    %46 = tpu.reciprocal %45 {approx = true} : vector<8x8x1xf32> -> vector<8x8x1xf32>
    %47 = vector.broadcast %46 : vector<8x8x1xf32> to vector<8x8x8xf32>
    %48 = arith.mulf %43, %47 : vector<8x8x8xf32>
    %49 = arith.truncf %48 : vector<8x8x8xf32> to vector<8x8x8xbf16>
    "tpu.trace_start"() <{level = 10 : i32, message = "bpq,bqd->bpd"}> : () -> ()
    %cst_21 = arith.constant dense<0.000000e+00> : vector<8x8x16xf32>
    %50 = tpu.matmul %49, %29, %cst_21 {dimension_numbers = #tpu.dot_dimension_numbers<[2], [1], [1], [2], [0, 0, 0, 1, 1, 2], [0], [0]>} : vector<8x8x8xbf16>, vector<8x8x16xbf16>, vector<8x8x16xf32> -> vector<8x8x16xf32>
    "tpu.trace_stop"() : () -> ()
    %51 = vector.extract_strided_slice %20 {offsets = [0, 16], sizes = [64, 16], strides = [1, 1]} : vector<64x96xf32> to vector<64x16xf32>
    %52 = arith.truncf %51 : vector<64x16xf32> to vector<64x16xbf16>
    %53 = vector.shape_cast %52 : vector<64x16xbf16> to vector<8x8x16xbf16>
    %54 = vector.extract_strided_slice %20 {offsets = [0, 48], sizes = [64, 16], strides = [1, 1]} : vector<64x96xf32> to vector<64x16xf32>
    %55 = arith.truncf %54 : vector<64x16xf32> to vector<64x16xbf16>
    %56 = vector.shape_cast %55 : vector<64x16xbf16> to vector<8x8x16xbf16>
    %57 = vector.extract_strided_slice %20 {offsets = [0, 80], sizes = [64, 16], strides = [1, 1]} : vector<64x96xf32> to vector<64x16xf32>
    %58 = arith.truncf %57 : vector<64x16xf32> to vector<64x16xbf16>
    %59 = vector.shape_cast %58 : vector<64x16xbf16> to vector<8x8x16xbf16>
    "tpu.trace_start"() <{level = 10 : i32, message = "bpd,bqd->bpq"}> : () -> ()
    %cst_22 = arith.constant dense<0.000000e+00> : vector<8x8x8xf32>
    %60 = tpu.matmul %53, %56, %cst_22 {dimension_numbers = #tpu.dot_dimension_numbers<[2], [2], [1], [1], [0, 0, 0, 1, 1, 1], [0], [0]>} : vector<8x8x16xbf16>, vector<8x8x16xbf16>, vector<8x8x8xf32> -> vector<8x8x8xf32>
    "tpu.trace_stop"() : () -> ()
    %cst_23 = arith.constant 2.500000e-01 : f32
    %61 = vector.broadcast %cst_23 : f32 to vector<8x8x8xf32>
    %62 = arith.mulf %60, %61 : vector<8x8x8xf32>
    %c1 = arith.constant 1 : index
    %c0_24 = arith.constant 0 : index
    %c0_25 = arith.constant 0 : index
    %c0_26 = arith.constant 0 : index
    %63 = vector.load %arg15[%c1, %c0_24, %c0_25, %c0_26] : memref<2x8x8x8xf32, #tpu.memory_space<vmem>>, vector<1x8x8x8xf32>
    %64 = vector.shape_cast %63 : vector<1x8x8x8xf32> to vector<8x8x8xf32>
    %65 = arith.addf %62, %64 : vector<8x8x8xf32>
    %c1_27 = arith.constant 1 : index
    %c0_28 = arith.constant 0 : index
    %c0_29 = arith.constant 0 : index
    %c0_30 = arith.constant 0 : index
    %66 = vector.load %arg15[%c1_27, %c0_28, %c0_29, %c0_30] : memref<2x8x8x8xf32, #tpu.memory_space<vmem>>, vector<1x8x8x8xf32>
    %67 = vector.shape_cast %66 : vector<1x8x8x8xf32> to vector<8x8x8xf32>
    %68 = vector.shape_cast %65 : vector<8x8x8xf32> to vector<1x8x8x8xf32>
    tpu.vector_store %arg15[%c1_27, %c0_28, %c0_29, %c0_30], %68 {strides = array<i32>} : memref<2x8x8x8xf32, #tpu.memory_space<vmem>>, vector<1x8x8x8xf32>,
    %cst_31 = arith.constant dense<0xFF800000> : vector<8x8xf32>
    %69 = vector.multi_reduction <maximumf>, %65, %cst_31 [2] : vector<8x8x8xf32> to vector<8x8xf32>
    %70 = vector.shape_cast %69 : vector<8x8xf32> to vector<8x8x1xf32>
    %71 = vector.broadcast %70 : vector<8x8x1xf32> to vector<8x8x8xf32>
    %72 = arith.subf %65, %71 : vector<8x8x8xf32>
    %73 = math.exp %72 : vector<8x8x8xf32>
    %cst_32 = arith.constant dense<0.000000e+00> : vector<8x8xf32>
    %74 = vector.multi_reduction <add>, %73, %cst_32 [2] : vector<8x8x8xf32> to vector<8x8xf32>
    %75 = vector.shape_cast %74 : vector<8x8xf32> to vector<8x8x1xf32>
    %76 = tpu.reciprocal %75 {approx = true} : vector<8x8x1xf32> -> vector<8x8x1xf32>
    %77 = vector.broadcast %76 : vector<8x8x1xf32> to vector<8x8x8xf32>
    %78 = arith.mulf %73, %77 : vector<8x8x8xf32>
    %79 = arith.truncf %78 : vector<8x8x8xf32> to vector<8x8x8xbf16>
    "tpu.trace_start"() <{level = 10 : i32, message = "bpq,bqd->bpd"}> : () -> ()
    %cst_33 = arith.constant dense<0.000000e+00> : vector<8x8x16xf32>
    %80 = tpu.matmul %79, %59, %cst_33 {dimension_numbers = #tpu.dot_dimension_numbers<[2], [1], [1], [2], [0, 0, 0, 1, 1, 2], [0], [0]>} : vector<8x8x8xbf16>, vector<8x8x16xbf16>, vector<8x8x16xf32> -> vector<8x8x16xf32>
    "tpu.trace_stop"() : () -> ()
    %81 = tpu.concatenate %50, %80 in 2 : vector<8x8x16xf32>, vector<8x8x16xf32> -> vector<8x8x32xf32>
    %82 = vector.shape_cast %81 : vector<8x8x32xf32> to vector<64x32xf32>
    %83 = arith.truncf %82 : vector<64x32xf32> to vector<64x32xbf16>
    %c0_34 = arith.constant 0 : index
    %c0_35 = arith.constant 0 : index
    %c0_36 = arith.constant 0 : index
    %84 = vector.load %arg7[%c0_34, %c0_35, %c0_36] : memref<1x32x32xbf16, #tpu.memory_space<vmem>>, vector<1x32x32xbf16>
    %85 = vector.shape_cast %84 : vector<1x32x32xbf16> to vector<32x32xbf16>
    %cst_37 = arith.constant dense<0.000000e+00> : vector<64x32xf32>
    %86 = tpu.matmul %83, %85, %cst_37 {dimension_numbers = #tpu.dot_dimension_numbers<[1], [0], [0], [1], [0, 0, 1, 1], [], []>} : vector<64x32xbf16>, vector<32x32xbf16>, vector<64x32xf32> -> vector<64x32xf32>
    %87 = vector.broadcast %6 : vector<1x32xf32> to vector<64x32xf32>
    %88 = arith.addf %86, %87 : vector<64x32xf32>
    %89 = arith.addf %14, %88 : vector<64x32xf32>
    %cst_38 = arith.constant dense<0.000000e+00> : vector<64xf32>
    %90 = vector.multi_reduction <add>, %89, %cst_38 [1] : vector<64x32xf32> to vector<64xf32>
    %91 = vector.shape_cast %90 : vector<64xf32> to vector<64x1xf32>
    %cst_39 = arith.constant 3.200000e+01 : f32
    %92 = vector.broadcast %cst_39 : f32 to vector<64x1xf32>
    %93 = arith.divf %91, %92 : vector<64x1xf32>
    %94 = vector.broadcast %93 : vector<64x1xf32> to vector<64x32xf32>
    %95 = arith.subf %89, %94 : vector<64x32xf32>
    %96 = arith.mulf %95, %95 : vector<64x32xf32>
    %cst_40 = arith.constant dense<0.000000e+00> : vector<64xf32>
    %97 = vector.multi_reduction <add>, %96, %cst_40 [1] : vector<64x32xf32> to vector<64xf32>
    %98 = vector.shape_cast %97 : vector<64xf32> to vector<64x1xf32>
    %cst_41 = arith.constant 3.200000e+01 : f32
    %99 = vector.broadcast %cst_41 : f32 to vector<64x1xf32>
    %100 = arith.divf %98, %99 : vector<64x1xf32>
    %cst_42 = arith.constant 9.99999974E-6 : f32
    %101 = vector.broadcast %cst_42 : f32 to vector<64x1xf32>
    %102 = arith.addf %100, %101 : vector<64x1xf32>
    %103 = math.rsqrt %102 : vector<64x1xf32>
    %104 = vector.broadcast %103 : vector<64x1xf32> to vector<64x32xf32>
    %105 = arith.mulf %95, %104 : vector<64x32xf32>
    %106 = vector.broadcast %7 : vector<1x32xf32> to vector<64x32xf32>
    %107 = arith.mulf %105, %106 : vector<64x32xf32>
    %108 = vector.broadcast %8 : vector<1x32xf32> to vector<64x32xf32>
    %109 = arith.addf %107, %108 : vector<64x32xf32>
    %110 = arith.truncf %109 : vector<64x32xf32> to vector<64x32xbf16>
    %c0_43 = arith.constant 0 : index
    %c0_44 = arith.constant 0 : index
    %c0_45 = arith.constant 0 : index
    %111 = vector.load %arg8[%c0_43, %c0_44, %c0_45] : memref<1x32x128xbf16, #tpu.memory_space<vmem>>, vector<1x32x128xbf16>
    %112 = vector.shape_cast %111 : vector<1x32x128xbf16> to vector<32x128xbf16>
    %cst_46 = arith.constant dense<0.000000e+00> : vector<64x128xf32>
    %113 = tpu.matmul %110, %112, %cst_46 {dimension_numbers = #tpu.dot_dimension_numbers<[1], [0], [0], [1], [0, 0, 1, 1], [], []>} : vector<64x32xbf16>, vector<32x128xbf16>, vector<64x128xf32> -> vector<64x128xf32>
    %114 = vector.broadcast %9 : vector<1x128xf32> to vector<64x128xf32>
    %115 = arith.addf %113, %114 : vector<64x128xf32>
    %cst_47 = arith.constant 5.000000e-01 : f32
    %116 = vector.broadcast %cst_47 : f32 to vector<64x128xf32>
    %117 = arith.mulf %116, %115 : vector<64x128xf32>
    %cst_48 = arith.constant 4.471500e-02 : f32
    %118 = vector.broadcast %cst_48 : f32 to vector<64x128xf32>
    %119 = arith.mulf %118, %115 : vector<64x128xf32>
    %120 = arith.mulf %119, %115 : vector<64x128xf32>
    %121 = arith.mulf %120, %115 : vector<64x128xf32>
    %122 = arith.addf %115, %121 : vector<64x128xf32>
    %cst_49 = arith.constant 0.797884583 : f32
    %123 = vector.broadcast %cst_49 : f32 to vector<64x128xf32>
    %124 = arith.mulf %123, %122 : vector<64x128xf32>
    %125 = math.tanh %124 : vector<64x128xf32>
    %cst_50 = arith.constant 1.000000e+00 : f32
    %126 = vector.broadcast %cst_50 : f32 to vector<64x128xf32>
    %127 = arith.addf %126, %125 : vector<64x128xf32>
    %128 = arith.mulf %117, %127 : vector<64x128xf32>
    %129 = arith.truncf %128 : vector<64x128xf32> to vector<64x128xbf16>
    %c0_51 = arith.constant 0 : index
    %c0_52 = arith.constant 0 : index
    %c0_53 = arith.constant 0 : index
    %130 = vector.load %arg9[%c0_51, %c0_52, %c0_53] : memref<1x128x32xbf16, #tpu.memory_space<vmem>>, vector<1x128x32xbf16>
    %131 = vector.shape_cast %130 : vector<1x128x32xbf16> to vector<128x32xbf16>
    %cst_54 = arith.constant dense<0.000000e+00> : vector<64x32xf32>
    %132 = tpu.matmul %129, %131, %cst_54 {dimension_numbers = #tpu.dot_dimension_numbers<[1], [0], [0], [1], [0, 0, 1, 1], [], []>} : vector<64x128xbf16>, vector<128x32xbf16>, vector<64x32xf32> -> vector<64x32xf32>
    %133 = vector.broadcast %10 : vector<1x32xf32> to vector<64x32xf32>
    %134 = arith.addf %132, %133 : vector<64x32xf32>
    %135 = arith.addf %109, %134 : vector<64x32xf32>
    %cst_55 = arith.constant dense<0.000000e+00> : vector<64xf32>
    %136 = vector.multi_reduction <add>, %135, %cst_55 [1] : vector<64x32xf32> to vector<64xf32>
    %137 = vector.shape_cast %136 : vector<64xf32> to vector<64x1xf32>
    %cst_56 = arith.constant 3.200000e+01 : f32
    %138 = vector.broadcast %cst_56 : f32 to vector<64x1xf32>
    %139 = arith.divf %137, %138 : vector<64x1xf32>
    %140 = vector.broadcast %139 : vector<64x1xf32> to vector<64x32xf32>
    %141 = arith.subf %135, %140 : vector<64x32xf32>
    %142 = arith.mulf %141, %141 : vector<64x32xf32>
    %cst_57 = arith.constant dense<0.000000e+00> : vector<64xf32>
    %143 = vector.multi_reduction <add>, %142, %cst_57 [1] : vector<64x32xf32> to vector<64xf32>
    %144 = vector.shape_cast %143 : vector<64xf32> to vector<64x1xf32>
    %cst_58 = arith.constant 3.200000e+01 : f32
    %145 = vector.broadcast %cst_58 : f32 to vector<64x1xf32>
    %146 = arith.divf %144, %145 : vector<64x1xf32>
    %cst_59 = arith.constant 9.99999974E-6 : f32
    %147 = vector.broadcast %cst_59 : f32 to vector<64x1xf32>
    %148 = arith.addf %146, %147 : vector<64x1xf32>
    %149 = math.rsqrt %148 : vector<64x1xf32>
    %150 = vector.broadcast %149 : vector<64x1xf32> to vector<64x32xf32>
    %151 = arith.mulf %141, %150 : vector<64x32xf32>
    %152 = vector.broadcast %11 : vector<1x32xf32> to vector<64x32xf32>
    %153 = arith.mulf %151, %152 : vector<64x32xf32>
    %154 = vector.broadcast %12 : vector<1x32xf32> to vector<64x32xf32>
    %155 = arith.addf %153, %154 : vector<64x32xf32>
    %156 = vector.shape_cast %155 : vector<64x32xf32> to vector<8x8x32xf32>
    %c0_60 = arith.constant 0 : index
    %c0_61 = arith.constant 0 : index
    %c0_62 = arith.constant 0 : index
    %157 = vector.load %arg14[%c0_60, %c0_61, %c0_62] : memref<8x8x32xf32, #tpu.memory_space<vmem>>, vector<8x8x32xf32>
    tpu.vector_store %arg14[%c0_60, %c0_61, %c0_62], %156 {strides = array<i32>} : memref<8x8x32xf32, #tpu.memory_space<vmem>>, vector<8x8x32xf32>,
    %c1_i32 = arith.constant 1 : i32
    %158 = arith.cmpi eq, %arg1, %c1_i32 : i32
    %159 = arith.extui %158 : i1 to i32
    %c0_i32_63 = arith.constant 0 : i32
    %160 = arith.cmpi ne, %159, %c0_i32_63 : i32
    scf.if %160 {
      %cst_64 = arith.constant 0.000000e+00 : f32
      %161 = vector.broadcast %cst_64 : f32 to vector<8x128xf32>
      %c0_65 = arith.constant 0 : index
      %c0_66 = arith.constant 0 : index
      %c0_67 = arith.constant 0 : index
      %162 = vector.load %arg14[%c0_65, %c0_66, %c0_67] : memref<8x8x32xf32, #tpu.memory_space<vmem>>, vector<8x1x32xf32>
      %163 = vector.shape_cast %162 : vector<8x1x32xf32> to vector<8x32xf32>
      %164 = arith.truncf %163 : vector<8x32xf32> to vector<8x32xbf16>
      %c0_68 = arith.constant 0 : index
      %c0_69 = arith.constant 0 : index
      %c0_70 = arith.constant 0 : index
      %165 = vector.load %arg11[%c0_68, %c0_69, %c0_70] : memref<8x32x128xbf16, #tpu.memory_space<vmem>>, vector<1x32x128xbf16>
      %166 = vector.shape_cast %165 : vector<1x32x128xbf16> to vector<32x128xbf16>
      %cst_71 = arith.constant dense<0.000000e+00> : vector<8x128xf32>
      %167 = tpu.matmul %164, %166, %cst_71 {dimension_numbers = #tpu.dot_dimension_numbers<[1], [0], [0], [1], [0, 0, 1, 1], [], []>} : vector<8x32xbf16>, vector<32x128xbf16>, vector<8x128xf32> -> vector<8x128xf32>
      %168 = arith.addf %161, %167 : vector<8x128xf32>
      %c0_72 = arith.constant 0 : index
      %c1_73 = arith.constant 1 : index
      %c0_74 = arith.constant 0 : index
      %169 = vector.load %arg14[%c0_72, %c1_73, %c0_74] : memref<8x8x32xf32, #tpu.memory_space<vmem>>, vector<8x1x32xf32>
      %170 = vector.shape_cast %169 : vector<8x1x32xf32> to vector<8x32xf32>
      %171 = arith.truncf %170 : vector<8x32xf32> to vector<8x32xbf16>
      %c1_75 = arith.constant 1 : index
      %c0_76 = arith.constant 0 : index
      %c0_77 = arith.constant 0 : index
      %172 = vector.load %arg11[%c1_75, %c0_76, %c0_77] : memref<8x32x128xbf16, #tpu.memory_space<vmem>>, vector<1x32x128xbf16>
      %173 = vector.shape_cast %172 : vector<1x32x128xbf16> to vector<32x128xbf16>
      %cst_78 = arith.constant dense<0.000000e+00> : vector<8x128xf32>
      %174 = tpu.matmul %171, %173, %cst_78 {dimension_numbers = #tpu.dot_dimension_numbers<[1], [0], [0], [1], [0, 0, 1, 1], [], []>} : vector<8x32xbf16>, vector<32x128xbf16>, vector<8x128xf32> -> vector<8x128xf32>
      %175 = arith.addf %168, %174 : vector<8x128xf32>
      %c0_79 = arith.constant 0 : index
      %c2 = arith.constant 2 : index
      %c0_80 = arith.constant 0 : index
      %176 = vector.load %arg14[%c0_79, %c2, %c0_80] : memref<8x8x32xf32, #tpu.memory_space<vmem>>, vector<8x1x32xf32>
      %177 = vector.shape_cast %176 : vector<8x1x32xf32> to vector<8x32xf32>
      %178 = arith.truncf %177 : vector<8x32xf32> to vector<8x32xbf16>
      %c2_81 = arith.constant 2 : index
      %c0_82 = arith.constant 0 : index
      %c0_83 = arith.constant 0 : index
      %179 = vector.load %arg11[%c2_81, %c0_82, %c0_83] : memref<8x32x128xbf16, #tpu.memory_space<vmem>>, vector<1x32x128xbf16>
      %180 = vector.shape_cast %179 : vector<1x32x128xbf16> to vector<32x128xbf16>
      %cst_84 = arith.constant dense<0.000000e+00> : vector<8x128xf32>
      %181 = tpu.matmul %178, %180, %cst_84 {dimension_numbers = #tpu.dot_dimension_numbers<[1], [0], [0], [1], [0, 0, 1, 1], [], []>} : vector<8x32xbf16>, vector<32x128xbf16>, vector<8x128xf32> -> vector<8x128xf32>
      %182 = arith.addf %175, %181 : vector<8x128xf32>
      %c0_85 = arith.constant 0 : index
      %c3 = arith.constant 3 : index
      %c0_86 = arith.constant 0 : index
      %183 = vector.load %arg14[%c0_85, %c3, %c0_86] : memref<8x8x32xf32, #tpu.memory_space<vmem>>, vector<8x1x32xf32>
      %184 = vector.shape_cast %183 : vector<8x1x32xf32> to vector<8x32xf32>
      %185 = arith.truncf %184 : vector<8x32xf32> to vector<8x32xbf16>
      %c3_87 = arith.constant 3 : index
      %c0_88 = arith.constant 0 : index
      %c0_89 = arith.constant 0 : index
      %186 = vector.load %arg11[%c3_87, %c0_88, %c0_89] : memref<8x32x128xbf16, #tpu.memory_space<vmem>>, vector<1x32x128xbf16>
      %187 = vector.shape_cast %186 : vector<1x32x128xbf16> to vector<32x128xbf16>
      %cst_90 = arith.constant dense<0.000000e+00> : vector<8x128xf32>
      %188 = tpu.matmul %185, %187, %cst_90 {dimension_numbers = #tpu.dot_dimension_numbers<[1], [0], [0], [1], [0, 0, 1, 1], [], []>} : vector<8x32xbf16>, vector<32x128xbf16>, vector<8x128xf32> -> vector<8x128xf32>
      %189 = arith.addf %182, %188 : vector<8x128xf32>
      %c0_91 = arith.constant 0 : index
      %c4 = arith.constant 4 : index
      %c0_92 = arith.constant 0 : index
      %190 = vector.load %arg14[%c0_91, %c4, %c0_92] : memref<8x8x32xf32, #tpu.memory_space<vmem>>, vector<8x1x32xf32>
      %191 = vector.shape_cast %190 : vector<8x1x32xf32> to vector<8x32xf32>
      %192 = arith.truncf %191 : vector<8x32xf32> to vector<8x32xbf16>
      %c4_93 = arith.constant 4 : index
      %c0_94 = arith.constant 0 : index
      %c0_95 = arith.constant 0 : index
      %193 = vector.load %arg11[%c4_93, %c0_94, %c0_95] : memref<8x32x128xbf16, #tpu.memory_space<vmem>>, vector<1x32x128xbf16>
      %194 = vector.shape_cast %193 : vector<1x32x128xbf16> to vector<32x128xbf16>
      %cst_96 = arith.constant dense<0.000000e+00> : vector<8x128xf32>
      %195 = tpu.matmul %192, %194, %cst_96 {dimension_numbers = #tpu.dot_dimension_numbers<[1], [0], [0], [1], [0, 0, 1, 1], [], []>} : vector<8x32xbf16>, vector<32x128xbf16>, vector<8x128xf32> -> vector<8x128xf32>
      %196 = arith.addf %189, %195 : vector<8x128xf32>
      %c0_97 = arith.constant 0 : index
      %c5 = arith.constant 5 : index
      %c0_98 = arith.constant 0 : index
      %197 = vector.load %arg14[%c0_97, %c5, %c0_98] : memref<8x8x32xf32, #tpu.memory_space<vmem>>, vector<8x1x32xf32>
      %198 = vector.shape_cast %197 : vector<8x1x32xf32> to vector<8x32xf32>
      %199 = arith.truncf %198 : vector<8x32xf32> to vector<8x32xbf16>
      %c5_99 = arith.constant 5 : index
      %c0_100 = arith.constant 0 : index
      %c0_101 = arith.constant 0 : index
      %200 = vector.load %arg11[%c5_99, %c0_100, %c0_101] : memref<8x32x128xbf16, #tpu.memory_space<vmem>>, vector<1x32x128xbf16>
      %201 = vector.shape_cast %200 : vector<1x32x128xbf16> to vector<32x128xbf16>
      %cst_102 = arith.constant dense<0.000000e+00> : vector<8x128xf32>
      %202 = tpu.matmul %199, %201, %cst_102 {dimension_numbers = #tpu.dot_dimension_numbers<[1], [0], [0], [1], [0, 0, 1, 1], [], []>} : vector<8x32xbf16>, vector<32x128xbf16>, vector<8x128xf32> -> vector<8x128xf32>
      %203 = arith.addf %196, %202 : vector<8x128xf32>
      %c0_103 = arith.constant 0 : index
      %c6 = arith.constant 6 : index
      %c0_104 = arith.constant 0 : index
      %204 = vector.load %arg14[%c0_103, %c6, %c0_104] : memref<8x8x32xf32, #tpu.memory_space<vmem>>, vector<8x1x32xf32>
      %205 = vector.shape_cast %204 : vector<8x1x32xf32> to vector<8x32xf32>
      %206 = arith.truncf %205 : vector<8x32xf32> to vector<8x32xbf16>
      %c6_105 = arith.constant 6 : index
      %c0_106 = arith.constant 0 : index
      %c0_107 = arith.constant 0 : index
      %207 = vector.load %arg11[%c6_105, %c0_106, %c0_107] : memref<8x32x128xbf16, #tpu.memory_space<vmem>>, vector<1x32x128xbf16>
      %208 = vector.shape_cast %207 : vector<1x32x128xbf16> to vector<32x128xbf16>
      %cst_108 = arith.constant dense<0.000000e+00> : vector<8x128xf32>
      %209 = tpu.matmul %206, %208, %cst_108 {dimension_numbers = #tpu.dot_dimension_numbers<[1], [0], [0], [1], [0, 0, 1, 1], [], []>} : vector<8x32xbf16>, vector<32x128xbf16>, vector<8x128xf32> -> vector<8x128xf32>
      %210 = arith.addf %203, %209 : vector<8x128xf32>
      %c0_109 = arith.constant 0 : index
      %c7 = arith.constant 7 : index
      %c0_110 = arith.constant 0 : index
      %211 = vector.load %arg14[%c0_109, %c7, %c0_110] : memref<8x8x32xf32, #tpu.memory_space<vmem>>, vector<8x1x32xf32>
      %212 = vector.shape_cast %211 : vector<8x1x32xf32> to vector<8x32xf32>
      %213 = arith.truncf %212 : vector<8x32xf32> to vector<8x32xbf16>
      %c7_111 = arith.constant 7 : index
      %c0_112 = arith.constant 0 : index
      %c0_113 = arith.constant 0 : index
      %214 = vector.load %arg11[%c7_111, %c0_112, %c0_113] : memref<8x32x128xbf16, #tpu.memory_space<vmem>>, vector<1x32x128xbf16>
      %215 = vector.shape_cast %214 : vector<1x32x128xbf16> to vector<32x128xbf16>
      %cst_114 = arith.constant dense<0.000000e+00> : vector<8x128xf32>
      %216 = tpu.matmul %213, %215, %cst_114 {dimension_numbers = #tpu.dot_dimension_numbers<[1], [0], [0], [1], [0, 0, 1, 1], [], []>} : vector<8x32xbf16>, vector<32x128xbf16>, vector<8x128xf32> -> vector<8x128xf32>
      %217 = arith.addf %210, %216 : vector<8x128xf32>
      %c0_115 = arith.constant 0 : index
      %c0_116 = arith.constant 0 : index
      %218 = vector.load %arg12[%c0_115, %c0_116] : memref<1x128xf32, #tpu.memory_space<vmem>>, vector<1x128xf32>
      %219 = vector.broadcast %218 : vector<1x128xf32> to vector<8x128xf32>
      %220 = arith.addf %217, %219 : vector<8x128xf32>
      %c0_117 = arith.constant 0 : index
      %c0_118 = arith.constant 0 : index
      %221 = vector.load %arg13[%c0_117, %c0_118] : memref<8x128xf32, #tpu.memory_space<vmem>>, vector<8x128xf32>
      tpu.vector_store %arg13[%c0_117, %c0_118], %220 {strides = array<i32>} : memref<8x128xf32, #tpu.memory_space<vmem>>, vector<8x128xf32>,
    } else {
    }
    return
  }
  func.func @transform_0(%arg0: i32, %arg1: i32) -> (i32, i32, i32) {
    %c0_i32 = arith.constant 0 : i32
    %c0_i32_0 = arith.constant 0 : i32
    %c0_i32_1 = arith.constant 0 : i32
    return %arg0, %c0_i32, %c0_i32_0 : i32, i32, i32
  }
  func.func @transform_1(%arg0: i32, %arg1: i32) -> (i32, i32) {
    %c0_i32 = arith.constant 0 : i32
    %c0_i32_0 = arith.constant 0 : i32
    %c0_i32_1 = arith.constant 0 : i32
    return %c0_i32, %c0_i32_0 : i32, i32
  }
  func.func @transform_2(%arg0: i32, %arg1: i32) -> (i32, i32) {
    %c0_i32 = arith.constant 0 : i32
    %c0_i32_0 = arith.constant 0 : i32
    %c0_i32_1 = arith.constant 0 : i32
    return %c0_i32, %c0_i32_0 : i32, i32
  }
  func.func @transform_3(%arg0: i32, %arg1: i32) -> (i32, i32) {
    %c0_i32 = arith.constant 0 : i32
    %c0_i32_0 = arith.constant 0 : i32
    %c0_i32_1 = arith.constant 0 : i32
    return %c0_i32, %c0_i32_0 : i32, i32
  }
  func.func @transform_4(%arg0: i32, %arg1: i32) -> (i32, i32, i32) {
    %c0_i32 = arith.constant 0 : i32
    %c0_i32_0 = arith.constant 0 : i32
    %c0_i32_1 = arith.constant 0 : i32
    return %arg1, %c0_i32, %c0_i32_0 : i32, i32, i32
  }
  func.func @transform_5(%arg0: i32, %arg1: i32) -> (i32, i32, i32) {
    %c0_i32 = arith.constant 0 : i32
    %c0_i32_0 = arith.constant 0 : i32
    %c0_i32_1 = arith.constant 0 : i32
    return %arg1, %c0_i32, %c0_i32_0 : i32, i32, i32
  }
  func.func @transform_6(%arg0: i32, %arg1: i32) -> (i32, i32, i32) {
    %c0_i32 = arith.constant 0 : i32
    %c0_i32_0 = arith.constant 0 : i32
    %c0_i32_1 = arith.constant 0 : i32
    return %arg1, %c0_i32, %c0_i32_0 : i32, i32, i32
  }
  func.func @transform_7(%arg0: i32, %arg1: i32) -> (i32, i32, i32) {
    %c0_i32 = arith.constant 0 : i32
    %c0_i32_0 = arith.constant 0 : i32
    %c0_i32_1 = arith.constant 0 : i32
    return %arg1, %c0_i32, %c0_i32_0 : i32, i32, i32
  }
  func.func @transform_8(%arg0: i32, %arg1: i32) -> (i32, i32, i32) {
    %c0_i32 = arith.constant 0 : i32
    %c0_i32_0 = arith.constant 0 : i32
    %c0_i32_1 = arith.constant 0 : i32
    return %arg1, %c0_i32, %c0_i32_0 : i32, i32, i32
  }
  func.func @transform_9(%arg0: i32, %arg1: i32) -> (i32, i32, i32) {
    %c0_i32 = arith.constant 0 : i32
    %c0_i32_0 = arith.constant 0 : i32
    %c0_i32_1 = arith.constant 0 : i32
    %c0_i32_2 = arith.constant 0 : i32
    return %c0_i32, %c0_i32_0, %c0_i32_1 : i32, i32, i32
  }
  func.func @transform_10(%arg0: i32, %arg1: i32) -> (i32, i32) {
    %c0_i32 = arith.constant 0 : i32
    %c0_i32_0 = arith.constant 0 : i32
    %c0_i32_1 = arith.constant 0 : i32
    return %c0_i32, %c0_i32_0 : i32, i32
  }
  func.func @transform_11(%arg0: i32, %arg1: i32) -> (i32, i32) {
    %c0_i32 = arith.constant 0 : i32
    %c0_i32_0 = arith.constant 0 : i32
    return %arg0, %c0_i32 : i32, i32
  }
}

</mosaic_0001>

<llo_original>
// kernel: _lambda_.1
$region0: #{_lambda_.1}
  #allocation0 [shape = 'u32[]', space=smem, size = 0x4, offset = 0x4, fixed_abs, tag = 'smem constant byte address 0x4 - core index']
  #allocation1 [shape = 'u32[72,128]{1,0:T(1,128)}', space=vmem, size = 0x9000, scoped, tag = 'internal scratch']
  #allocation2 [shape = 'f32[8,8,32]{2,1,0:T(8,128)}', space=vmem, size = 0x8000, scoped, tag = 'scratch operand']
  #allocation3 [shape = 'f32[2,8,8,8]{3,2,1,0:T(8,128)}', space=vmem, size = 0x10000, scoped, tag = 'scratch operand']
  %s0 = inlined_call_operand.vmem [shape: bf16[8,8,4], index: 0, kind: input, shape index: {}]
  %s1 = inlined_call_operand.vmem [shape: bf16[4,32], index: 1, kind: input, shape index: {}]
  %s2 = inlined_call_operand.vmem [shape: f32[1,32], index: 2, kind: input, shape index: {}]
  %s3 = inlined_call_operand.vmem [shape: f32[8,32], index: 3, kind: input, shape index: {}]
  %s4 = inlined_call_operand.vmem [shape: bf16[2,32,96], index: 4, kind: input, shape index: {}]
  %s5 = inlined_call_operand.vmem [shape: bf16[2,32,32], index: 5, kind: input, shape index: {}]
  %s6 = inlined_call_operand.vmem [shape: bf16[2,32,128], index: 6, kind: input, shape index: {}]
  %s7 = inlined_call_operand.vmem [shape: bf16[2,128,32], index: 7, kind: input, shape index: {}]
  %s8 = inlined_call_operand.vmem [shape: f32[2,8,128], index: 8, kind: input, shape index: {}]
  %s9 = inlined_call_operand.vmem [shape: bf16[8,32,128], index: 9, kind: input, shape index: {}]
  %s10 = inlined_call_operand.vmem [shape: f32[1,128], index: 10, kind: input, shape index: {}]
  %s11 = inlined_call_operand.vmem [shape: f32[8,128], index: 11, kind: output, shape index: {}]
  %s12 = sld [smem:[#allocation0]]
  $region85: #{_lambda_.1} parent=0
    _
  %s14 = ssub.s32 1, %s12
  %s15 = scalar_select 0, %s14, %s12
  loop: start=0, step=1, limit=4
  $region2: #{_lambda_.1} parent=0 // loop_pre_header
    _
  $region3: #{_lambda_.1} parent=0 // loop_header
    %s17 = sphi 0, %s21
    %p18 = scmp.ge.s32.totalorder %s17, 4
    %s24 = sphi 0, %s36
    %s25 = sphi 0, %s32
    %s26 = sphi 0, %s24
    %s27 = sphi 0, %s25
    %s28 = sphi 0, %s26
    %s29 = sphi 0, %s27
    %s39 = sphi 0, %s41
    %s42 = sphi 0, %s39
    %s43 = sphi 0, %s42
    %s59 = sphi 0, %s43
    %s63 = sphi 0, %s63
    %s65 = sphi 0, %s63
    %s66 = sphi 0, %s65
    %s80 = sphi 0, %s66
    %s84 = sphi 0, %s84
    %s86 = sphi 0, %s84
    %s87 = sphi 0, %s86
    %s101 = sphi 0, %s87
    %s105 = sphi 0, %s105
    %s107 = sphi 0, %s105
    %s108 = sphi 0, %s107
    %s122 = sphi 0, %s108
    %s128 = sphi 0, %s130
    %s131 = sphi 0, %s128
    %s132 = sphi 0, %s131
    %s148 = sphi 0, %s132
    %s154 = sphi 0, %s156
    %s157 = sphi 0, %s154
    %s158 = sphi 0, %s157
    %s174 = sphi 0, %s158
    %s180 = sphi 0, %s182
    %s183 = sphi 0, %s180
    %s184 = sphi 0, %s183
    %s200 = sphi 0, %s184
    %s206 = sphi 0, %s208
    %s209 = sphi 0, %s206
    %s210 = sphi 0, %s209
    %s226 = sphi 0, %s210
    %s232 = sphi 0, %s234
    %s235 = sphi 0, %s232
    %s236 = sphi 0, %s235
    %s252 = sphi 0, %s236
    %s256 = sphi 0, %s256
    %s258 = sphi 0, %s256
    %s259 = sphi 0, %s258
    %s273 = sphi 0, %s259
    %s277 = sphi 0, %s277
    %s279 = sphi 0, %s277
    %s280 = sphi 0, %s279
    %s294 = sphi 0, %s280
    %s300 = sphi 0, %s302
    %s303 = sphi 0, %s300
    %s304 = sphi 0, %s303
    %s320 = sphi 0, %s304
  $region4: #{_lambda_.1} parent=0 // loop_header_branch
    %20 = sbr.rel (%p18) target = $region8
  $region5: #{_lambda_.1} parent=0 // loop_body
    %s22 = ssub.s32 %s17, 1
    %s23 = ssub.s32 %s17, 2
    %s30 = sadd.s32 1, %s25
    %p31 = scmp.ge.s32.totalorder %s30, 2
    %s32 = scalar_select %p31, 0, %s30
    %s33 = sadd.s32 1, %s24
    %s34 = scalar_select %p31, %s33, %s24
    %p35 = scmp.ge.s32.totalorder %s34, 1
    %s36 = scalar_select %p35, 0, %s34
    %s37 = ssub.s32 %s24, %s36
    %p38 = scmp.eq.s32.totalorder %s37, 0
    %s40 = sadd.s32 %s39, 1
    %s41 = scalar_select %p38, %s39, %s40
    %p44 = pneg %p38
    %p45 = scmp.eq.s32.totalorder %s17, 1
    %p46 = por %p44, %p45
    %p47 = scmp.ne.s32.totalorder %s39, %s42
    %p48 = scmp.eq.s32.totalorder %s17, 0
    %p49 = por %p47, %p48
    %p50 = scmp.ne.s32.totalorder %s39, %s42
    %p51 = scmp.eq.s32.totalorder %s22, 1
    %p52 = por %p50, %p51
    %p53 = scmp.ne.s32.totalorder %s42, %s43
    %p54 = scmp.eq.s32.totalorder %s22, 0
    %p55 = por %p53, %p54
    %p56 = scmp.ne.s32.totalorder %s42, %s43
    %p57 = scmp.eq.s32.totalorder %s23, 1
    %p58 = por %p56, %p57
    %p60 = scmp.ne.s32.totalorder %s43, %s59
    %p61 = scmp.eq.s32.totalorder %s23, 0
    %p62 = por %p60, %p61
    %s64 = sadd.s32 %s63, 1
    %p67 = scmp.eq.s32.totalorder %s17, 1
    %p68 = scmp.ne.s32.totalorder %s63, %s65
    %p69 = scmp.eq.s32.totalorder %s17, 0
    %p70 = por %p68, %p69
    %p71 = scmp.ne.s32.totalorder %s63, %s65
    %p72 = scmp.eq.s32.totalorder %s22, 1
    %p73 = por %p71, %p72
    %p74 = scmp.ne.s32.totalorder %s65, %s66
    %p75 = scmp.eq.s32.totalorder %s22, 0
    %p76 = por %p74, %p75
    %p77 = scmp.ne.s32.totalorder %s65, %s66
    %p78 = scmp.eq.s32.totalorder %s23, 1
    %p79 = por %p77, %p78
    %p81 = scmp.ne.s32.totalorder %s66, %s80
    %p82 = scmp.eq.s32.totalorder %s23, 0
    %p83 = por %p81, %p82
    %s85 = sadd.s32 %s84, 1
    %p88 = scmp.eq.s32.totalorder %s17, 1
    %p89 = scmp.ne.s32.totalorder %s84, %s86
    %p90 = scmp.eq.s32.totalorder %s17, 0
    %p91 = por %p89, %p90
    %p92 = scmp.ne.s32.totalorder %s84, %s86
    %p93 = scmp.eq.s32.totalorder %s22, 1
    %p94 = por %p92, %p93
    %p95 = scmp.ne.s32.totalorder %s86, %s87
    %p96 = scmp.eq.s32.totalorder %s22, 0
    %p97 = por %p95, %p96
    %p98 = scmp.ne.s32.totalorder %s86, %s87
    %p99 = scmp.eq.s32.totalorder %s23, 1
    %p100 = por %p98, %p99
    %p102 = scmp.ne.s32.totalorder %s87, %s101
    %p103 = scmp.eq.s32.totalorder %s23, 0
    %p104 = por %p102, %p103
    %s106 = sadd.s32 %s105, 1
    %p109 = scmp.eq.s32.totalorder %s17, 1
    %p110 = scmp.ne.s32.totalorder %s105, %s107
    %p111 = scmp.eq.s32.totalorder %s17, 0
    %p112 = por %p110, %p111
    %p113 = scmp.ne.s32.totalorder %s105, %s107
    %p114 = scmp.eq.s32.totalorder %s22, 1
    %p115 = por %p113, %p114
    %p116 = scmp.ne.s32.totalorder %s107, %s108
    %p117 = scmp.eq.s32.totalorder %s22, 0
    %p118 = por %p116, %p117
    %p119 = scmp.ne.s32.totalorder %s107, %s108
    %p120 = scmp.eq.s32.totalorder %s23, 1
    %p121 = por %p119, %p120
    %p123 = scmp.ne.s32.totalorder %s108, %s122
    %p124 = scmp.eq.s32.totalorder %s23, 0
    %p125 = por %p123, %p124
    %s126 = ssub.s32 %s25, %s32
    %p127 = scmp.eq.s32.totalorder %s126, 0
    %s129 = sadd.s32 %s128, 1
    %s130 = scalar_select %p127, %s128, %s129
    %p133 = pneg %p127
    %p134 = scmp.eq.s32.totalorder %s17, 1
    %p135 = por %p133, %p134
    %p136 = scmp.ne.s32.totalorder %s128, %s131
    %p137 = scmp.eq.s32.totalorder %s17, 0
    %p138 = por %p136, %p137
    %p139 = scmp.ne.s32.totalorder %s128, %s131
    %p140 = scmp.eq.s32.totalorder %s22, 1
    %p141 = por %p139, %p140
    %p142 = scmp.ne.s32.totalorder %s131, %s132
    %p143 = scmp.eq.s32.totalorder %s22, 0
    %p144 = por %p142, %p143
    %p145 = scmp.ne.s32.totalorder %s131, %s132
    %p146 = scmp.eq.s32.totalorder %s23, 1
    %p147 = por %p145, %p146
    %p149 = scmp.ne.s32.totalorder %s132, %s148
    %p150 = scmp.eq.s32.totalorder %s23, 0
    %p151 = por %p149, %p150
    %s152 = ssub.s32 %s25, %s32
    %p153 = scmp.eq.s32.totalorder %s152, 0
    %s155 = sadd.s32 %s154, 1
    %s156 = scalar_select %p153, %s154, %s155
    %p159 = pneg %p153
    %p160 = scmp.eq.s32.totalorder %s17, 1
    %p161 = por %p159, %p160
    %p162 = scmp.ne.s32.totalorder %s154, %s157
    %p163 = scmp.eq.s32.totalorder %s17, 0
    %p164 = por %p162, %p163
    %p165 = scmp.ne.s32.totalorder %s154, %s157
    %p166 = scmp.eq.s32.totalorder %s22, 1
    %p167 = por %p165, %p166
    %p168 = scmp.ne.s32.totalorder %s157, %s158
    %p169 = scmp.eq.s32.totalorder %s22, 0
    %p170 = por %p168, %p169
    %p171 = scmp.ne.s32.totalorder %s157, %s158
    %p172 = scmp.eq.s32.totalorder %s23, 1
    %p173 = por %p171, %p172
    %p175 = scmp.ne.s32.totalorder %s158, %s174
    %p176 = scmp.eq.s32.totalorder %s23, 0
    %p177 = por %p175, %p176
    %s178 = ssub.s32 %s25, %s32
    %p179 = scmp.eq.s32.totalorder %s178, 0
    %s181 = sadd.s32 %s180, 1
    %s182 = scalar_select %p179, %s180, %s181
    %p185 = pneg %p179
    %p186 = scmp.eq.s32.totalorder %s17, 1
    %p187 = por %p185, %p186
    %p188 = scmp.ne.s32.totalorder %s180, %s183
    %p189 = scmp.eq.s32.totalorder %s17, 0
    %p190 = por %p188, %p189
    %p191 = scmp.ne.s32.totalorder %s180, %s183
    %p192 = scmp.eq.s32.totalorder %s22, 1
    %p193 = por %p191, %p192
    %p194 = scmp.ne.s32.totalorder %s183, %s184
    %p195 = scmp.eq.s32.totalorder %s22, 0
    %p196 = por %p194, %p195
    %p197 = scmp.ne.s32.totalorder %s183, %s184
    %p198 = scmp.eq.s32.totalorder %s23, 1
    %p199 = por %p197, %p198
    %p201 = scmp.ne.s32.totalorder %s184, %s200
    %p202 = scmp.eq.s32.totalorder %s23, 0
    %p203 = por %p201, %p202
    %s204 = ssub.s32 %s25, %s32
    %p205 = scmp.eq.s32.totalorder %s204, 0
    %s207 = sadd.s32 %s206, 1
    %s208 = scalar_select %p205, %s206, %s207
    %p211 = pneg %p205
    %p212 = scmp.eq.s32.totalorder %s17, 1
    %p213 = por %p211, %p212
    %p214 = scmp.ne.s32.totalorder %s206, %s209
    %p215 = scmp.eq.s32.totalorder %s17, 0
    %p216 = por %p214, %p215
    %p217 = scmp.ne.s32.totalorder %s206, %s209
    %p218 = scmp.eq.s32.totalorder %s22, 1
    %p219 = por %p217, %p218
    %p220 = scmp.ne.s32.totalorder %s209, %s210
    %p221 = scmp.eq.s32.totalorder %s22, 0
    %p222 = por %p220, %p221
    %p223 = scmp.ne.s32.totalorder %s209, %s210
    %p224 = scmp.eq.s32.totalorder %s23, 1
    %p225 = por %p223, %p224
    %p227 = scmp.ne.s32.totalorder %s210, %s226
    %p228 = scmp.eq.s32.totalorder %s23, 0
    %p229 = por %p227, %p228
    %s230 = ssub.s32 %s25, %s32
    %p231 = scmp.eq.s32.totalorder %s230, 0
    %s233 = sadd.s32 %s232, 1
    %s234 = scalar_select %p231, %s232, %s233
    %p237 = pneg %p231
    %p238 = scmp.eq.s32.totalorder %s17, 1
    %p239 = por %p237, %p238
    %p240 = scmp.ne.s32.totalorder %s232, %s235
    %p241 = scmp.eq.s32.totalorder %s17, 0
    %p242 = por %p240, %p241
    %p243 = scmp.ne.s32.totalorder %s232, %s235
    %p244 = scmp.eq.s32.totalorder %s22, 1
    %p245 = por %p243, %p244
    %p246 = scmp.ne.s32.totalorder %s235, %s236
    %p247 = scmp.eq.s32.totalorder %s22, 0
    %p248 = por %p246, %p247
    %p249 = scmp.ne.s32.totalorder %s235, %s236
    %p250 = scmp.eq.s32.totalorder %s23, 1
    %p251 = por %p249, %p250
    %p253 = scmp.ne.s32.totalorder %s236, %s252
    %p254 = scmp.eq.s32.totalorder %s23, 0
    %p255 = por %p253, %p254
    %s257 = sadd.s32 %s256, 1
    %p260 = scmp.eq.s32.totalorder %s17, 1
    %p261 = scmp.ne.s32.totalorder %s256, %s258
    %p262 = scmp.eq.s32.totalorder %s17, 0
    %p263 = por %p261, %p262
    %p264 = scmp.ne.s32.totalorder %s256, %s258
    %p265 = scmp.eq.s32.totalorder %s22, 1
    %p266 = por %p264, %p265
    %p267 = scmp.ne.s32.totalorder %s258, %s259
    %p268 = scmp.eq.s32.totalorder %s22, 0
    %p269 = por %p267, %p268
    %p270 = scmp.ne.s32.totalorder %s258, %s259
    %p271 = scmp.eq.s32.totalorder %s23, 1
    %p272 = por %p270, %p271
    %p274 = scmp.ne.s32.totalorder %s259, %s273
    %p275 = scmp.eq.s32.totalorder %s23, 0
    %p276 = por %p274, %p275
    %s278 = sadd.s32 %s277, 1
    %p281 = scmp.eq.s32.totalorder %s17, 1
    %p282 = scmp.ne.s32.totalorder %s277, %s279
    %p283 = scmp.eq.s32.totalorder %s17, 0
    %p284 = por %p282, %p283
    %p285 = scmp.ne.s32.totalorder %s277, %s279
    %p286 = scmp.eq.s32.totalorder %s22, 1
    %p287 = por %p285, %p286
    %p288 = scmp.ne.s32.totalorder %s279, %s280
    %p289 = scmp.eq.s32.totalorder %s22, 0
    %p290 = por %p288, %p289
    %p291 = scmp.ne.s32.totalorder %s279, %s280
    %p292 = scmp.eq.s32.totalorder %s23, 1
    %p293 = por %p291, %p292
    %p295 = scmp.ne.s32.totalorder %s280, %s294
    %p296 = scmp.eq.s32.totalorder %s23, 0
    %p297 = por %p295, %p296
    %s298 = ssub.s32 %s24, %s36
    %p299 = scmp.eq.s32.totalorder %s298, 0
    %s301 = sadd.s32 %s300, 1
    %s302 = scalar_select %p299, %s300, %s301
    %p305 = pneg %p299
    %p306 = scmp.eq.s32.totalorder %s17, 1
    %p307 = por %p305, %p306
    %p308 = scmp.ne.s32.totalorder %s300, %s303
    %p309 = scmp.eq.s32.totalorder %s17, 0
    %p310 = por %p308, %p309
    %p311 = scmp.ne.s32.totalorder %s300, %s303
    %p312 = scmp.eq.s32.totalorder %s22, 1
    %p313 = por %p311, %p312
    %p314 = scmp.ne.s32.totalorder %s303, %s304
    %p315 = scmp.eq.s32.totalorder %s22, 0
    %p316 = por %p314, %p315
    %p317 = scmp.ne.s32.totalorder %s303, %s304
    %p318 = scmp.eq.s32.totalorder %s23, 1
    %p319 = por %p317, %p318
    %p321 = scmp.ne.s32.totalorder %s304, %s320
    %p322 = scmp.eq.s32.totalorder %s23, 0
    %p323 = por %p321, %p322
    %p324 = scmp.le.s32.totalorder 1, %s17
    %p325 = scmp.lt.s32.totalorder %s17, 3
    %p326 = pnand %p324, %p325
    %p327 = pneg %p326
    // Predicated region
    $region9: #{_lambda_.1} parent=5 // pred_check
      _
    $region10: #{_lambda_.1} parent=5 // pred_check_branch
      %329 = sbr.rel (%p326) target = $region12
    $region11: #{_lambda_.1} parent=5 // pred_region
      %s330 = ssub.s32 %s17, 1
      // Predicated region
      $region13: #{_lambda_.1} parent=11 // pred_check
        %p331 = pneg %p55
      $region14: #{_lambda_.1} parent=11 // pred_check_branch
        %333 = sbr.rel (%p331) target = $region16
      $region15: #{_lambda_.1} parent=11 // pred_region
        %s334 = smul.u32 8, %s26
        %p335 = scmp.lt.s32.totalorder %s334, 7
        %s336 = scalar_select %p335, %s334, 7
        %s337 = smul.addr %s336, 4
        %s338 = scalar_lea.vmem %s0, %s337
        %s339 = smul.u32 8, %s26
      $region16: #{_lambda_.1} parent=11 // pred_fallthru
        _
      // Predicated region
      $region17: #{_lambda_.1} parent=11 // pred_check
        %p340 = pneg %p76
      $region18: #{_lambda_.1} parent=11 // pred_check_branch
        %342 = sbr.rel (%p340) target = $region20
      $region19: #{_lambda_.1} parent=11 // pred_region
        _
      $region20: #{_lambda_.1} parent=11 // pred_fallthru
        _
      // Predicated region
      $region21: #{_lambda_.1} parent=11 // pred_check
        %p343 = pneg %p97
      $region22: #{_lambda_.1} parent=11 // pred_check_branch
        %345 = sbr.rel (%p343) target = $region24
      $region23: #{_lambda_.1} parent=11 // pred_region
        _
      $region24: #{_lambda_.1} parent=11 // pred_fallthru
        _
      // Predicated region
      $region25: #{_lambda_.1} parent=11 // pred_check
        %p346 = pneg %p118
      $region26: #{_lambda_.1} parent=11 // pred_check_branch
        %348 = sbr.rel (%p346) target = $region28
      $region27: #{_lambda_.1} parent=11 // pred_region
        _
      $region28: #{_lambda_.1} parent=11 // pred_fallthru
        _
      // Predicated region
      $region29: #{_lambda_.1} parent=11 // pred_check
        %p349 = pneg %p269
      $region30: #{_lambda_.1} parent=11 // pred_check_branch
        %351 = sbr.rel (%p349) target = $region32
      $region31: #{_lambda_.1} parent=11 // pred_region
        _
      $region32: #{_lambda_.1} parent=11 // pred_fallthru
        _
      // Predicated region
      $region33: #{_lambda_.1} parent=11 // pred_check
        %p352 = pneg %p290
      $region34: #{_lambda_.1} parent=11 // pred_check_branch
        %354 = sbr.rel (%p352) target = $region36
      $region35: #{_lambda_.1} parent=11 // pred_region
        _
      $region36: #{_lambda_.1} parent=11 // pred_fallthru
        _
    $region12: #{_lambda_.1} parent=5 // pred_fallthru
      _
    %p355 = scmp.lt.s32.totalorder %s17, 2
    // Predicated region
    $region37: #{_lambda_.1} parent=5 // pred_check
      %p356 = pneg %p355
    $region38: #{_lambda_.1} parent=5 // pred_check_branch
      %358 = sbr.rel (%p356) target = $region40
    $region39: #{_lambda_.1} parent=5 // pred_region
      // Predicated region
      $region41: #{_lambda_.1} parent=39 // pred_check
        %p359 = pneg %p138
      $region42: #{_lambda_.1} parent=39 // pred_check_branch
        %361 = sbr.rel (%p359) target = $region44
      $region43: #{_lambda_.1} parent=39 // pred_region
        %p362 = scmp.lt.s32.totalorder %s25, 1
        %s363 = scalar_select %p362, %s25, 1
        %s364 = smul.addr %s363, 4
        %s365 = smul.addr %s364, 4
        %s366 = scalar_lea.vmem %s4, %s365
      $region44: #{_lambda_.1} parent=39 // pred_fallthru
        _
      // Predicated region
      $region45: #{_lambda_.1} parent=39 // pred_check
        %p367 = pneg %p164
      $region46: #{_lambda_.1} parent=39 // pred_check_branch
        %369 = sbr.rel (%p367) target = $region48
      $region47: #{_lambda_.1} parent=39 // pred_region
        %p370 = scmp.lt.s32.totalorder %s25, 1
        %s371 = scalar_select %p370, %s25, 1
        %s372 = smul.addr %s371, 4
        %s373 = smul.addr %s372, 4
        %s374 = scalar_lea.vmem %s5, %s373
      $region48: #{_lambda_.1} parent=39 // pred_fallthru
        _
      // Predicated region
      $region49: #{_lambda_.1} parent=39 // pred_check
        %p375 = pneg %p190
      $region50: #{_lambda_.1} parent=39 // pred_check_branch
        %377 = sbr.rel (%p375) target = $region52
      $region51: #{_lambda_.1} parent=39 // pred_region
        %p378 = scmp.lt.s32.totalorder %s25, 1
        %s379 = scalar_select %p378, %s25, 1
        %s380 = smul.addr %s379, 4
        %s381 = smul.addr %s380, 4
        %s382 = scalar_lea.vmem %s6, %s381
      $region52: #{_lambda_.1} parent=39 // pred_fallthru
        _
      // Predicated region
      $region53: #{_lambda_.1} parent=39 // pred_check
        %p383 = pneg %p216
      $region54: #{_lambda_.1} parent=39 // pred_check_branch
        %385 = sbr.rel (%p383) target = $region56
      $region55: #{_lambda_.1} parent=39 // pred_region
        %p386 = scmp.lt.s32.totalorder %s25, 1
        %s387 = scalar_select %p386, %s25, 1
        %s388 = smul.addr %s387, 16
        %s389 = smul.addr %s388, 4
        %s390 = scalar_lea.vmem %s7, %s389
      $region56: #{_lambda_.1} parent=39 // pred_fallthru
        _
      // Predicated region
      $region57: #{_lambda_.1} parent=39 // pred_check
        %p391 = pneg %p242
      $region58: #{_lambda_.1} parent=39 // pred_check_branch
        %393 = sbr.rel (%p391) target = $region60
      $region59: #{_lambda_.1} parent=39 // pred_region
        %p394 = scmp.lt.s32.totalorder %s25, 1
        %s395 = scalar_select %p394, %s25, 1
        %s396 = smul.addr %s395, 8
        %s397 = scalar_lea.vmem %s8, %s396
      $region60: #{_lambda_.1} parent=39 // pred_fallthru
        _
    $region40: #{_lambda_.1} parent=5 // pred_fallthru
      _
    %p398 = scmp.le.s32.totalorder 1, %s17
    %p399 = scmp.lt.s32.totalorder %s17, 3
    %p400 = pnand %p398, %p399
    %p401 = pneg %p400
    // Predicated region
    $region61: #{_lambda_.1} parent=5 // pred_check
      _
    $region62: #{_lambda_.1} parent=5 // pred_check_branch
      %403 = sbr.rel (%p400) target = $region64
    $region63: #{_lambda_.1} parent=5 // pred_region
      %s404 = ssub.s32 %s17, 1
      %s405 = smul.u32 8, %s26
      %p406 = scmp.lt.s32.totalorder %s405, 7
      %s407 = scalar_select %p406, %s405, 7
      %s408 = smul.addr %s407, 4
      %s409 = scalar_lea.vmem %s0, %s408
      %p410 = pneg %p55
      %p411 = pneg %p52
      %p412 = pneg %p76
      %p413 = pneg %p73
      %p414 = pneg %p97
      %p415 = pneg %p94
      %p416 = pneg %p118
      %p417 = pneg %p115
      %p418 = scmp.lt.s32.totalorder %s27, 1
      %s419 = scalar_select %p418, %s27, 1
      %s420 = smul.addr %s419, 4
      %s421 = smul.addr %s420, 4
      %s422 = scalar_lea.vmem %s4, %s421
      %p423 = pneg %p144
      %p424 = pneg %p141
      %p425 = scmp.lt.s32.totalorder %s27, 1
      %s426 = scalar_select %p425, %s27, 1
      %s427 = smul.addr %s426, 4
      %s428 = smul.addr %s427, 4
      %s429 = scalar_lea.vmem %s5, %s428
      %p430 = pneg %p170
      %p431 = pneg %p167
      %p432 = scmp.lt.s32.totalorder %s27, 1
      %s433 = scalar_select %p432, %s27, 1
      %s434 = smul.addr %s433, 4
      %s435 = smul.addr %s434, 4
      %s436 = scalar_lea.vmem %s6, %s435
      %p437 = pneg %p196
      %p438 = pneg %p193
      %p439 = scmp.lt.s32.totalorder %s27, 1
      %s440 = scalar_select %p439, %s27, 1
      %s441 = smul.addr %s440, 16
      %s442 = smul.addr %s441, 4
      %s443 = scalar_lea.vmem %s7, %s442
      %p444 = pneg %p222
      %p445 = pneg %p219
      %p446 = scmp.lt.s32.totalorder %s27, 1
      %s447 = scalar_select %p446, %s27, 1
      %s448 = smul.addr %s447, 8
      %s449 = scalar_lea.vmem %s8, %s448
      %p450 = pneg %p248
      %p451 = pneg %p245
      %p452 = pneg %p269
      %p453 = pneg %p266
      %p454 = pneg %p290
      %p455 = pneg %p287
      %p456 = pneg %p316
      %p457 = pneg %p313
      %p458 = scmp.lt.s32.totalorder %s26, 0
      %s459 = scalar_select %p458, %s26, 0
      %s460 = smul.addr %s459, 8
      %s461 = scalar_lea.vmem %s11, %s460
      %s462 = smul.u32 8, %s26
      %p463 = scmp.lt.s32.totalorder %s462, 7
      %s464 = scalar_select %p463, %s462, 7
      %s465 = smul.addr %s464, 4
      %s466 = scalar_lea.vmem %s0, %s465
      %s467 = smul.u32 8, %s26
      %p468 = scmp.lt.s32.totalorder %s27, 1
      %s469 = scalar_select %p468, %s27, 1
      %s470 = smul.addr %s469, 4
      %s471 = smul.addr %s470, 4
      %s472 = scalar_lea.vmem %s4, %s471
      %p473 = scmp.lt.s32.totalorder %s27, 1
      %s474 = scalar_select %p473, %s27, 1
      %s475 = smul.addr %s474, 4
      %s476 = smul.addr %s475, 4
      %s477 = scalar_lea.vmem %s5, %s476
      %p478 = scmp.lt.s32.totalorder %s27, 1
      %s479 = scalar_select %p478, %s27, 1
      %s480 = smul.addr %s479, 4
      %s481 = smul.addr %s480, 4
      %s482 = scalar_lea.vmem %s6, %s481
      %p483 = scmp.lt.s32.totalorder %s27, 1
      %s484 = scalar_select %p483, %s27, 1
      %s485 = smul.addr %s484, 16
      %s486 = smul.addr %s485, 4
      %s487 = scalar_lea.vmem %s7, %s486
      %p488 = scmp.lt.s32.totalorder %s27, 1
      %s489 = scalar_select %p488, %s27, 1
      %s490 = smul.addr %s489, 8
      %s491 = scalar_lea.vmem %s8, %s490
      %p492 = scmp.lt.s32.totalorder %s26, 0
      %s493 = scalar_select %p492, %s26, 0
      %s494 = smul.addr %s493, 8
      %s495 = scalar_lea.vmem %s11, %s494
      %p497 = scmp.eq.s32.totalorder %s27, 0
      // Predicated region
      $region65: #{_lambda_.1} parent=63 // pred_check
        %p498 = pneg %p497
      $region66: #{_lambda_.1} parent=63 // pred_check_branch
        %500 = sbr.rel (%p498) target = $region68
      $region67: #{_lambda_.1} parent=63 // pred_region
        %v501 = vld [vmem:[%s466] sm:$0xf]
        %v502 = vld [vmem:[%s466 + $0x4] sm:$0xf]
        %v503 = vld [vmem:[%s466 + $0x8] sm:$0xf]
        %v504 = vld [vmem:[%s466 + $0xc] sm:$0xf]
        %v505 = vld [vmem:[%s466 + $0x10] sm:$0xf]
        %v506 = vld [vmem:[%s466 + $0x14] sm:$0xf]
        %v507 = vld [vmem:[%s466 + $0x18] sm:$0xf]
        %v508 = vld [vmem:[%s466 + $0x1c] sm:$0xf]
        %v509 = vld [vmem:[%s1] sm:$0x3]
        %v510 = vld [vmem:[%s2] sm:$0x1]
        %v512 = vperm.slane %v510, 0
        %v522 = vunpack.c.l.b16 %v501
        %v523 = vunpack.c.l.b16 %v502
        %v524 = vunpack.c.l.b16 %v503
        %v525 = vunpack.c.l.b16 %v504
        %v526 = vunpack.c.l.b16 %v505
        %v527 = vunpack.c.l.b16 %v506
        %v528 = vunpack.c.l.b16 %v507
        %v529 = vunpack.c.l.b16 %v508
        %v530 = vpack.c.b16 %v523, %v522
        %v531 = vpack.c.b16 %v525, %v524
        %v532 = vpack.c.b16 %v527, %v526
        %v533 = vpack.c.b16 %v529, %v528
        %vm534 = vcmask 31744
        %v536 = vsel %vm534, %v530, 0
        %v539 = vsel %vm534, %v531, 0
        %v542 = vsel %vm534, %v532, 0
        %v545 = vsel %vm534, %v533, 0
        %vm547 = vcmask 1041408
        %v549 = vsel %vm547, %v509, 0
        %551 = vmatpush.bf16.msra.mxu0 0
        %552 = vmatpush.bf16.msra.mxu0 0
        %553 = vmatpush.bf16.msra.mxu0 0
        %554 = vmatpush.bf16.msra.mxu0 0
        %555 = vmatpush.bf16.msra.mxu0 0
        %556 = vmatpush.bf16.msra.mxu0 0
        %557 = vmatpush.bf16.msra.mxu0 0
        %558 = vmatpush.bf16.msra.mxu0 %v549
        %559 = vmatmul.bf16.gmra.mxu0 %v536
        %v560 = vpop.f32.mrf.mxu0
        %v561 = vadd.f32 %v512, %v560
        %v562 = vpop.f32.mrf.mxu0
        %v563 = vadd.f32 %v512, %v562
        %564 = vmatmul.bf16.gmra.mxu0 %v539
        %v565 = vpop.f32.mrf.mxu0
        %v566 = vadd.f32 %v512, %v565
        %v567 = vpop.f32.mrf.mxu0
        %v568 = vadd.f32 %v512, %v567
        %569 = vmatmul.bf16.gmra.mxu0 %v542
        %v570 = vpop.f32.mrf.mxu0
        %v571 = vadd.f32 %v512, %v570
        %v572 = vpop.f32.mrf.mxu0
        %v573 = vadd.f32 %v512, %v572
        %574 = vmatmul.bf16.gmra.mxu0 %v545
        %v575 = vpop.f32.mrf.mxu0
        %v576 = vadd.f32 %v512, %v575
        %v577 = vpop.f32.mrf.mxu0
        %v578 = vadd.f32 %v512, %v577
        %579 = vdwg.mxu0
        %v580 = vld [vmem:[%s3] sm:$0xff]
        %v581 = vadd.f32 %v561, %v580
        %v582 = vadd.f32 %v563, %v580
        %v583 = vadd.f32 %v566, %v580
        %v584 = vadd.f32 %v568, %v580
        %v585 = vadd.f32 %v571, %v580
        %v586 = vadd.f32 %v573, %v580
        %v587 = vadd.f32 %v576, %v580
        %v588 = vadd.f32 %v578, %v580
        %vm589 = vcmask 261120
        %590 = vst.msk [vmem:[#allocation2] sm:$0xff] %vm589, %v581
        %591 = vst.msk [vmem:[#allocation2 + $0x8] sm:$0xff] %vm589, %v582
        %592 = vst.msk [vmem:[#allocation2 + $0x10] sm:$0xff] %vm589, %v583
        %593 = vst.msk [vmem:[#allocation2 + $0x18] sm:$0xff] %vm589, %v584
        %594 = vst.msk [vmem:[#allocation2 + $0x20] sm:$0xff] %vm589, %v585
        %595 = vst.msk [vmem:[#allocation2 + $0x28] sm:$0xff] %vm589, %v586
        %596 = vst.msk [vmem:[#allocation2 + $0x30] sm:$0xff] %vm589, %v587
        %597 = vst.msk [vmem:[#allocation2 + $0x38] sm:$0xff] %vm589, %v588
        %vm598 = vcmask 64512
        %599 = vst.msk [vmem:[#allocation3] sm:$0xff] %vm598, 0.0
        %600 = vst.msk [vmem:[#allocation3 + $0x8] sm:$0xff] %vm598, 0.0
        %601 = vst.msk [vmem:[#allocation3 + $0x10] sm:$0xff] %vm598, 0.0
        %602 = vst.msk [vmem:[#allocation3 + $0x18] sm:$0xff] %vm598, 0.0
        %603 = vst.msk [vmem:[#allocation3 + $0x20] sm:$0xff] %vm598, 0.0
        %604 = vst.msk [vmem:[#allocation3 + $0x28] sm:$0xff] %vm598, 0.0
        %605 = vst.msk [vmem:[#allocation3 + $0x30] sm:$0xff] %vm598, 0.0
        %606 = vst.msk [vmem:[#allocation3 + $0x38] sm:$0xff] %vm598, 0.0
        %607 = vst.msk [vmem:[#allocation3 + $0x40] sm:$0xff] %vm598, 0.0
        %608 = vst.msk [vmem:[#allocation3 + $0x48] sm:$0xff] %vm598, 0.0
        %609 = vst.msk [vmem:[#allocation3 + $0x50] sm:$0xff] %vm598, 0.0
        %610 = vst.msk [vmem:[#allocation3 + $0x58] sm:$0xff] %vm598, 0.0
        %611 = vst.msk [vmem:[#allocation3 + $0x60] sm:$0xff] %vm598, 0.0
        %612 = vst.msk [vmem:[#allocation3 + $0x68] sm:$0xff] %vm598, 0.0
        %613 = vst.msk [vmem:[#allocation3 + $0x70] sm:$0xff] %vm598, 0.0
        %614 = vst.msk [vmem:[#allocation3 + $0x78] sm:$0xff] %vm598, 0.0
      $region68: #{_lambda_.1} parent=63 // pred_fallthru
        _
      %v615 = vld [vmem:[%s491] sm:$0xff]
      %v616 = vld [vmem:[#allocation2] sm:$0xff]
      %v617 = vld [vmem:[#allocation2 + $0x8] sm:$0xff]
      %v618 = vld [vmem:[#allocation2 + $0x10] sm:$0xff]
      %v619 = vld [vmem:[#allocation2 + $0x18] sm:$0xff]
      %v620 = vld [vmem:[#allocation2 + $0x20] sm:$0xff]
      %v621 = vld [vmem:[#allocation2 + $0x28] sm:$0xff]
      %v622 = vld [vmem:[#allocation2 + $0x30] sm:$0xff]
      %v623 = vld [vmem:[#allocation2 + $0x38] sm:$0xff]
      %v624 = vpack.c.bf16 %v617, %v616
      %v625 = vpack.c.bf16 %v619, %v618
      %v626 = vpack.c.bf16 %v621, %v620
      %v627 = vpack.c.bf16 %v623, %v622
      %v628 = vld [vmem:[%s472] sm:$0xf]
      %v629 = vld [vmem:[%s472 + $0x4] sm:$0xf]
      %v630 = vld [vmem:[%s472 + $0x8] sm:$0xf]
      %v631 = vld [vmem:[%s472 + $0xc] sm:$0xf]
      %v632 = vperm.slane %v615, 0
      %v637 = vunpack.c.l.b16 %v628
      %v638 = vunpack.c.l.b16 %v629
      %v639 = vunpack.c.l.b16 %v630
      %v640 = vunpack.c.l.b16 %v631
      %v641 = vpack.c.b16 %v638, %v637
      %v642 = vpack.c.b16 %v640, %v639
      %vm645 = vcmask 261120
      %v647 = vsel %vm645, %v624, 0
      %v650 = vsel %vm645, %v625, 0
      %v653 = vsel %vm645, %v626, 0
      %v656 = vsel %vm645, %v627, 0
      %658 = vmatpush.bf16.msra.mxu0 0
      %659 = vmatpush.bf16.msra.mxu0 0
      %660 = vmatpush.bf16.msra.mxu0 0
      %661 = vmatpush.bf16.msra.mxu0 0
      %662 = vmatpush.bf16.msra.mxu0 0
      %663 = vmatpush.bf16.msra.mxu0 0
      %664 = vmatpush.bf16.msra.mxu0 %v642
      %665 = vmatpush.bf16.msra.mxu0 %v641
      %666 = vmatmul.bf16.gmra.mxu0 %v647
      %v667 = vpop.f32.mrf.mxu0
      %v668 = vadd.f32 %v632, %v667
      %v669 = vpop.f32.mrf.mxu0
      %v670 = vadd.f32 %v632, %v669
      %671 = vmatmul.bf16.gmra.mxu0 %v650
      %v672 = vpop.f32.mrf.mxu0
      %v673 = vadd.f32 %v632, %v672
      %v674 = vpop.f32.mrf.mxu0
      %v675 = vadd.f32 %v632, %v674
      %676 = vmatmul.bf16.gmra.mxu0 %v653
      %v677 = vpop.f32.mrf.mxu0
      %v678 = vadd.f32 %v632, %v677
      %v679 = vpop.f32.mrf.mxu0
      %v680 = vadd.f32 %v632, %v679
      %681 = vmatmul.bf16.gmra.mxu0 %v656
      %v682 = vpop.f32.mrf.mxu0
      %v683 = vadd.f32 %v632, %v682
      %v684 = vpop.f32.mrf.mxu0
      %v685 = vadd.f32 %v632, %v684
      %686 = vdwg.mxu0
      %v687 = vpack.c.bf16 %v668, %v668
      %v688 = vpack.c.bf16 %v670, %v670
      %v689 = vpack.c.bf16 %v673, %v673
      %v690 = vpack.c.bf16 %v675, %v675
      %v691 = vpack.c.bf16 %v678, %v678
      %v692 = vpack.c.bf16 %v680, %v680
      %v693 = vpack.c.bf16 %v683, %v683
      %v694 = vpack.c.bf16 %v685, %v685
      %v696 = vunpack.c.l.b16 %v687
      %v697 = vpack.c.b16 %v696, %v696
      %698 = vrot.lane.b32.xlu0 %v697, 96
      %v699 = vpop.permute.xlu0 %698
      %vm700 = vcmask 130048
      %v702 = vsel %vm700, %v687, 0
      %v705 = vsel %vm700, %v699, 0
      %707 = vmatpush.bf16.xpose.msra.mxu0 0
      %708 = vmatpush.bf16.xpose.msra.mxu0 0
      %709 = vmatpush.bf16.xpose.msra.mxu0 0
      %710 = vmatpush.bf16.xpose.msra.mxu0 0
      %711 = vmatpush.bf16.xpose.msra.mxu0 0
      %712 = vmatpush.bf16.xpose.msra.mxu0 0
      %713 = vmatpush.bf16.xpose.msra.mxu0 0
      %714 = vmatpush.bf16.xpose.msra.mxu0 %v705
      %715 = vmatmul.bf16.gmra.mxu0 %v702
      %v716 = vpop.f32.mrf.mxu0
      %v717 = vadd.f32 0.0, %v716
      %v718 = vpop.f32.mrf.mxu0
      %719 = vdwg.mxu0
      %v721 = vunpack.c.l.b16 %v688
      %v722 = vpack.c.b16 %v721, %v721
      %723 = vrot.lane.b32.xlu0 %v722, 96
      %v724 = vpop.permute.xlu0 %723
      %v726 = vsel %vm700, %v688, 0
      %v729 = vsel %vm700, %v724, 0
      %731 = vmatpush.bf16.xpose.msra.mxu0 0
      %732 = vmatpush.bf16.xpose.msra.mxu0 0
      %733 = vmatpush.bf16.xpose.msra.mxu0 0
      %734 = vmatpush.bf16.xpose.msra.mxu0 0
      %735 = vmatpush.bf16.xpose.msra.mxu0 0
      %736 = vmatpush.bf16.xpose.msra.mxu0 0
      %737 = vmatpush.bf16.xpose.msra.mxu0 0
      %738 = vmatpush.bf16.xpose.msra.mxu0 %v729
      %739 = vmatmul.bf16.gmra.mxu0 %v726
      %v740 = vpop.f32.mrf.mxu0
      %v741 = vadd.f32 0.0, %v740
      %v742 = vpop.f32.mrf.mxu0
      %743 = vdwg.mxu0
      %v745 = vunpack.c.l.b16 %v689
      %v746 = vpack.c.b16 %v745, %v745
      %747 = vrot.lane.b32.xlu0 %v746, 96
      %v748 = vpop.permute.xlu0 %747
      %v750 = vsel %vm700, %v689, 0
      %v753 = vsel %vm700, %v748, 0
      %755 = vmatpush.bf16.xpose.msra.mxu0 0
      %756 = vmatpush.bf16.xpose.msra.mxu0 0
      %757 = vmatpush.bf16.xpose.msra.mxu0 0
      %758 = vmatpush.bf16.xpose.msra.mxu0 0
      %759 = vmatpush.bf16.xpose.msra.mxu0 0
      %760 = vmatpush.bf16.xpose.msra.mxu0 0
      %761 = vmatpush.bf16.xpose.msra.mxu0 0
      %762 = vmatpush.bf16.xpose.msra.mxu0 %v753
      %763 = vmatmul.bf16.gmra.mxu0 %v750
      %v764 = vpop.f32.mrf.mxu0
      %v765 = vadd.f32 0.0, %v764
      %v766 = vpop.f32.mrf.mxu0
      %767 = vdwg.mxu0
      %v769 = vunpack.c.l.b16 %v690
      %v770 = vpack.c.b16 %v769, %v769
      %771 = vrot.lane.b32.xlu0 %v770, 96
      %v772 = vpop.permute.xlu0 %771
      %v774 = vsel %vm700, %v690, 0
      %v777 = vsel %vm700, %v772, 0
      %779 = vmatpush.bf16.xpose.msra.mxu0 0
      %780 = vmatpush.bf16.xpose.msra.mxu0 0
      %781 = vmatpush.bf16.xpose.msra.mxu0 0
      %782 = vmatpush.bf16.xpose.msra.mxu0 0
      %783 = vmatpush.bf16.xpose.msra.mxu0 0
      %784 = vmatpush.bf16.xpose.msra.mxu0 0
      %785 = vmatpush.bf16.xpose.msra.mxu0 0
      %786 = vmatpush.bf16.xpose.msra.mxu0 %v777
      %787 = vmatmul.bf16.gmra.mxu0 %v774
      %v788 = vpop.f32.mrf.mxu0
      %v789 = vadd.f32 0.0, %v788
      %v790 = vpop.f32.mrf.mxu0
      %791 = vdwg.mxu0
      %v793 = vunpack.c.l.b16 %v691
      %v794 = vpack.c.b16 %v793, %v793
      %795 = vrot.lane.b32.xlu0 %v794, 96
      %v796 = vpop.permute.xlu0 %795
      %v798 = vsel %vm700, %v691, 0
      %v801 = vsel %vm700, %v796, 0
      %803 = vmatpush.bf16.xpose.msra.mxu0 0
      %804 = vmatpush.bf16.xpose.msra.mxu0 0
      %805 = vmatpush.bf16.xpose.msra.mxu0 0
      %806 = vmatpush.bf16.xpose.msra.mxu0 0
      %807 = vmatpush.bf16.xpose.msra.mxu0 0
      %808 = vmatpush.bf16.xpose.msra.mxu0 0
      %809 = vmatpush.bf16.xpose.msra.mxu0 0
      %810 = vmatpush.bf16.xpose.msra.mxu0 %v801
      %811 = vmatmul.bf16.gmra.mxu0 %v798
      %v812 = vpop.f32.mrf.mxu0
      %v813 = vadd.f32 0.0, %v812
      %v814 = vpop.f32.mrf.mxu0
      %815 = vdwg.mxu0
      %v817 = vunpack.c.l.b16 %v692
      %v818 = vpack.c.b16 %v817, %v817
      %819 = vrot.lane.b32.xlu0 %v818, 96
      %v820 = vpop.permute.xlu0 %819
      %v822 = vsel %vm700, %v692, 0
      %v825 = vsel %vm700, %v820, 0
      %827 = vmatpush.bf16.xpose.msra.mxu0 0
      %828 = vmatpush.bf16.xpose.msra.mxu0 0
      %829 = vmatpush.bf16.xpose.msra.mxu0 0
      %830 = vmatpush.bf16.xpose.msra.mxu0 0
      %831 = vmatpush.bf16.xpose.msra.mxu0 0
      %832 = vmatpush.bf16.xpose.msra.mxu0 0
      %833 = vmatpush.bf16.xpose.msra.mxu0 0
      %834 = vmatpush.bf16.xpose.msra.mxu0 %v825
      %835 = vmatmul.bf16.gmra.mxu0 %v822
      %v836 = vpop.f32.mrf.mxu0
      %v837 = vadd.f32 0.0, %v836
      %v838 = vpop.f32.mrf.mxu0
      %839 = vdwg.mxu0
      %v841 = vunpack.c.l.b16 %v693
      %v842 = vpack.c.b16 %v841, %v841
      %843 = vrot.lane.b32.xlu0 %v842, 96
      %v844 = vpop.permute.xlu0 %843
      %v846 = vsel %vm700, %v693, 0
      %v849 = vsel %vm700, %v844, 0
      %851 = vmatpush.bf16.xpose.msra.mxu0 0
      %852 = vmatpush.bf16.xpose.msra.mxu0 0
      %853 = vmatpush.bf16.xpose.msra.mxu0 0
      %854 = vmatpush.bf16.xpose.msra.mxu0 0
      %855 = vmatpush.bf16.xpose.msra.mxu0 0
      %856 = vmatpush.bf16.xpose.msra.mxu0 0
      %857 = vmatpush.bf16.xpose.msra.mxu0 0
      %858 = vmatpush.bf16.xpose.msra.mxu0 %v849
      %859 = vmatmul.bf16.gmra.mxu0 %v846
      %v860 = vpop.f32.mrf.mxu0
      %v861 = vadd.f32 0.0, %v860
      %v862 = vpop.f32.mrf.mxu0
      %863 = vdwg.mxu0
      %v865 = vunpack.c.l.b16 %v694
      %v866 = vpack.c.b16 %v865, %v865
      %867 = vrot.lane.b32.xlu0 %v866, 96
      %v868 = vpop.permute.xlu0 %867
      %v870 = vsel %vm700, %v694, 0
      %v873 = vsel %vm700, %v868, 0
      %875 = vmatpush.bf16.xpose.msra.mxu0 0
      %876 = vmatpush.bf16.xpose.msra.mxu0 0
      %877 = vmatpush.bf16.xpose.msra.mxu0 0
      %878 = vmatpush.bf16.xpose.msra.mxu0 0
      %879 = vmatpush.bf16.xpose.msra.mxu0 0
      %880 = vmatpush.bf16.xpose.msra.mxu0 0
      %881 = vmatpush.bf16.xpose.msra.mxu0 0
      %882 = vmatpush.bf16.xpose.msra.mxu0 %v873
      %883 = vmatmul.bf16.gmra.mxu0 %v870
      %v884 = vpop.f32.mrf.mxu0
      %v885 = vadd.f32 0.0, %v884
      %v886 = vpop.f32.mrf.mxu0
      %887 = vdwg.mxu0
      %v888 = vmul.f32 %v717, 0.25
      %v889 = vmul.f32 %v741, 0.25
      %v890 = vmul.f32 %v765, 0.25
      %v891 = vmul.f32 %v789, 0.25
      %v892 = vmul.f32 %v813, 0.25
      %v893 = vmul.f32 %v837, 0.25
      %v894 = vmul.f32 %v861, 0.25
      %v895 = vmul.f32 %v885, 0.25
      %v896 = vld [vmem:[#allocation3] sm:$0xff]
      %v897 = vld [vmem:[#allocation3 + $0x8] sm:$0xff]
      %v898 = vld [vmem:[#allocation3 + $0x10] sm:$0xff]
      %v899 = vld [vmem:[#allocation3 + $0x18] sm:$0xff]
      %v900 = vld [vmem:[#allocation3 + $0x20] sm:$0xff]
      %v901 = vld [vmem:[#allocation3 + $0x28] sm:$0xff]
      %v902 = vld [vmem:[#allocation3 + $0x30] sm:$0xff]
      %v903 = vld [vmem:[#allocation3 + $0x38] sm:$0xff]
      %v904 = vadd.f32 %v888, %v896
      %v905 = vadd.f32 %v889, %v897
      %v906 = vadd.f32 %v890, %v898
      %v907 = vadd.f32 %v891, %v899
      %v908 = vadd.f32 %v892, %v900
      %v909 = vadd.f32 %v893, %v901
      %v910 = vadd.f32 %v894, %v902
      %v911 = vadd.f32 %v895, %v903
      %vm912 = vcmask 64512
      %913 = vst.msk [vmem:[#allocation3] sm:$0xff] %vm912, %v904
      %914 = vst.msk [vmem:[#allocation3 + $0x8] sm:$0xff] %vm912, %v905
      %915 = vst.msk [vmem:[#allocation3 + $0x10] sm:$0xff] %vm912, %v906
      %916 = vst.msk [vmem:[#allocation3 + $0x18] sm:$0xff] %vm912, %v907
      %917 = vst.msk [vmem:[#allocation3 + $0x20] sm:$0xff] %vm912, %v908
      %918 = vst.msk [vmem:[#allocation3 + $0x28] sm:$0xff] %vm912, %v909
      %919 = vst.msk [vmem:[#allocation3 + $0x30] sm:$0xff] %vm912, %v910
      %920 = vst.msk [vmem:[#allocation3 + $0x38] sm:$0xff] %vm912, %v911
      %v921 = vsel %vm912, %v904, -inf
      %922 = vmax.xlane.f32.xlu0 %v921
      %v923 = vpop.xlane.xlu0 %922
      %v924 = vsel %vm912, %v905, -inf
      %925 = vmax.xlane.f32.xlu0 %v924
      %v926 = vpop.xlane.xlu0 %925
      %v927 = vsel %vm912, %v906, -inf
      %928 = vmax.xlane.f32.xlu0 %v927
      %v929 = vpop.xlane.xlu0 %928
      %v930 = vsel %vm912, %v907, -inf
      %931 = vmax.xlane.f32.xlu0 %v930
      %v932 = vpop.xlane.xlu0 %931
      %v933 = vsel %vm912, %v908, -inf
      %934 = vmax.xlane.f32.xlu0 %v933
      %v935 = vpop.xlane.xlu0 %934
      %v936 = vsel %vm912, %v909, -inf
      %937 = vmax.xlane.f32.xlu0 %v936
      %v938 = vpop.xlane.xlu0 %937
      %v939 = vsel %vm912, %v910, -inf
      %940 = vmax.xlane.f32.xlu0 %v939
      %v941 = vpop.xlane.xlu0 %940
      %v942 = vsel %vm912, %v911, -inf
      %943 = vmax.xlane.f32.xlu0 %v942
      %v944 = vpop.xlane.xlu0 %943
      %v945 = vsub.f32 %v904, %v923
      %v946 = vsub.f32 %v905, %v926
      %v947 = vsub.f32 %v906, %v929
      %v948 = vsub.f32 %v907, %v932
      %v949 = vsub.f32 %v908, %v935
      %v950 = vsub.f32 %v909, %v938
      %v951 = vsub.f32 %v910, %v941
      %v952 = vsub.f32 %v911, %v944
      %v953 = vmul.f32 %v945, 1.442695
      %v954 = vpow.pop %v953
      %v955 = vmul.f32 %v946, 1.442695
      %v956 = vpow.pop %v955
      %v957 = vmul.f32 %v947, 1.442695
      %v958 = vpow.pop %v957
      %v959 = vmul.f32 %v948, 1.442695
      %v960 = vpow.pop %v959
      %v961 = vmul.f32 %v949, 1.442695
      %v962 = vpow.pop %v961
      %v963 = vmul.f32 %v950, 1.442695
      %v964 = vpow.pop %v963
      %v965 = vmul.f32 %v951, 1.442695
      %v966 = vpow.pop %v965
      %v967 = vmul.f32 %v952, 1.442695
      %v968 = vpow.pop %v967
      %v969 = vsel %vm912, %v954, 0.0
      %970 = vadd.xlane.f32.xlu0 %v969
      %v971 = vpop.xlane.xlu0 %970
      %v972 = vsel %vm912, %v956, 0.0
      %973 = vadd.xlane.f32.xlu0 %v972
      %v974 = vpop.xlane.xlu0 %973
      %v975 = vsel %vm912, %v958, 0.0
      %976 = vadd.xlane.f32.xlu0 %v975
      %v977 = vpop.xlane.xlu0 %976
      %v978 = vsel %vm912, %v960, 0.0
      %979 = vadd.xlane.f32.xlu0 %v978
      %v980 = vpop.xlane.xlu0 %979
      %v981 = vsel %vm912, %v962, 0.0
      %982 = vadd.xlane.f32.xlu0 %v981
      %v983 = vpop.xlane.xlu0 %982
      %v984 = vsel %vm912, %v964, 0.0
      %985 = vadd.xlane.f32.xlu0 %v984
      %v986 = vpop.xlane.xlu0 %985
      %v987 = vsel %vm912, %v966, 0.0
      %988 = vadd.xlane.f32.xlu0 %v987
      %v989 = vpop.xlane.xlu0 %988
      %v990 = vsel %vm912, %v968, 0.0
      %991 = vadd.xlane.f32.xlu0 %v990
      %v992 = vpop.xlane.xlu0 %991
      %v993 = vrcp.pop %v971
      %v994 = vrcp.pop %v974
      %v995 = vrcp.pop %v977
      %v996 = vrcp.pop %v980
      %v997 = vrcp.pop %v983
      %v998 = vrcp.pop %v986
      %v999 = vrcp.pop %v989
      %v1000 = vrcp.pop %v992
      %v1001 = vmul.f32 %v954, %v993
      %v1002 = vmul.f32 %v956, %v994
      %v1003 = vmul.f32 %v958, %v995
      %v1004 = vmul.f32 %v960, %v996
      %v1005 = vmul.f32 %v962, %v997
      %v1006 = vmul.f32 %v964, %v998
      %v1007 = vmul.f32 %v966, %v999
      %v1008 = vmul.f32 %v968, %v1000
      %v1009 = vpack.c.bf16 %v1001, %v1001
      %v1010 = vpack.c.bf16 %v1002, %v1002
      %v1011 = vpack.c.bf16 %v1003, %v1003
      %v1012 = vpack.c.bf16 %v1004, %v1004
      %v1013 = vpack.c.bf16 %v1005, %v1005
      %v1014 = vpack.c.bf16 %v1006, %v1006
      %v1015 = vpack.c.bf16 %v1007, %v1007
      %v1016 = vpack.c.bf16 %v1008, %v1008
      %1017 = vrot.lane.b32.xlu0 %v697, 64
      %v1018 = vpop.permute.xlu0 %1017
      %v1020 = vsel %vm912, %v1009, 0
      %vm1022 = vcmask 1043456
      %v1024 = vsel %vm1022, %v1018, 0
      %1026 = vmatpush.bf16.msra.mxu0 0
      %1027 = vmatpush.bf16.msra.mxu0 0
      %1028 = vmatpush.bf16.msra.mxu0 0
      %1029 = vmatpush.bf16.msra.mxu0 0
      %1030 = vmatpush.bf16.msra.mxu0 0
      %1031 = vmatpush.bf16.msra.mxu0 0
      %1032 = vmatpush.bf16.msra.mxu0 0
      %1033 = vmatpush.bf16.msra.mxu0 %v1024
      %1034 = vmatmul.bf16.gmra.mxu0 %v1020
      %v1035 = vpop.f32.mrf.mxu0
      %v1036 = vadd.f32 0.0, %v1035
      %v1037 = vpop.f32.mrf.mxu0
      %1038 = vdwg.mxu0
      %1039 = vrot.lane.b32.xlu0 %v722, 64
      %v1040 = vpop.permute.xlu0 %1039
      %v1042 = vsel %vm912, %v1010, 0
      %v1045 = vsel %vm1022, %v1040, 0
      %1047 = vmatpush.bf16.msra.mxu0 0
      %1048 = vmatpush.bf16.msra.mxu0 0
      %1049 = vmatpush.bf16.msra.mxu0 0
      %1050 = vmatpush.bf16.msra.mxu0 0
      %1051 = vmatpush.bf16.msra.mxu0 0
      %1052 = vmatpush.bf16.msra.mxu0 0
      %1053 = vmatpush.bf16.msra.mxu0 0
      %1054 = vmatpush.bf16.msra.mxu0 %v1045
      %1055 = vmatmul.bf16.gmra.mxu0 %v1042
      %v1056 = vpop.f32.mrf.mxu0
      %v1057 = vadd.f32 0.0, %v1056
      %v1058 = vpop.f32.mrf.mxu0
      %1059 = vdwg.mxu0
      %1060 = vrot.lane.b32.xlu0 %v746, 64
      %v1061 = vpop.permute.xlu0 %1060
      %v1063 = vsel %vm912, %v1011, 0
      %v1066 = vsel %vm1022, %v1061, 0
      %1068 = vmatpush.bf16.msra.mxu0 0
      %1069 = vmatpush.bf16.msra.mxu0 0
      %1070 = vmatpush.bf16.msra.mxu0 0
      %1071 = vmatpush.bf16.msra.mxu0 0
      %1072 = vmatpush.bf16.msra.mxu0 0
      %1073 = vmatpush.bf16.msra.mxu0 0
      %1074 = vmatpush.bf16.msra.mxu0 0
      %1075 = vmatpush.bf16.msra.mxu0 %v1066
      %1076 = vmatmul.bf16.gmra.mxu0 %v1063
      %v1077 = vpop.f32.mrf.mxu0
      %v1078 = vadd.f32 0.0, %v1077
      %v1079 = vpop.f32.mrf.mxu0
      %1080 = vdwg.mxu0
      %1081 = vrot.lane.b32.xlu0 %v770, 64
      %v1082 = vpop.permute.xlu0 %1081
      %v1084 = vsel %vm912, %v1012, 0
      %v1087 = vsel %vm1022, %v1082, 0
      %1089 = vmatpush.bf16.msra.mxu0 0
      %1090 = vmatpush.bf16.msra.mxu0 0
      %1091 = vmatpush.bf16.msra.mxu0 0
      %1092 = vmatpush.bf16.msra.mxu0 0
      %1093 = vmatpush.bf16.msra.mxu0 0
      %1094 = vmatpush.bf16.msra.mxu0 0
      %1095 = vmatpush.bf16.msra.mxu0 0
      %1096 = vmatpush.bf16.msra.mxu0 %v1087
      %1097 = vmatmul.bf16.gmra.mxu0 %v1084
      %v1098 = vpop.f32.mrf.mxu0
      %v1099 = vadd.f32 0.0, %v1098
      %v1100 = vpop.f32.mrf.mxu0
      %1101 = vdwg.mxu0
      %1102 = vrot.lane.b32.xlu0 %v794, 64
      %v1103 = vpop.permute.xlu0 %1102
      %v1105 = vsel %vm912, %v1013, 0
      %v1108 = vsel %vm1022, %v1103, 0
      %1110 = vmatpush.bf16.msra.mxu0 0
      %1111 = vmatpush.bf16.msra.mxu0 0
      %1112 = vmatpush.bf16.msra.mxu0 0
      %1113 = vmatpush.bf16.msra.mxu0 0
      %1114 = vmatpush.bf16.msra.mxu0 0
      %1115 = vmatpush.bf16.msra.mxu0 0
      %1116 = vmatpush.bf16.msra.mxu0 0
      %1117 = vmatpush.bf16.msra.mxu0 %v1108
      %1118 = vmatmul.bf16.gmra.mxu0 %v1105
      %v1119 = vpop.f32.mrf.mxu0
      %v1120 = vadd.f32 0.0, %v1119
      %v1121 = vpop.f32.mrf.mxu0
      %1122 = vdwg.mxu0
      %1123 = vrot.lane.b32.xlu0 %v818, 64
      %v1124 = vpop.permute.xlu0 %1123
      %v1126 = vsel %vm912, %v1014, 0
      %v1129 = vsel %vm1022, %v1124, 0
      %1131 = vmatpush.bf16.msra.mxu0 0
      %1132 = vmatpush.bf16.msra.mxu0 0
      %1133 = vmatpush.bf16.msra.mxu0 0
      %1134 = vmatpush.bf16.msra.mxu0 0
      %1135 = vmatpush.bf16.msra.mxu0 0
      %1136 = vmatpush.bf16.msra.mxu0 0
      %1137 = vmatpush.bf16.msra.mxu0 0
      %1138 = vmatpush.bf16.msra.mxu0 %v1129
      %1139 = vmatmul.bf16.gmra.mxu0 %v1126
      %v1140 = vpop.f32.mrf.mxu0
      %v1141 = vadd.f32 0.0, %v1140
      %v1142 = vpop.f32.mrf.mxu0
      %1143 = vdwg.mxu0
      %1144 = vrot.lane.b32.xlu0 %v842, 64
      %v1145 = vpop.permute.xlu0 %1144
      %v1147 = vsel %vm912, %v1015, 0
      %v1150 = vsel %vm1022, %v1145, 0
      %1152 = vmatpush.bf16.msra.mxu0 0
      %1153 = vmatpush.bf16.msra.mxu0 0
      %1154 = vmatpush.bf16.msra.mxu0 0
      %1155 = vmatpush.bf16.msra.mxu0 0
      %1156 = vmatpush.bf16.msra.mxu0 0
      %1157 = vmatpush.bf16.msra.mxu0 0
      %1158 = vmatpush.bf16.msra.mxu0 0
      %1159 = vmatpush.bf16.msra.mxu0 %v1150
      %1160 = vmatmul.bf16.gmra.mxu0 %v1147
      %v1161 = vpop.f32.mrf.mxu0
      %v1162 = vadd.f32 0.0, %v1161
      %v1163 = vpop.f32.mrf.mxu0
      %1164 = vdwg.mxu0
      %1165 = vrot.lane.b32.xlu0 %v866, 64
      %v1166 = vpop.permute.xlu0 %1165
      %v1168 = vsel %vm912, %v1016, 0
      %v1171 = vsel %vm1022, %v1166, 0
      %1173 = vmatpush.bf16.msra.mxu0 0
      %1174 = vmatpush.bf16.msra.mxu0 0
      %1175 = vmatpush.bf16.msra.mxu0 0
      %1176 = vmatpush.bf16.msra.mxu0 0
      %1177 = vmatpush.bf16.msra.mxu0 0
      %1178 = vmatpush.bf16.msra.mxu0 0
      %1179 = vmatpush.bf16.msra.mxu0 0
      %1180 = vmatpush.bf16.msra.mxu0 %v1171
      %1181 = vmatmul.bf16.gmra.mxu0 %v1168
      %v1182 = vpop.f32.mrf.mxu0
      %v1183 = vadd.f32 0.0, %v1182
      %v1184 = vpop.f32.mrf.mxu0
      %1185 = vdwg.mxu0
      %1186 = vrot.lane.b32.xlu0 %v697, 112
      %v1187 = vpop.permute.xlu0 %1186
      %1188 = vrot.lane.b32.xlu0 %v697, 80
      %v1189 = vpop.permute.xlu0 %1188
      %v1191 = vsel %vm700, %v1187, 0
      %v1194 = vsel %vm700, %v1189, 0
      %1196 = vmatpush.bf16.xpose.msra.mxu0 0
      %1197 = vmatpush.bf16.xpose.msra.mxu0 0
      %1198 = vmatpush.bf16.xpose.msra.mxu0 0
      %1199 = vmatpush.bf16.xpose.msra.mxu0 0
      %1200 = vmatpush.bf16.xpose.msra.mxu0 0
      %1201 = vmatpush.bf16.xpose.msra.mxu0 0
      %1202 = vmatpush.bf16.xpose.msra.mxu0 0
      %1203 = vmatpush.bf16.xpose.msra.mxu0 %v1194
      %1204 = vmatmul.bf16.gmra.mxu0 %v1191
      %v1205 = vpop.f32.mrf.mxu0
      %v1206 = vadd.f32 0.0, %v1205
      %v1207 = vpop.f32.mrf.mxu0
      %1208 = vdwg.mxu0
      %1209 = vrot.lane.b32.xlu0 %v722, 112
      %v1210 = vpop.permute.xlu0 %1209
      %1211 = vrot.lane.b32.xlu0 %v722, 80
      %v1212 = vpop.permute.xlu0 %1211
      %v1214 = vsel %vm700, %v1210, 0
      %v1217 = vsel %vm700, %v1212, 0
      %1219 = vmatpush.bf16.xpose.msra.mxu0 0
      %1220 = vmatpush.bf16.xpose.msra.mxu0 0
      %1221 = vmatpush.bf16.xpose.msra.mxu0 0
      %1222 = vmatpush.bf16.xpose.msra.mxu0 0
      %1223 = vmatpush.bf16.xpose.msra.mxu0 0
      %1224 = vmatpush.bf16.xpose.msra.mxu0 0
      %1225 = vmatpush.bf16.xpose.msra.mxu0 0
      %1226 = vmatpush.bf16.xpose.msra.mxu0 %v1217
      %1227 = vmatmul.bf16.gmra.mxu0 %v1214
      %v1228 = vpop.f32.mrf.mxu0
      %v1229 = vadd.f32 0.0, %v1228
      %v1230 = vpop.f32.mrf.mxu0
      %1231 = vdwg.mxu0
      %1232 = vrot.lane.b32.xlu0 %v746, 112
      %v1233 = vpop.permute.xlu0 %1232
      %1234 = vrot.lane.b32.xlu0 %v746, 80
      %v1235 = vpop.permute.xlu0 %1234
      %v1237 = vsel %vm700, %v1233, 0
      %v1240 = vsel %vm700, %v1235, 0
      %1242 = vmatpush.bf16.xpose.msra.mxu0 0
      %1243 = vmatpush.bf16.xpose.msra.mxu0 0
      %1244 = vmatpush.bf16.xpose.msra.mxu0 0
      %1245 = vmatpush.bf16.xpose.msra.mxu0 0
      %1246 = vmatpush.bf16.xpose.msra.mxu0 0
      %1247 = vmatpush.bf16.xpose.msra.mxu0 0
      %1248 = vmatpush.bf16.xpose.msra.mxu0 0
      %1249 = vmatpush.bf16.xpose.msra.mxu0 %v1240
      %1250 = vmatmul.bf16.gmra.mxu0 %v1237
      %v1251 = vpop.f32.mrf.mxu0
      %v1252 = vadd.f32 0.0, %v1251
      %v1253 = vpop.f32.mrf.mxu0
      %1254 = vdwg.mxu0
      %1255 = vrot.lane.b32.xlu0 %v770, 112
      %v1256 = vpop.permute.xlu0 %1255
      %1257 = vrot.lane.b32.xlu0 %v770, 80
      %v1258 = vpop.permute.xlu0 %1257
      %v1260 = vsel %vm700, %v1256, 0
      %v1263 = vsel %vm700, %v1258, 0
      %1265 = vmatpush.bf16.xpose.msra.mxu0 0
      %1266 = vmatpush.bf16.xpose.msra.mxu0 0
      %1267 = vmatpush.bf16.xpose.msra.mxu0 0
      %1268 = vmatpush.bf16.xpose.msra.mxu0 0
      %1269 = vmatpush.bf16.xpose.msra.mxu0 0
      %1270 = vmatpush.bf16.xpose.msra.mxu0 0
      %1271 = vmatpush.bf16.xpose.msra.mxu0 0
      %1272 = vmatpush.bf16.xpose.msra.mxu0 %v1263
      %1273 = vmatmul.bf16.gmra.mxu0 %v1260
      %v1274 = vpop.f32.mrf.mxu0
      %v1275 = vadd.f32 0.0, %v1274
      %v1276 = vpop.f32.mrf.mxu0
      %1277 = vdwg.mxu0
      %1278 = vrot.lane.b32.xlu0 %v794, 112
      %v1279 = vpop.permute.xlu0 %1278
      %1280 = vrot.lane.b32.xlu0 %v794, 80
      %v1281 = vpop.permute.xlu0 %1280
      %v1283 = vsel %vm700, %v1279, 0
      %v1286 = vsel %vm700, %v1281, 0
      %1288 = vmatpush.bf16.xpose.msra.mxu0 0
      %1289 = vmatpush.bf16.xpose.msra.mxu0 0
      %1290 = vmatpush.bf16.xpose.msra.mxu0 0
      %1291 = vmatpush.bf16.xpose.msra.mxu0 0
      %1292 = vmatpush.bf16.xpose.msra.mxu0 0
      %1293 = vmatpush.bf16.xpose.msra.mxu0 0
      %1294 = vmatpush.bf16.xpose.msra.mxu0 0
      %1295 = vmatpush.bf16.xpose.msra.mxu0 %v1286
      %1296 = vmatmul.bf16.gmra.mxu0 %v1283
      %v1297 = vpop.f32.mrf.mxu0
      %v1298 = vadd.f32 0.0, %v1297
      %v1299 = vpop.f32.mrf.mxu0
      %1300 = vdwg.mxu0
      %1301 = vrot.lane.b32.xlu0 %v818, 112
      %v1302 = vpop.permute.xlu0 %1301
      %1303 = vrot.lane.b32.xlu0 %v818, 80
      %v1304 = vpop.permute.xlu0 %1303
      %v1306 = vsel %vm700, %v1302, 0
      %v1309 = vsel %vm700, %v1304, 0
      %1311 = vmatpush.bf16.xpose.msra.mxu0 0
      %1312 = vmatpush.bf16.xpose.msra.mxu0 0
      %1313 = vmatpush.bf16.xpose.msra.mxu0 0
      %1314 = vmatpush.bf16.xpose.msra.mxu0 0
      %1315 = vmatpush.bf16.xpose.msra.mxu0 0
      %1316 = vmatpush.bf16.xpose.msra.mxu0 0
      %1317 = vmatpush.bf16.xpose.msra.mxu0 0
      %1318 = vmatpush.bf16.xpose.msra.mxu0 %v1309
      %1319 = vmatmul.bf16.gmra.mxu0 %v1306
      %v1320 = vpop.f32.mrf.mxu0
      %v1321 = vadd.f32 0.0, %v1320
      %v1322 = vpop.f32.mrf.mxu0
      %1323 = vdwg.mxu0
      %1324 = vrot.lane.b32.xlu0 %v842, 112
      %v1325 = vpop.permute.xlu0 %1324
      %1326 = vrot.lane.b32.xlu0 %v842, 80
      %v1327 = vpop.permute.xlu0 %1326
      %v1329 = vsel %vm700, %v1325, 0
      %v1332 = vsel %vm700, %v1327, 0
      %1334 = vmatpush.bf16.xpose.msra.mxu0 0
      %1335 = vmatpush.bf16.xpose.msra.mxu0 0
      %1336 = vmatpush.bf16.xpose.msra.mxu0 0
      %1337 = vmatpush.bf16.xpose.msra.mxu0 0
      %1338 = vmatpush.bf16.xpose.msra.mxu0 0
      %1339 = vmatpush.bf16.xpose.msra.mxu0 0
      %1340 = vmatpush.bf16.xpose.msra.mxu0 0
      %1341 = vmatpush.bf16.xpose.msra.mxu0 %v1332
      %1342 = vmatmul.bf16.gmra.mxu0 %v1329
      %v1343 = vpop.f32.mrf.mxu0
      %v1344 = vadd.f32 0.0, %v1343
      %v1345 = vpop.f32.mrf.mxu0
      %1346 = vdwg.mxu0
      %1347 = vrot.lane.b32.xlu0 %v866, 112
      %v1348 = vpop.permute.xlu0 %1347
      %1349 = vrot.lane.b32.xlu0 %v866, 80
      %v1350 = vpop.permute.xlu0 %1349
      %v1352 = vsel %vm700, %v1348, 0
      %v1355 = vsel %vm700, %v1350, 0
      %1357 = vmatpush.bf16.xpose.msra.mxu0 0
      %1358 = vmatpush.bf16.xpose.msra.mxu0 0
      %1359 = vmatpush.bf16.xpose.msra.mxu0 0
      %1360 = vmatpush.bf16.xpose.msra.mxu0 0
      %1361 = vmatpush.bf16.xpose.msra.mxu0 0
      %1362 = vmatpush.bf16.xpose.msra.mxu0 0
      %1363 = vmatpush.bf16.xpose.msra.mxu0 0
      %1364 = vmatpush.bf16.xpose.msra.mxu0 %v1355
      %1365 = vmatmul.bf16.gmra.mxu0 %v1352
      %v1366 = vpop.f32.mrf.mxu0
      %v1367 = vadd.f32 0.0, %v1366
      %v1368 = vpop.f32.mrf.mxu0
      %1369 = vdwg.mxu0
      %v1370 = vmul.f32 %v1206, 0.25
      %v1371 = vmul.f32 %v1229, 0.25
      %v1372 = vmul.f32 %v1252, 0.25
      %v1373 = vmul.f32 %v1275, 0.25
      %v1374 = vmul.f32 %v1298, 0.25
      %v1375 = vmul.f32 %v1321, 0.25
      %v1376 = vmul.f32 %v1344, 0.25
      %v1377 = vmul.f32 %v1367, 0.25
      %s1378 = scalar_lea.vmem [#allocation3], 64
      %v1379 = vld [vmem:[%s1378] sm:$0xff]
      %v1380 = vld [vmem:[%s1378 + $0x8] sm:$0xff]
      %v1381 = vld [vmem:[%s1378 + $0x10] sm:$0xff]
      %v1382 = vld [vmem:[%s1378 + $0x18] sm:$0xff]
      %v1383 = vld [vmem:[%s1378 + $0x20] sm:$0xff]
      %v1384 = vld [vmem:[%s1378 + $0x28] sm:$0xff]
      %v1385 = vld [vmem:[%s1378 + $0x30] sm:$0xff]
      %v1386 = vld [vmem:[%s1378 + $0x38] sm:$0xff]
      %v1387 = vadd.f32 %v1370, %v1379
      %v1388 = vadd.f32 %v1371, %v1380
      %v1389 = vadd.f32 %v1372, %v1381
      %v1390 = vadd.f32 %v1373, %v1382
      %v1391 = vadd.f32 %v1374, %v1383
      %v1392 = vadd.f32 %v1375, %v1384
      %v1393 = vadd.f32 %v1376, %v1385
      %v1394 = vadd.f32 %v1377, %v1386
      %1395 = vst.msk [vmem:[%s1378] sm:$0xff] %vm912, %v1387
      %1396 = vst.msk [vmem:[%s1378 + $0x8] sm:$0xff] %vm912, %v1388
      %1397 = vst.msk [vmem:[%s1378 + $0x10] sm:$0xff] %vm912, %v1389
      %1398 = vst.msk [vmem:[%s1378 + $0x18] sm:$0xff] %vm912, %v1390
      %1399 = vst.msk [vmem:[%s1378 + $0x20] sm:$0xff] %vm912, %v1391
      %1400 = vst.msk [vmem:[%s1378 + $0x28] sm:$0xff] %vm912, %v1392
      %1401 = vst.msk [vmem:[%s1378 + $0x30] sm:$0xff] %vm912, %v1393
      %1402 = vst.msk [vmem:[%s1378 + $0x38] sm:$0xff] %vm912, %v1394
      %v1403 = vsel %vm912, %v1387, -inf
      %1404 = vmax.xlane.f32.xlu0 %v1403
      %v1405 = vpop.xlane.xlu0 %1404
      %v1406 = vsel %vm912, %v1388, -inf
      %1407 = vmax.xlane.f32.xlu0 %v1406
      %v1408 = vpop.xlane.xlu0 %1407
      %v1409 = vsel %vm912, %v1389, -inf
      %1410 = vmax.xlane.f32.xlu0 %v1409
      %v1411 = vpop.xlane.xlu0 %1410
      %v1412 = vsel %vm912, %v1390, -inf
      %1413 = vmax.xlane.f32.xlu0 %v1412
      %v1414 = vpop.xlane.xlu0 %1413
      %v1415 = vsel %vm912, %v1391, -inf
      %1416 = vmax.xlane.f32.xlu0 %v1415
      %v1417 = vpop.xlane.xlu0 %1416
      %v1418 = vsel %vm912, %v1392, -inf
      %1419 = vmax.xlane.f32.xlu0 %v1418
      %v1420 = vpop.xlane.xlu0 %1419
      %v1421 = vsel %vm912, %v1393, -inf
      %1422 = vmax.xlane.f32.xlu0 %v1421
      %v1423 = vpop.xlane.xlu0 %1422
      %v1424 = vsel %vm912, %v1394, -inf
      %1425 = vmax.xlane.f32.xlu0 %v1424
      %v1426 = vpop.xlane.xlu0 %1425
      %v1427 = vsub.f32 %v1387, %v1405
      %v1428 = vsub.f32 %v1388, %v1408
      %v1429 = vsub.f32 %v1389, %v1411
      %v1430 = vsub.f32 %v1390, %v1414
      %v1431 = vsub.f32 %v1391, %v1417
      %v1432 = vsub.f32 %v1392, %v1420
      %v1433 = vsub.f32 %v1393, %v1423
      %v1434 = vsub.f32 %v1394, %v1426
      %v1435 = vmul.f32 %v1427, 1.442695
      %v1436 = vpow.pop %v1435
      %v1437 = vmul.f32 %v1428, 1.442695
      %v1438 = vpow.pop %v1437
      %v1439 = vmul.f32 %v1429, 1.442695
      %v1440 = vpow.pop %v1439
      %v1441 = vmul.f32 %v1430, 1.442695
      %v1442 = vpow.pop %v1441
      %v1443 = vmul.f32 %v1431, 1.442695
      %v1444 = vpow.pop %v1443
      %v1445 = vmul.f32 %v1432, 1.442695
      %v1446 = vpow.pop %v1445
      %v1447 = vmul.f32 %v1433, 1.442695
      %v1448 = vpow.pop %v1447
      %v1449 = vmul.f32 %v1434, 1.442695
      %v1450 = vpow.pop %v1449
      %v1451 = vsel %vm912, %v1436, 0.0
      %1452 = vadd.xlane.f32.xlu0 %v1451
      %v1453 = vpop.xlane.xlu0 %1452
      %v1454 = vsel %vm912, %v1438, 0.0
      %1455 = vadd.xlane.f32.xlu0 %v1454
      %v1456 = vpop.xlane.xlu0 %1455
      %v1457 = vsel %vm912, %v1440, 0.0
      %1458 = vadd.xlane.f32.xlu0 %v1457
      %v1459 = vpop.xlane.xlu0 %1458
      %v1460 = vsel %vm912, %v1442, 0.0
      %1461 = vadd.xlane.f32.xlu0 %v1460
      %v1462 = vpop.xlane.xlu0 %1461
      %v1463 = vsel %vm912, %v1444, 0.0
      %1464 = vadd.xlane.f32.xlu0 %v1463
      %v1465 = vpop.xlane.xlu0 %1464
      %v1466 = vsel %vm912, %v1446, 0.0
      %1467 = vadd.xlane.f32.xlu0 %v1466
      %v1468 = vpop.xlane.xlu0 %1467
      %v1469 = vsel %vm912, %v1448, 0.0
      %1470 = vadd.xlane.f32.xlu0 %v1469
      %v1471 = vpop.xlane.xlu0 %1470
      %v1472 = vsel %vm912, %v1450, 0.0
      %1473 = vadd.xlane.f32.xlu0 %v1472
      %v1474 = vpop.xlane.xlu0 %1473
      %v1475 = vrcp.pop %v1453
      %v1476 = vrcp.pop %v1456
      %v1477 = vrcp.pop %v1459
      %v1478 = vrcp.pop %v1462
      %v1479 = vrcp.pop %v1465
      %v1480 = vrcp.pop %v1468
      %v1481 = vrcp.pop %v1471
      %v1482 = vrcp.pop %v1474
      %v1483 = vmul.f32 %v1436, %v1475
      %v1484 = vmul.f32 %v1438, %v1476
      %v1485 = vmul.f32 %v1440, %v1477
      %v1486 = vmul.f32 %v1442, %v1478
      %v1487 = vmul.f32 %v1444, %v1479
      %v1488 = vmul.f32 %v1446, %v1480
      %v1489 = vmul.f32 %v1448, %v1481
      %v1490 = vmul.f32 %v1450, %v1482
      %v1491 = vpack.c.bf16 %v1483, %v1483
      %v1492 = vpack.c.bf16 %v1484, %v1484
      %v1493 = vpack.c.bf16 %v1485, %v1485
      %v1494 = vpack.c.bf16 %v1486, %v1486
      %v1495 = vpack.c.bf16 %v1487, %v1487
      %v1496 = vpack.c.bf16 %v1488, %v1488
      %v1497 = vpack.c.bf16 %v1489, %v1489
      %v1498 = vpack.c.bf16 %v1490, %v1490
      %1499 = vrot.lane.b32.xlu0 %v697, 48
      %v1500 = vpop.permute.xlu0 %1499
      %v1502 = vsel %vm912, %v1491, 0
      %v1505 = vsel %vm1022, %v1500, 0
      %1507 = vmatpush.bf16.msra.mxu0 0
      %1508 = vmatpush.bf16.msra.mxu0 0
      %1509 = vmatpush.bf16.msra.mxu0 0
      %1510 = vmatpush.bf16.msra.mxu0 0
      %1511 = vmatpush.bf16.msra.mxu0 0
      %1512 = vmatpush.bf16.msra.mxu0 0
      %1513 = vmatpush.bf16.msra.mxu0 0
      %1514 = vmatpush.bf16.msra.mxu0 %v1505
      %1515 = vmatmul.bf16.gmra.mxu0 %v1502
      %v1516 = vpop.f32.mrf.mxu0
      %v1517 = vadd.f32 0.0, %v1516
      %v1518 = vpop.f32.mrf.mxu0
      %1519 = vdwg.mxu0
      %1520 = vrot.lane.b32.xlu0 %v722, 48
      %v1521 = vpop.permute.xlu0 %1520
      %v1523 = vsel %vm912, %v1492, 0
      %v1526 = vsel %vm1022, %v1521, 0
      %1528 = vmatpush.bf16.msra.mxu0 0
      %1529 = vmatpush.bf16.msra.mxu0 0
      %1530 = vmatpush.bf16.msra.mxu0 0
      %1531 = vmatpush.bf16.msra.mxu0 0
      %1532 = vmatpush.bf16.msra.mxu0 0
      %1533 = vmatpush.bf16.msra.mxu0 0
      %1534 = vmatpush.bf16.msra.mxu0 0
      %1535 = vmatpush.bf16.msra.mxu0 %v1526
      %1536 = vmatmul.bf16.gmra.mxu0 %v1523
      %v1537 = vpop.f32.mrf.mxu0
      %v1538 = vadd.f32 0.0, %v1537
      %v1539 = vpop.f32.mrf.mxu0
      %1540 = vdwg.mxu0
      %1541 = vrot.lane.b32.xlu0 %v746, 48
      %v1542 = vpop.permute.xlu0 %1541
      %v1544 = vsel %vm912, %v1493, 0
      %v1547 = vsel %vm1022, %v1542, 0
      %1549 = vmatpush.bf16.msra.mxu0 0
      %1550 = vmatpush.bf16.msra.mxu0 0
      %1551 = vmatpush.bf16.msra.mxu0 0
      %1552 = vmatpush.bf16.msra.mxu0 0
      %1553 = vmatpush.bf16.msra.mxu0 0
      %1554 = vmatpush.bf16.msra.mxu0 0
      %1555 = vmatpush.bf16.msra.mxu0 0
      %1556 = vmatpush.bf16.msra.mxu0 %v1547
      %1557 = vmatmul.bf16.gmra.mxu0 %v1544
      %v1558 = vpop.f32.mrf.mxu0
      %v1559 = vadd.f32 0.0, %v1558
      %v1560 = vpop.f32.mrf.mxu0
      %1561 = vdwg.mxu0
      %1562 = vrot.lane.b32.xlu0 %v770, 48
      %v1563 = vpop.permute.xlu0 %1562
      %v1565 = vsel %vm912, %v1494, 0
      %v1568 = vsel %vm1022, %v1563, 0
      %1570 = vmatpush.bf16.msra.mxu0 0
      %1571 = vmatpush.bf16.msra.mxu0 0
      %1572 = vmatpush.bf16.msra.mxu0 0
      %1573 = vmatpush.bf16.msra.mxu0 0
      %1574 = vmatpush.bf16.msra.mxu0 0
      %1575 = vmatpush.bf16.msra.mxu0 0
      %1576 = vmatpush.bf16.msra.mxu0 0
      %1577 = vmatpush.bf16.msra.mxu0 %v1568
      %1578 = vmatmul.bf16.gmra.mxu0 %v1565
      %v1579 = vpop.f32.mrf.mxu0
      %v1580 = vadd.f32 0.0, %v1579
      %v1581 = vpop.f32.mrf.mxu0
      %1582 = vdwg.mxu0
      %1583 = vrot.lane.b32.xlu0 %v794, 48
      %v1584 = vpop.permute.xlu0 %1583
      %v1586 = vsel %vm912, %v1495, 0
      %v1589 = vsel %vm1022, %v1584, 0
      %1591 = vmatpush.bf16.msra.mxu0 0
      %1592 = vmatpush.bf16.msra.mxu0 0
      %1593 = vmatpush.bf16.msra.mxu0 0
      %1594 = vmatpush.bf16.msra.mxu0 0
      %1595 = vmatpush.bf16.msra.mxu0 0
      %1596 = vmatpush.bf16.msra.mxu0 0
      %1597 = vmatpush.bf16.msra.mxu0 0
      %1598 = vmatpush.bf16.msra.mxu0 %v1589
      %1599 = vmatmul.bf16.gmra.mxu0 %v1586
      %v1600 = vpop.f32.mrf.mxu0
      %v1601 = vadd.f32 0.0, %v1600
      %v1602 = vpop.f32.mrf.mxu0
      %1603 = vdwg.mxu0
      %1604 = vrot.lane.b32.xlu0 %v818, 48
      %v1605 = vpop.permute.xlu0 %1604
      %v1607 = vsel %vm912, %v1496, 0
      %v1610 = vsel %vm1022, %v1605, 0
      %1612 = vmatpush.bf16.msra.mxu0 0
      %1613 = vmatpush.bf16.msra.mxu0 0
      %1614 = vmatpush.bf16.msra.mxu0 0
      %1615 = vmatpush.bf16.msra.mxu0 0
      %1616 = vmatpush.bf16.msra.mxu0 0
      %1617 = vmatpush.bf16.msra.mxu0 0
      %1618 = vmatpush.bf16.msra.mxu0 0
      %1619 = vmatpush.bf16.msra.mxu0 %v1610
      %1620 = vmatmul.bf16.gmra.mxu0 %v1607
      %v1621 = vpop.f32.mrf.mxu0
      %v1622 = vadd.f32 0.0, %v1621
      %v1623 = vpop.f32.mrf.mxu0
      %1624 = vdwg.mxu0
      %1625 = vrot.lane.b32.xlu0 %v842, 48
      %v1626 = vpop.permute.xlu0 %1625
      %v1628 = vsel %vm912, %v1497, 0
      %v1631 = vsel %vm1022, %v1626, 0
      %1633 = vmatpush.bf16.msra.mxu0 0
      %1634 = vmatpush.bf16.msra.mxu0 0
      %1635 = vmatpush.bf16.msra.mxu0 0
      %1636 = vmatpush.bf16.msra.mxu0 0
      %1637 = vmatpush.bf16.msra.mxu0 0
      %1638 = vmatpush.bf16.msra.mxu0 0
      %1639 = vmatpush.bf16.msra.mxu0 0
      %1640 = vmatpush.bf16.msra.mxu0 %v1631
      %1641 = vmatmul.bf16.gmra.mxu0 %v1628
      %v1642 = vpop.f32.mrf.mxu0
      %v1643 = vadd.f32 0.0, %v1642
      %v1644 = vpop.f32.mrf.mxu0
      %1645 = vdwg.mxu0
      %1646 = vrot.lane.b32.xlu0 %v866, 48
      %v1647 = vpop.permute.xlu0 %1646
      %v1649 = vsel %vm912, %v1498, 0
      %v1652 = vsel %vm1022, %v1647, 0
      %1654 = vmatpush.bf16.msra.mxu0 0
      %1655 = vmatpush.bf16.msra.mxu0 0
      %1656 = vmatpush.bf16.msra.mxu0 0
      %1657 = vmatpush.bf16.msra.mxu0 0
      %1658 = vmatpush.bf16.msra.mxu0 0
      %1659 = vmatpush.bf16.msra.mxu0 0
      %1660 = vmatpush.bf16.msra.mxu0 0
      %1661 = vmatpush.bf16.msra.mxu0 %v1652
      %1662 = vmatmul.bf16.gmra.mxu0 %v1649
      %v1663 = vpop.f32.mrf.mxu0
      %v1664 = vadd.f32 0.0, %v1663
      %v1665 = vpop.f32.mrf.mxu0
      %1666 = vdwg.mxu0
      %1675 = vrot.lane.b32.xlu0 %v1517, 16
      %v1676 = vpop.permute.xlu0 %1675
      %1677 = vrot.lane.b32.xlu0 %v1538, 16
      %v1678 = vpop.permute.xlu0 %1677
      %1679 = vrot.lane.b32.xlu0 %v1559, 16
      %v1680 = vpop.permute.xlu0 %1679
      %1681 = vrot.lane.b32.xlu0 %v1580, 16
      %v1682 = vpop.permute.xlu0 %1681
      %1683 = vrot.lane.b32.xlu0 %v1601, 16
      %v1684 = vpop.permute.xlu0 %1683
      %1685 = vrot.lane.b32.xlu0 %v1622, 16
      %v1686 = vpop.permute.xlu0 %1685
      %1687 = vrot.lane.b32.xlu0 %v1643, 16
      %v1688 = vpop.permute.xlu0 %1687
      %1689 = vrot.lane.b32.xlu0 %v1664, 16
      %v1690 = vpop.permute.xlu0 %1689
      %v1699 = vsel %vm700, %v1036, %v1676
      %v1700 = vsel %vm700, %v1057, %v1678
      %v1701 = vsel %vm700, %v1078, %v1680
      %v1702 = vsel %vm700, %v1099, %v1682
      %v1703 = vsel %vm700, %v1120, %v1684
      %v1704 = vsel %vm700, %v1141, %v1686
      %v1705 = vsel %vm700, %v1162, %v1688
      %v1706 = vsel %vm700, %v1183, %v1690
      %v1707 = vpack.c.bf16 %v1700, %v1699
      %v1708 = vpack.c.bf16 %v1702, %v1701
      %v1709 = vpack.c.bf16 %v1704, %v1703
      %v1710 = vpack.c.bf16 %v1706, %v1705
      %v1711 = vld [vmem:[%s477] sm:$0xf]
      %v1712 = vld [vmem:[%s477 + $0x4] sm:$0xf]
      %v1713 = vld [vmem:[%s477 + $0x8] sm:$0xf]
      %v1714 = vld [vmem:[%s477 + $0xc] sm:$0xf]
      %v1715 = vperm.slane %v615, 1
      %v1720 = vunpack.c.l.b16 %v1711
      %v1721 = vunpack.c.l.b16 %v1712
      %v1722 = vunpack.c.l.b16 %v1713
      %v1723 = vunpack.c.l.b16 %v1714
      %v1724 = vpack.c.b16 %v1721, %v1720
      %v1725 = vpack.c.b16 %v1723, %v1722
      %v1729 = vsel %vm645, %v1707, 0
      %v1732 = vsel %vm645, %v1708, 0
      %v1735 = vsel %vm645, %v1709, 0
      %v1738 = vsel %vm645, %v1710, 0
      %1740 = vmatpush.bf16.msra.mxu0 0
      %1741 = vmatpush.bf16.msra.mxu0 0
      %1742 = vmatpush.bf16.msra.mxu0 0
      %1743 = vmatpush.bf16.msra.mxu0 0
      %1744 = vmatpush.bf16.msra.mxu0 0
      %1745 = vmatpush.bf16.msra.mxu0 0
      %1746 = vmatpush.bf16.msra.mxu0 %v1725
      %1747 = vmatpush.bf16.msra.mxu0 %v1724
      %1748 = vmatmul.bf16.gmra.mxu0 %v1729
      %v1749 = vpop.f32.mrf.mxu0
      %v1750 = vadd.f32 %v1715, %v1749
      %v1751 = vpop.f32.mrf.mxu0
      %v1752 = vadd.f32 %v1715, %v1751
      %1753 = vmatmul.bf16.gmra.mxu0 %v1732
      %v1754 = vpop.f32.mrf.mxu0
      %v1755 = vadd.f32 %v1715, %v1754
      %v1756 = vpop.f32.mrf.mxu0
      %v1757 = vadd.f32 %v1715, %v1756
      %1758 = vmatmul.bf16.gmra.mxu0 %v1735
      %v1759 = vpop.f32.mrf.mxu0
      %v1760 = vadd.f32 %v1715, %v1759
      %v1761 = vpop.f32.mrf.mxu0
      %v1762 = vadd.f32 %v1715, %v1761
      %1763 = vmatmul.bf16.gmra.mxu0 %v1738
      %v1764 = vpop.f32.mrf.mxu0
      %v1765 = vadd.f32 %v1715, %v1764
      %v1766 = vpop.f32.mrf.mxu0
      %v1767 = vadd.f32 %v1715, %v1766
      %1768 = vdwg.mxu0
      %v1769 = vadd.f32 %v616, %v1750
      %v1770 = vadd.f32 %v617, %v1752
      %v1771 = vadd.f32 %v618, %v1755
      %v1772 = vadd.f32 %v619, %v1757
      %v1773 = vadd.f32 %v620, %v1760
      %v1774 = vadd.f32 %v621, %v1762
      %v1775 = vadd.f32 %v622, %v1765
      %v1776 = vadd.f32 %v623, %v1767
      %v1777 = vsel %vm645, %v1769, 0.0
      %1778 = vadd.xlane.f32.xlu0 %v1777
      %v1779 = vpop.xlane.xlu0 %1778
      %v1780 = vsel %vm645, %v1770, 0.0
      %1781 = vadd.xlane.f32.xlu0 %v1780
      %v1782 = vpop.xlane.xlu0 %1781
      %v1783 = vsel %vm645, %v1771, 0.0
      %1784 = vadd.xlane.f32.xlu0 %v1783
      %v1785 = vpop.xlane.xlu0 %1784
      %v1786 = vsel %vm645, %v1772, 0.0
      %1787 = vadd.xlane.f32.xlu0 %v1786
      %v1788 = vpop.xlane.xlu0 %1787
      %v1789 = vsel %vm645, %v1773, 0.0
      %1790 = vadd.xlane.f32.xlu0 %v1789
      %v1791 = vpop.xlane.xlu0 %1790
      %v1792 = vsel %vm645, %v1774, 0.0
      %1793 = vadd.xlane.f32.xlu0 %v1792
      %v1794 = vpop.xlane.xlu0 %1793
      %v1795 = vsel %vm645, %v1775, 0.0
      %1796 = vadd.xlane.f32.xlu0 %v1795
      %v1797 = vpop.xlane.xlu0 %1796
      %v1798 = vsel %vm645, %v1776, 0.0
      %1799 = vadd.xlane.f32.xlu0 %v1798
      %v1800 = vpop.xlane.xlu0 %1799
      %v1801 = vrcp.pop 32.0
      %v1802 = vmul.f32 32.0, %v1801
      %v1803 = vsub.f32 1.0, %v1802
      %v1804 = vmul.f32 %v1801, %v1803
      %v1805 = vadd.f32 %v1801, %v1804
      %vm1806 = vweird.f32 %v1801
      %v1807 = vsel %vm1806, %v1801, %v1805
      %v1808 = vmul.f32 %v1779, %v1807
      %v1809 = vmul.f32 %v1782, %v1807
      %v1810 = vmul.f32 %v1785, %v1807
      %v1811 = vmul.f32 %v1788, %v1807
      %v1812 = vmul.f32 %v1791, %v1807
      %v1813 = vmul.f32 %v1794, %v1807
      %v1814 = vmul.f32 %v1797, %v1807
      %v1815 = vmul.f32 %v1800, %v1807
      %v1816 = vsub.f32 %v1769, %v1808
      %v1817 = vsub.f32 %v1770, %v1809
      %v1818 = vsub.f32 %v1771, %v1810
      %v1819 = vsub.f32 %v1772, %v1811
      %v1820 = vsub.f32 %v1773, %v1812
      %v1821 = vsub.f32 %v1774, %v1813
      %v1822 = vsub.f32 %v1775, %v1814
      %v1823 = vsub.f32 %v1776, %v1815
      %v1824 = vmul.f32 %v1816, %v1816
      %v1825 = vmul.f32 %v1817, %v1817
      %v1826 = vmul.f32 %v1818, %v1818
      %v1827 = vmul.f32 %v1819, %v1819
      %v1828 = vmul.f32 %v1820, %v1820
      %v1829 = vmul.f32 %v1821, %v1821
      %v1830 = vmul.f32 %v1822, %v1822
      %v1831 = vmul.f32 %v1823, %v1823
      %v1832 = vsel %vm645, %v1824, 0.0
      %1833 = vadd.xlane.f32.xlu0 %v1832
      %v1834 = vpop.xlane.xlu0 %1833
      %v1835 = vsel %vm645, %v1825, 0.0
      %1836 = vadd.xlane.f32.xlu0 %v1835
      %v1837 = vpop.xlane.xlu0 %1836
      %v1838 = vsel %vm645, %v1826, 0.0
      %1839 = vadd.xlane.f32.xlu0 %v1838
      %v1840 = vpop.xlane.xlu0 %1839
      %v1841 = vsel %vm645, %v1827, 0.0
      %1842 = vadd.xlane.f32.xlu0 %v1841
      %v1843 = vpop.xlane.xlu0 %1842
      %v1844 = vsel %vm645, %v1828, 0.0
      %1845 = vadd.xlane.f32.xlu0 %v1844
      %v1846 = vpop.xlane.xlu0 %1845
      %v1847 = vsel %vm645, %v1829, 0.0
      %1848 = vadd.xlane.f32.xlu0 %v1847
      %v1849 = vpop.xlane.xlu0 %1848
      %v1850 = vsel %vm645, %v1830, 0.0
      %1851 = vadd.xlane.f32.xlu0 %v1850
      %v1852 = vpop.xlane.xlu0 %1851
      %v1853 = vsel %vm645, %v1831, 0.0
      %1854 = vadd.xlane.f32.xlu0 %v1853
      %v1855 = vpop.xlane.xlu0 %1854
      %v1856 = vmul.f32 %v1834, %v1807
      %v1857 = vmul.f32 %v1837, %v1807
      %v1858 = vmul.f32 %v1840, %v1807
      %v1859 = vmul.f32 %v1843, %v1807
      %v1860 = vmul.f32 %v1846, %v1807
      %v1861 = vmul.f32 %v1849, %v1807
      %v1862 = vmul.f32 %v1852, %v1807
      %v1863 = vmul.f32 %v1855, %v1807
      %v1864 = vadd.f32 %v1856, 1e-05
      %v1865 = vadd.f32 %v1857, 1e-05
      %v1866 = vadd.f32 %v1858, 1e-05
      %v1867 = vadd.f32 %v1859, 1e-05
      %v1868 = vadd.f32 %v1860, 1e-05
      %v1869 = vadd.f32 %v1861, 1e-05
      %v1870 = vadd.f32 %v1862, 1e-05
      %v1871 = vadd.f32 %v1863, 1e-05
      %v1872 = vrsqrt.pop %v1864
      %v1873 = vmul.f32 %v1872, %v1864
      %v1874 = vmul.f32 %v1873, %v1872
      %v1875 = vmul.f32 0.5, %v1874
      %v1876 = vsub.f32 1.5, %v1875
      %v1877 = vmul.f32 %v1872, %v1876
      %vm1878 = vweird.f32 %v1864
      %vm1879 = vweird.f32 %v1872
      %vm1880 = vmor %vm1878, %vm1879
      %v1881 = vsel %vm1880, %v1872, %v1877
      %v1882 = vrsqrt.pop %v1865
      %v1883 = vmul.f32 %v1882, %v1865
      %v1884 = vmul.f32 %v1883, %v1882
      %v1885 = vmul.f32 0.5, %v1884
      %v1886 = vsub.f32 1.5, %v1885
      %v1887 = vmul.f32 %v1882, %v1886
      %vm1888 = vweird.f32 %v1865
      %vm1889 = vweird.f32 %v1882
      %vm1890 = vmor %vm1888, %vm1889
      %v1891 = vsel %vm1890, %v1882, %v1887
      %v1892 = vrsqrt.pop %v1866
      %v1893 = vmul.f32 %v1892, %v1866
      %v1894 = vmul.f32 %v1893, %v1892
      %v1895 = vmul.f32 0.5, %v1894
      %v1896 = vsub.f32 1.5, %v1895
      %v1897 = vmul.f32 %v1892, %v1896
      %vm1898 = vweird.f32 %v1866
      %vm1899 = vweird.f32 %v1892
      %vm1900 = vmor %vm1898, %vm1899
      %v1901 = vsel %vm1900, %v1892, %v1897
      %v1902 = vrsqrt.pop %v1867
      %v1903 = vmul.f32 %v1902, %v1867
      %v1904 = vmul.f32 %v1903, %v1902
      %v1905 = vmul.f32 0.5, %v1904
      %v1906 = vsub.f32 1.5, %v1905
      %v1907 = vmul.f32 %v1902, %v1906
      %vm1908 = vweird.f32 %v1867
      %vm1909 = vweird.f32 %v1902
      %vm1910 = vmor %vm1908, %vm1909
      %v1911 = vsel %vm1910, %v1902, %v1907
      %v1912 = vrsqrt.pop %v1868
      %v1913 = vmul.f32 %v1912, %v1868
      %v1914 = vmul.f32 %v1913, %v1912
      %v1915 = vmul.f32 0.5, %v1914
      %v1916 = vsub.f32 1.5, %v1915
      %v1917 = vmul.f32 %v1912, %v1916
      %vm1918 = vweird.f32 %v1868
      %vm1919 = vweird.f32 %v1912
      %vm1920 = vmor %vm1918, %vm1919
      %v1921 = vsel %vm1920, %v1912, %v1917
      %v1922 = vrsqrt.pop %v1869
      %v1923 = vmul.f32 %v1922, %v1869
      %v1924 = vmul.f32 %v1923, %v1922
      %v1925 = vmul.f32 0.5, %v1924
      %v1926 = vsub.f32 1.5, %v1925
      %v1927 = vmul.f32 %v1922, %v1926
      %vm1928 = vweird.f32 %v1869
      %vm1929 = vweird.f32 %v1922
      %vm1930 = vmor %vm1928, %vm1929
      %v1931 = vsel %vm1930, %v1922, %v1927
      %v1932 = vrsqrt.pop %v1870
      %v1933 = vmul.f32 %v1932, %v1870
      %v1934 = vmul.f32 %v1933, %v1932
      %v1935 = vmul.f32 0.5, %v1934
      %v1936 = vsub.f32 1.5, %v1935
      %v1937 = vmul.f32 %v1932, %v1936
      %vm1938 = vweird.f32 %v1870
      %vm1939 = vweird.f32 %v1932
      %vm1940 = vmor %vm1938, %vm1939
      %v1941 = vsel %vm1940, %v1932, %v1937
      %v1942 = vrsqrt.pop %v1871
      %v1943 = vmul.f32 %v1942, %v1871
      %v1944 = vmul.f32 %v1943, %v1942
      %v1945 = vmul.f32 0.5, %v1944
      %v1946 = vsub.f32 1.5, %v1945
      %v1947 = vmul.f32 %v1942, %v1946
      %vm1948 = vweird.f32 %v1871
      %vm1949 = vweird.f32 %v1942
      %vm1950 = vmor %vm1948, %vm1949
      %v1951 = vsel %vm1950, %v1942, %v1947
      %v1952 = vmul.f32 %v1816, %v1881
      %v1953 = vmul.f32 %v1817, %v1891
      %v1954 = vmul.f32 %v1818, %v1901
      %v1955 = vmul.f32 %v1819, %v1911
      %v1956 = vmul.f32 %v1820, %v1921
      %v1957 = vmul.f32 %v1821, %v1931
      %v1958 = vmul.f32 %v1822, %v1941
      %v1959 = vmul.f32 %v1823, %v1951
      %v1960 = vperm.slane %v615, 2
      %v1961 = vmul.f32 %v1952, %v1960
      %v1962 = vmul.f32 %v1953, %v1960
      %v1963 = vmul.f32 %v1954, %v1960
      %v1964 = vmul.f32 %v1955, %v1960
      %v1965 = vmul.f32 %v1956, %v1960
      %v1966 = vmul.f32 %v1957, %v1960
      %v1967 = vmul.f32 %v1958, %v1960
      %v1968 = vmul.f32 %v1959, %v1960
      %v1969 = vperm.slane %v615, 3
      %v1970 = vadd.f32 %v1961, %v1969
      %v1971 = vadd.f32 %v1962, %v1969
      %v1972 = vadd.f32 %v1963, %v1969
      %v1973 = vadd.f32 %v1964, %v1969
      %v1974 = vadd.f32 %v1965, %v1969
      %v1975 = vadd.f32 %v1966, %v1969
      %v1976 = vadd.f32 %v1967, %v1969
      %v1977 = vadd.f32 %v1968, %v1969
      %v1978 = vpack.c.bf16 %v1971, %v1970
      %v1979 = vpack.c.bf16 %v1973, %v1972
      %v1980 = vpack.c.bf16 %v1975, %v1974
      %v1981 = vpack.c.bf16 %v1977, %v1976
      %v1982 = vld [vmem:[%s482] sm:$0xf]
      %v1983 = vld [vmem:[%s482 + $0x4] sm:$0xf]
      %v1984 = vld [vmem:[%s482 + $0x8] sm:$0xf]
      %v1985 = vld [vmem:[%s482 + $0xc] sm:$0xf]
      %v1986 = vperm.slane %v615, 4
      %v1991 = vunpack.c.l.b16 %v1982
      %v1992 = vunpack.c.l.b16 %v1983
      %v1993 = vunpack.c.l.b16 %v1984
      %v1994 = vunpack.c.l.b16 %v1985
      %v1995 = vpack.c.b16 %v1992, %v1991
      %v1996 = vpack.c.b16 %v1994, %v1993
      %v2000 = vsel %vm645, %v1978, 0
      %v2003 = vsel %vm645, %v1979, 0
      %v2006 = vsel %vm645, %v1980, 0
      %v2009 = vsel %vm645, %v1981, 0
      %2011 = vmatpush.bf16.msra.mxu0 0
      %2012 = vmatpush.bf16.msra.mxu0 0
      %2013 = vmatpush.bf16.msra.mxu0 0
      %2014 = vmatpush.bf16.msra.mxu0 0
      %2015 = vmatpush.bf16.msra.mxu0 0
      %2016 = vmatpush.bf16.msra.mxu0 0
      %2017 = vmatpush.bf16.msra.mxu0 %v1996
      %2018 = vmatpush.bf16.msra.mxu0 %v1995
      %2019 = vmatmul.bf16.gmra.mxu0 %v2000
      %v2020 = vpop.f32.mrf.mxu0
      %v2021 = vadd.f32 %v1986, %v2020
      %v2022 = vpop.f32.mrf.mxu0
      %v2023 = vadd.f32 %v1986, %v2022
      %2024 = vmatmul.bf16.gmra.mxu0 %v2003
      %v2025 = vpop.f32.mrf.mxu0
      %v2026 = vadd.f32 %v1986, %v2025
      %v2027 = vpop.f32.mrf.mxu0
      %v2028 = vadd.f32 %v1986, %v2027
      %2029 = vmatmul.bf16.gmra.mxu0 %v2006
      %v2030 = vpop.f32.mrf.mxu0
      %v2031 = vadd.f32 %v1986, %v2030
      %v2032 = vpop.f32.mrf.mxu0
      %v2033 = vadd.f32 %v1986, %v2032
      %2034 = vmatmul.bf16.gmra.mxu0 %v2009
      %v2035 = vpop.f32.mrf.mxu0
      %v2036 = vadd.f32 %v1986, %v2035
      %v2037 = vpop.f32.mrf.mxu0
      %v2038 = vadd.f32 %v1986, %v2037
      %2039 = vdwg.mxu0
      %v2040 = vmul.f32 %v2021, 0.5
      %v2041 = vmul.f32 %v2023, 0.5
      %v2042 = vmul.f32 %v2026, 0.5
      %v2043 = vmul.f32 %v2028, 0.5
      %v2044 = vmul.f32 %v2031, 0.5
      %v2045 = vmul.f32 %v2033, 0.5
      %v2046 = vmul.f32 %v2036, 0.5
      %v2047 = vmul.f32 %v2038, 0.5
      %v2048 = vmul.f32 %v2021, 0.044715
      %v2049 = vmul.f32 %v2023, 0.044715
      %v2050 = vmul.f32 %v2026, 0.044715
      %v2051 = vmul.f32 %v2028, 0.044715
      %v2052 = vmul.f32 %v2031, 0.044715
      %v2053 = vmul.f32 %v2033, 0.044715
      %v2054 = vmul.f32 %v2036, 0.044715
      %v2055 = vmul.f32 %v2038, 0.044715
      %v2056 = vmul.f32 %v2048, %v2021
      %v2057 = vmul.f32 %v2049, %v2023
      %v2058 = vmul.f32 %v2050, %v2026
      %v2059 = vmul.f32 %v2051, %v2028
      %v2060 = vmul.f32 %v2052, %v2031
      %v2061 = vmul.f32 %v2053, %v2033
      %v2062 = vmul.f32 %v2054, %v2036
      %v2063 = vmul.f32 %v2055, %v2038
      %v2064 = vmul.f32 %v2056, %v2021
      %v2065 = vmul.f32 %v2057, %v2023
      %v2066 = vmul.f32 %v2058, %v2026
      %v2067 = vmul.f32 %v2059, %v2028
      %v2068 = vmul.f32 %v2060, %v2031
      %v2069 = vmul.f32 %v2061, %v2033
      %v2070 = vmul.f32 %v2062, %v2036
      %v2071 = vmul.f32 %v2063, %v2038
      %v2072 = vadd.f32 %v2021, %v2064
      %v2073 = vadd.f32 %v2023, %v2065
      %v2074 = vadd.f32 %v2026, %v2066
      %v2075 = vadd.f32 %v2028, %v2067
      %v2076 = vadd.f32 %v2031, %v2068
      %v2077 = vadd.f32 %v2033, %v2069
      %v2078 = vadd.f32 %v2036, %v2070
      %v2079 = vadd.f32 %v2038, %v2071
      %v2080 = vmul.f32 %v2072, 0.7978846
      %v2081 = vmul.f32 %v2073, 0.7978846
      %v2082 = vmul.f32 %v2074, 0.7978846
      %v2083 = vmul.f32 %v2075, 0.7978846
      %v2084 = vmul.f32 %v2076, 0.7978846
      %v2085 = vmul.f32 %v2077, 0.7978846
      %v2086 = vmul.f32 %v2078, 0.7978846
      %v2087 = vmul.f32 %v2079, 0.7978846
      %v2088 = vtanh.pop %v2080
      %v2089 = vtanh.pop %v2081
      %v2090 = vtanh.pop %v2082
      %v2091 = vtanh.pop %v2083
      %v2092 = vtanh.pop %v2084
      %v2093 = vtanh.pop %v2085
      %v2094 = vtanh.pop %v2086
      %v2095 = vtanh.pop %v2087
      %v2096 = vadd.f32 %v2088, 1.0
      %v2097 = vadd.f32 %v2089, 1.0
      %v2098 = vadd.f32 %v2090, 1.0
      %v2099 = vadd.f32 %v2091, 1.0
      %v2100 = vadd.f32 %v2092, 1.0
      %v2101 = vadd.f32 %v2093, 1.0
      %v2102 = vadd.f32 %v2094, 1.0
      %v2103 = vadd.f32 %v2095, 1.0
      %v2104 = vmul.f32 %v2040, %v2096
      %v2105 = vmul.f32 %v2041, %v2097
      %v2106 = vmul.f32 %v2042, %v2098
      %v2107 = vmul.f32 %v2043, %v2099
      %v2108 = vmul.f32 %v2044, %v2100
      %v2109 = vmul.f32 %v2045, %v2101
      %v2110 = vmul.f32 %v2046, %v2102
      %v2111 = vmul.f32 %v2047, %v2103
      %v2112 = vpack.c.bf16 %v2105, %v2104
      %v2113 = vpack.c.bf16 %v2107, %v2106
      %v2114 = vpack.c.bf16 %v2109, %v2108
      %v2115 = vpack.c.bf16 %v2111, %v2110
      %v2116 = vld [vmem:[%s487] sm:$0xf]
      %v2117 = vld [vmem:[%s487 + $0x4] sm:$0xf]
      %v2118 = vld [vmem:[%s487 + $0x8] sm:$0xf]
      %v2119 = vld [vmem:[%s487 + $0xc] sm:$0xf]
      %v2120 = vld [vmem:[%s487 + $0x10] sm:$0xf]
      %v2121 = vld [vmem:[%s487 + $0x14] sm:$0xf]
      %v2122 = vld [vmem:[%s487 + $0x18] sm:$0xf]
      %v2123 = vld [vmem:[%s487 + $0x1c] sm:$0xf]
      %v2124 = vld [vmem:[%s487 + $0x20] sm:$0xf]
      %v2125 = vld [vmem:[%s487 + $0x24] sm:$0xf]
      %v2126 = vld [vmem:[%s487 + $0x28] sm:$0xf]
      %v2127 = vld [vmem:[%s487 + $0x2c] sm:$0xf]
      %v2128 = vld [vmem:[%s487 + $0x30] sm:$0xf]
      %v2129 = vld [vmem:[%s487 + $0x34] sm:$0xf]
      %v2130 = vld [vmem:[%s487 + $0x38] sm:$0xf]
      %v2131 = vld [vmem:[%s487 + $0x3c] sm:$0xf]
      %v2132 = vperm.slane %v615, 5
      %v2149 = vunpack.c.l.b16 %v2116
      %v2150 = vunpack.c.l.b16 %v2117
      %v2151 = vunpack.c.l.b16 %v2118
      %v2152 = vunpack.c.l.b16 %v2119
      %v2153 = vunpack.c.l.b16 %v2120
      %v2154 = vunpack.c.l.b16 %v2121
      %v2155 = vunpack.c.l.b16 %v2122
      %v2156 = vunpack.c.l.b16 %v2123
      %v2157 = vunpack.c.l.b16 %v2124
      %v2158 = vunpack.c.l.b16 %v2125
      %v2159 = vunpack.c.l.b16 %v2126
      %v2160 = vunpack.c.l.b16 %v2127
      %v2161 = vunpack.c.l.b16 %v2128
      %v2162 = vunpack.c.l.b16 %v2129
      %v2163 = vunpack.c.l.b16 %v2130
      %v2164 = vunpack.c.l.b16 %v2131
      %v2165 = vpack.c.b16 %v2150, %v2149
      %v2166 = vpack.c.b16 %v2152, %v2151
      %v2167 = vpack.c.b16 %v2154, %v2153
      %v2168 = vpack.c.b16 %v2156, %v2155
      %v2169 = vpack.c.b16 %v2158, %v2157
      %v2170 = vpack.c.b16 %v2160, %v2159
      %v2171 = vpack.c.b16 %v2162, %v2161
      %v2172 = vpack.c.b16 %v2164, %v2163
      %2181 = vmatpush.bf16.msra.mxu0 %v2172
      %2182 = vmatpush.bf16.msra.mxu0 %v2171
      %2183 = vmatpush.bf16.msra.mxu0 %v2170
      %2184 = vmatpush.bf16.msra.mxu0 %v2169
      %2185 = vmatpush.bf16.msra.mxu0 %v2168
      %2186 = vmatpush.bf16.msra.mxu0 %v2167
      %2187 = vmatpush.bf16.msra.mxu0 %v2166
      %2188 = vmatpush.bf16.msra.mxu0 %v2165
      %2189 = vmatmul.bf16.gmra.mxu0 %v2112
      %v2190 = vpop.f32.mrf.mxu0
      %v2191 = vadd.f32 %v2132, %v2190
      %v2192 = vpop.f32.mrf.mxu0
      %v2193 = vadd.f32 %v2132, %v2192
      %2194 = vmatmul.bf16.gmra.mxu0 %v2113
      %v2195 = vpop.f32.mrf.mxu0
      %v2196 = vadd.f32 %v2132, %v2195
      %v2197 = vpop.f32.mrf.mxu0
      %v2198 = vadd.f32 %v2132, %v2197
      %2199 = vmatmul.bf16.gmra.mxu0 %v2114
      %v2200 = vpop.f32.mrf.mxu0
      %v2201 = vadd.f32 %v2132, %v2200
      %v2202 = vpop.f32.mrf.mxu0
      %v2203 = vadd.f32 %v2132, %v2202
      %2204 = vmatmul.bf16.gmra.mxu0 %v2115
      %v2205 = vpop.f32.mrf.mxu0
      %v2206 = vadd.f32 %v2132, %v2205
      %v2207 = vpop.f32.mrf.mxu0
      %v2208 = vadd.f32 %v2132, %v2207
      %2209 = vdwg.mxu0
      %v2210 = vadd.f32 %v1970, %v2191
      %v2211 = vadd.f32 %v1971, %v2193
      %v2212 = vadd.f32 %v1972, %v2196
      %v2213 = vadd.f32 %v1973, %v2198
      %v2214 = vadd.f32 %v1974, %v2201
      %v2215 = vadd.f32 %v1975, %v2203
      %v2216 = vadd.f32 %v1976, %v2206
      %v2217 = vadd.f32 %v1977, %v2208
      %v2218 = vsel %vm645, %v2210, 0.0
      %2219 = vadd.xlane.f32.xlu0 %v2218
      %v2220 = vpop.xlane.xlu0 %2219
      %v2221 = vsel %vm645, %v2211, 0.0
      %2222 = vadd.xlane.f32.xlu0 %v2221
      %v2223 = vpop.xlane.xlu0 %2222
      %v2224 = vsel %vm645, %v2212, 0.0
      %2225 = vadd.xlane.f32.xlu0 %v2224
      %v2226 = vpop.xlane.xlu0 %2225
      %v2227 = vsel %vm645, %v2213, 0.0
      %2228 = vadd.xlane.f32.xlu0 %v2227
      %v2229 = vpop.xlane.xlu0 %2228
      %v2230 = vsel %vm645, %v2214, 0.0
      %2231 = vadd.xlane.f32.xlu0 %v2230
      %v2232 = vpop.xlane.xlu0 %2231
      %v2233 = vsel %vm645, %v2215, 0.0
      %2234 = vadd.xlane.f32.xlu0 %v2233
      %v2235 = vpop.xlane.xlu0 %2234
      %v2236 = vsel %vm645, %v2216, 0.0
      %2237 = vadd.xlane.f32.xlu0 %v2236
      %v2238 = vpop.xlane.xlu0 %2237
      %v2239 = vsel %vm645, %v2217, 0.0
      %2240 = vadd.xlane.f32.xlu0 %v2239
      %v2241 = vpop.xlane.xlu0 %2240
      %v2242 = vmul.f32 %v2220, %v1807
      %v2243 = vmul.f32 %v2223, %v1807
      %v2244 = vmul.f32 %v2226, %v1807
      %v2245 = vmul.f32 %v2229, %v1807
      %v2246 = vmul.f32 %v2232, %v1807
      %v2247 = vmul.f32 %v2235, %v1807
      %v2248 = vmul.f32 %v2238, %v1807
      %v2249 = vmul.f32 %v2241, %v1807
      %v2250 = vsub.f32 %v2210, %v2242
      %v2251 = vsub.f32 %v2211, %v2243
      %v2252 = vsub.f32 %v2212, %v2244
      %v2253 = vsub.f32 %v2213, %v2245
      %v2254 = vsub.f32 %v2214, %v2246
      %v2255 = vsub.f32 %v2215, %v2247
      %v2256 = vsub.f32 %v2216, %v2248
      %v2257 = vsub.f32 %v2217, %v2249
      %v2258 = vmul.f32 %v2250, %v2250
      %v2259 = vmul.f32 %v2251, %v2251
      %v2260 = vmul.f32 %v2252, %v2252
      %v2261 = vmul.f32 %v2253, %v2253
      %v2262 = vmul.f32 %v2254, %v2254
      %v2263 = vmul.f32 %v2255, %v2255
      %v2264 = vmul.f32 %v2256, %v2256
      %v2265 = vmul.f32 %v2257, %v2257
      %v2266 = vsel %vm645, %v2258, 0.0
      %2267 = vadd.xlane.f32.xlu0 %v2266
      %v2268 = vpop.xlane.xlu0 %2267
      %v2269 = vsel %vm645, %v2259, 0.0
      %2270 = vadd.xlane.f32.xlu0 %v2269
      %v2271 = vpop.xlane.xlu0 %2270
      %v2272 = vsel %vm645, %v2260, 0.0
      %2273 = vadd.xlane.f32.xlu0 %v2272
      %v2274 = vpop.xlane.xlu0 %2273
      %v2275 = vsel %vm645, %v2261, 0.0
      %2276 = vadd.xlane.f32.xlu0 %v2275
      %v2277 = vpop.xlane.xlu0 %2276
      %v2278 = vsel %vm645, %v2262, 0.0
      %2279 = vadd.xlane.f32.xlu0 %v2278
      %v2280 = vpop.xlane.xlu0 %2279
      %v2281 = vsel %vm645, %v2263, 0.0
      %2282 = vadd.xlane.f32.xlu0 %v2281
      %v2283 = vpop.xlane.xlu0 %2282
      %v2284 = vsel %vm645, %v2264, 0.0
      %2285 = vadd.xlane.f32.xlu0 %v2284
      %v2286 = vpop.xlane.xlu0 %2285
      %v2287 = vsel %vm645, %v2265, 0.0
      %2288 = vadd.xlane.f32.xlu0 %v2287
      %v2289 = vpop.xlane.xlu0 %2288
      %v2290 = vmul.f32 %v2268, %v1807
      %v2291 = vmul.f32 %v2271, %v1807
      %v2292 = vmul.f32 %v2274, %v1807
      %v2293 = vmul.f32 %v2277, %v1807
      %v2294 = vmul.f32 %v2280, %v1807
      %v2295 = vmul.f32 %v2283, %v1807
      %v2296 = vmul.f32 %v2286, %v1807
      %v2297 = vmul.f32 %v2289, %v1807
      %v2298 = vadd.f32 %v2290, 1e-05
      %v2299 = vadd.f32 %v2291, 1e-05
      %v2300 = vadd.f32 %v2292, 1e-05
      %v2301 = vadd.f32 %v2293, 1e-05
      %v2302 = vadd.f32 %v2294, 1e-05
      %v2303 = vadd.f32 %v2295, 1e-05
      %v2304 = vadd.f32 %v2296, 1e-05
      %v2305 = vadd.f32 %v2297, 1e-05
      %v2306 = vrsqrt.pop %v2298
      %v2307 = vmul.f32 %v2306, %v2298
      %v2308 = vmul.f32 %v2307, %v2306
      %v2309 = vmul.f32 0.5, %v2308
      %v2310 = vsub.f32 1.5, %v2309
      %v2311 = vmul.f32 %v2306, %v2310
      %vm2312 = vweird.f32 %v2298
      %vm2313 = vweird.f32 %v2306
      %vm2314 = vmor %vm2312, %vm2313
      %v2315 = vsel %vm2314, %v2306, %v2311
      %v2316 = vrsqrt.pop %v2299
      %v2317 = vmul.f32 %v2316, %v2299
      %v2318 = vmul.f32 %v2317, %v2316
      %v2319 = vmul.f32 0.5, %v2318
      %v2320 = vsub.f32 1.5, %v2319
      %v2321 = vmul.f32 %v2316, %v2320
      %vm2322 = vweird.f32 %v2299
      %vm2323 = vweird.f32 %v2316
      %vm2324 = vmor %vm2322, %vm2323
      %v2325 = vsel %vm2324, %v2316, %v2321
      %v2326 = vrsqrt.pop %v2300
      %v2327 = vmul.f32 %v2326, %v2300
      %v2328 = vmul.f32 %v2327, %v2326
      %v2329 = vmul.f32 0.5, %v2328
      %v2330 = vsub.f32 1.5, %v2329
      %v2331 = vmul.f32 %v2326, %v2330
      %vm2332 = vweird.f32 %v2300
      %vm2333 = vweird.f32 %v2326
      %vm2334 = vmor %vm2332, %vm2333
      %v2335 = vsel %vm2334, %v2326, %v2331
      %v2336 = vrsqrt.pop %v2301
      %v2337 = vmul.f32 %v2336, %v2301
      %v2338 = vmul.f32 %v2337, %v2336
      %v2339 = vmul.f32 0.5, %v2338
      %v2340 = vsub.f32 1.5, %v2339
      %v2341 = vmul.f32 %v2336, %v2340
      %vm2342 = vweird.f32 %v2301
      %vm2343 = vweird.f32 %v2336
      %vm2344 = vmor %vm2342, %vm2343
      %v2345 = vsel %vm2344, %v2336, %v2341
      %v2346 = vrsqrt.pop %v2302
      %v2347 = vmul.f32 %v2346, %v2302
      %v2348 = vmul.f32 %v2347, %v2346
      %v2349 = vmul.f32 0.5, %v2348
      %v2350 = vsub.f32 1.5, %v2349
      %v2351 = vmul.f32 %v2346, %v2350
      %vm2352 = vweird.f32 %v2302
      %vm2353 = vweird.f32 %v2346
      %vm2354 = vmor %vm2352, %vm2353
      %v2355 = vsel %vm2354, %v2346, %v2351
      %v2356 = vrsqrt.pop %v2303
      %v2357 = vmul.f32 %v2356, %v2303
      %v2358 = vmul.f32 %v2357, %v2356
      %v2359 = vmul.f32 0.5, %v2358
      %v2360 = vsub.f32 1.5, %v2359
      %v2361 = vmul.f32 %v2356, %v2360
      %vm2362 = vweird.f32 %v2303
      %vm2363 = vweird.f32 %v2356
      %vm2364 = vmor %vm2362, %vm2363
      %v2365 = vsel %vm2364, %v2356, %v2361
      %v2366 = vrsqrt.pop %v2304
      %v2367 = vmul.f32 %v2366, %v2304
      %v2368 = vmul.f32 %v2367, %v2366
      %v2369 = vmul.f32 0.5, %v2368
      %v2370 = vsub.f32 1.5, %v2369
      %v2371 = vmul.f32 %v2366, %v2370
      %vm2372 = vweird.f32 %v2304
      %vm2373 = vweird.f32 %v2366
      %vm2374 = vmor %vm2372, %vm2373
      %v2375 = vsel %vm2374, %v2366, %v2371
      %v2376 = vrsqrt.pop %v2305
      %v2377 = vmul.f32 %v2376, %v2305
      %v2378 = vmul.f32 %v2377, %v2376
      %v2379 = vmul.f32 0.5, %v2378
      %v2380 = vsub.f32 1.5, %v2379
      %v2381 = vmul.f32 %v2376, %v2380
      %vm2382 = vweird.f32 %v2305
      %vm2383 = vweird.f32 %v2376
      %vm2384 = vmor %vm2382, %vm2383
      %v2385 = vsel %vm2384, %v2376, %v2381
      %v2386 = vmul.f32 %v2250, %v2315
      %v2387 = vmul.f32 %v2251, %v2325
      %v2388 = vmul.f32 %v2252, %v2335
      %v2389 = vmul.f32 %v2253, %v2345
      %v2390 = vmul.f32 %v2254, %v2355
      %v2391 = vmul.f32 %v2255, %v2365
      %v2392 = vmul.f32 %v2256, %v2375
      %v2393 = vmul.f32 %v2257, %v2385
      %v2394 = vperm.slane %v615, 6
      %v2395 = vmul.f32 %v2386, %v2394
      %v2396 = vmul.f32 %v2387, %v2394
      %v2397 = vmul.f32 %v2388, %v2394
      %v2398 = vmul.f32 %v2389, %v2394
      %v2399 = vmul.f32 %v2390, %v2394
      %v2400 = vmul.f32 %v2391, %v2394
      %v2401 = vmul.f32 %v2392, %v2394
      %v2402 = vmul.f32 %v2393, %v2394
      %v2403 = vperm.slane %v615, 7
      %v2404 = vadd.f32 %v2395, %v2403
      %v2405 = vadd.f32 %v2396, %v2403
      %v2406 = vadd.f32 %v2397, %v2403
      %v2407 = vadd.f32 %v2398, %v2403
      %v2408 = vadd.f32 %v2399, %v2403
      %v2409 = vadd.f32 %v2400, %v2403
      %v2410 = vadd.f32 %v2401, %v2403
      %v2411 = vadd.f32 %v2402, %v2403
      %2412 = vst.msk [vmem:[#allocation2] sm:$0xff] %vm645, %v2404
      %2413 = vst.msk [vmem:[#allocation2 + $0x8] sm:$0xff] %vm645, %v2405
      %2414 = vst.msk [vmem:[#allocation2 + $0x10] sm:$0xff] %vm645, %v2406
      %2415 = vst.msk [vmem:[#allocation2 + $0x18] sm:$0xff] %vm645, %v2407
      %2416 = vst.msk [vmem:[#allocation2 + $0x20] sm:$0xff] %vm645, %v2408
      %2417 = vst.msk [vmem:[#allocation2 + $0x28] sm:$0xff] %vm645, %v2409
      %2418 = vst.msk [vmem:[#allocation2 + $0x30] sm:$0xff] %vm645, %v2410
      %2419 = vst.msk [vmem:[#allocation2 + $0x38] sm:$0xff] %vm645, %v2411
      %p2420 = scmp.eq.s32.totalorder %s27, 1
      // Predicated region
      $region69: #{_lambda_.1} parent=63 // pred_check
        %p2421 = pneg %p2420
      $region70: #{_lambda_.1} parent=63 // pred_check_branch
        %2423 = sbr.rel (%p2421) target = $region72
      $region71: #{_lambda_.1} parent=63 // pred_region
        %v2424 = vld [vmem:[#allocation2] sm:$0x1]
        %v2425 = vld [vmem:[#allocation2 + $0x8] sm:$0x1]
        %v2426 = vld [vmem:[#allocation2 + $0x10] sm:$0x1]
        %v2427 = vld [vmem:[#allocation2 + $0x18] sm:$0x1]
        %v2428 = vld [vmem:[#allocation2 + $0x20] sm:$0x1]
        %v2429 = vld [vmem:[#allocation2 + $0x28] sm:$0x1]
        %v2430 = vld [vmem:[#allocation2 + $0x30] sm:$0x1]
        %v2431 = vld [vmem:[#allocation2 + $0x38] sm:$0x1]
        %v2432 = vpack.c.bf16 %v2424, %v2424
        %v2433 = vpack.c.bf16 %v2425, %v2425
        %v2434 = vpack.c.bf16 %v2426, %v2426
        %v2435 = vpack.c.bf16 %v2427, %v2427
        %v2436 = vpack.c.bf16 %v2428, %v2428
        %v2437 = vpack.c.bf16 %v2429, %v2429
        %v2438 = vpack.c.bf16 %v2430, %v2430
        %v2439 = vpack.c.bf16 %v2431, %v2431
        %v2440 = vld [vmem:[%s9] sm:$0xf]
        %v2441 = vld [vmem:[%s9 + $0x4] sm:$0xf]
        %v2442 = vld [vmem:[%s9 + $0x8] sm:$0xf]
        %v2443 = vld [vmem:[%s9 + $0xc] sm:$0xf]
        %v2444 = vld [vmem:[#allocation2 + $0x1] sm:$0x1]
        %v2445 = vld [vmem:[#allocation2 + $0x9] sm:$0x1]
        %v2446 = vld [vmem:[#allocation2 + $0x11] sm:$0x1]
        %v2447 = vld [vmem:[#allocation2 + $0x19] sm:$0x1]
        %v2448 = vld [vmem:[#allocation2 + $0x21] sm:$0x1]
        %v2449 = vld [vmem:[#allocation2 + $0x29] sm:$0x1]
        %v2450 = vld [vmem:[#allocation2 + $0x31] sm:$0x1]
        %v2451 = vld [vmem:[#allocation2 + $0x39] sm:$0x1]
        %v2452 = vpack.c.bf16 %v2444, %v2444
        %v2453 = vpack.c.bf16 %v2445, %v2445
        %v2454 = vpack.c.bf16 %v2446, %v2446
        %v2455 = vpack.c.bf16 %v2447, %v2447
        %v2456 = vpack.c.bf16 %v2448, %v2448
        %v2457 = vpack.c.bf16 %v2449, %v2449
        %v2458 = vpack.c.bf16 %v2450, %v2450
        %v2459 = vpack.c.bf16 %v2451, %v2451
        %s2460 = scalar_lea.vmem %s9, 16
        %v2461 = vld [vmem:[%s2460] sm:$0xf]
        %v2462 = vld [vmem:[%s2460 + $0x4] sm:$0xf]
        %v2463 = vld [vmem:[%s2460 + $0x8] sm:$0xf]
        %v2464 = vld [vmem:[%s2460 + $0xc] sm:$0xf]
        %v2473 = vunpack.c.l.b16 %v2452
        %v2474 = vunpack.c.l.b16 %v2453
        %v2475 = vunpack.c.l.b16 %v2454
        %v2476 = vunpack.c.l.b16 %v2455
        %v2477 = vunpack.c.l.b16 %v2456
        %v2478 = vunpack.c.l.b16 %v2457
        %v2479 = vunpack.c.l.b16 %v2458
        %v2480 = vunpack.c.l.b16 %v2459
        %v2481 = vrot.slane %v2474, 7
        %vm2482 = vcmask 1041409
        %v2483 = vsel %vm2482, %v2481, %v2473
        %v2484 = vrot.slane %v2475, 6
        %vm2485 = vcmask 1042434
        %v2486 = vsel %vm2485, %v2484, %v2483
        %v2487 = vrot.slane %v2476, 5
        %vm2488 = vcmask 1043459
        %v2489 = vsel %vm2488, %v2487, %v2486
        %v2490 = vrot.slane %v2477, 4
        %vm2491 = vcmask 1044484
        %v2492 = vsel %vm2491, %v2490, %v2489
        %v2493 = vrot.slane %v2478, 3
        %vm2494 = vcmask 1045509
        %v2495 = vsel %vm2494, %v2493, %v2492
        %v2496 = vrot.slane %v2479, 2
        %vm2497 = vcmask 1046534
        %v2498 = vsel %vm2497, %v2496, %v2495
        %v2499 = vrot.slane %v2480, 1
        %vm2500 = vcmask 1047559
        %v2501 = vsel %vm2500, %v2499, %v2498
        %v2502 = vpack.c.b16 %v2501, %v2501
        %v2507 = vunpack.c.l.b16 %v2461
        %v2508 = vunpack.c.l.b16 %v2462
        %v2509 = vunpack.c.l.b16 %v2463
        %v2510 = vunpack.c.l.b16 %v2464
        %v2511 = vpack.c.b16 %v2508, %v2507
        %v2512 = vpack.c.b16 %v2510, %v2509
        %v2516 = vsel %vm645, %v2502, 0
        %2518 = vmatpush.bf16.msra.mxu0 0
        %2519 = vmatpush.bf16.msra.mxu0 0
        %2520 = vmatpush.bf16.msra.mxu0 0
        %2521 = vmatpush.bf16.msra.mxu0 0
        %2522 = vmatpush.bf16.msra.mxu0 0
        %2523 = vmatpush.bf16.msra.mxu0 0
        %2524 = vmatpush.bf16.msra.mxu0 %v2512
        %2525 = vmatpush.bf16.msra.mxu0 %v2511
        %2526 = vmatmul.bf16.gmra.mxu0 %v2516
        %v2527 = vpop.f32.mrf.mxu0
        %v2528 = vadd.f32 0.0, %v2527
        %v2529 = vpop.f32.mrf.mxu0
        %2530 = vdwg.mxu0
        %v2539 = vunpack.c.l.b16 %v2432
        %v2540 = vunpack.c.l.b16 %v2433
        %v2541 = vunpack.c.l.b16 %v2434
        %v2542 = vunpack.c.l.b16 %v2435
        %v2543 = vunpack.c.l.b16 %v2436
        %v2544 = vunpack.c.l.b16 %v2437
        %v2545 = vunpack.c.l.b16 %v2438
        %v2546 = vunpack.c.l.b16 %v2439
        %v2547 = vrot.slane %v2540, 7
        %v2548 = vsel %vm2482, %v2547, %v2539
        %v2549 = vrot.slane %v2541, 6
        %v2550 = vsel %vm2485, %v2549, %v2548
        %v2551 = vrot.slane %v2542, 5
        %v2552 = vsel %vm2488, %v2551, %v2550
        %v2553 = vrot.slane %v2543, 4
        %v2554 = vsel %vm2491, %v2553, %v2552
        %v2555 = vrot.slane %v2544, 3
        %v2556 = vsel %vm2494, %v2555, %v2554
        %v2557 = vrot.slane %v2545, 2
        %v2558 = vsel %vm2497, %v2557, %v2556
        %v2559 = vrot.slane %v2546, 1
        %v2560 = vsel %vm2500, %v2559, %v2558
        %v2561 = vpack.c.b16 %v2560, %v2560
        %v2566 = vunpack.c.l.b16 %v2440
        %v2567 = vunpack.c.l.b16 %v2441
        %v2568 = vunpack.c.l.b16 %v2442
        %v2569 = vunpack.c.l.b16 %v2443
        %v2570 = vpack.c.b16 %v2567, %v2566
        %v2571 = vpack.c.b16 %v2569, %v2568
        %v2575 = vsel %vm645, %v2561, 0
        %2577 = vmatpush.bf16.msra.mxu0 0
        %2578 = vmatpush.bf16.msra.mxu0 0
        %2579 = vmatpush.bf16.msra.mxu0 0
        %2580 = vmatpush.bf16.msra.mxu0 0
        %2581 = vmatpush.bf16.msra.mxu0 0
        %2582 = vmatpush.bf16.msra.mxu0 0
        %2583 = vmatpush.bf16.msra.mxu0 %v2571
        %2584 = vmatpush.bf16.msra.mxu0 %v2570
        %2585 = vmatmul.bf16.gmra.mxu0 %v2575
        %v2586 = vpop.f32.mrf.mxu0
        %v2587 = vadd.f32 %v2528, %v2586
        %v2588 = vpop.f32.mrf.mxu0
        %2589 = vdwg.mxu0
        %v2590 = vld [vmem:[#allocation2 + $0x2] sm:$0x1]
        %v2591 = vld [vmem:[#allocation2 + $0xa] sm:$0x1]
        %v2592 = vld [vmem:[#allocation2 + $0x12] sm:$0x1]
        %v2593 = vld [vmem:[#allocation2 + $0x1a] sm:$0x1]
        %v2594 = vld [vmem:[#allocation2 + $0x22] sm:$0x1]
        %v2595 = vld [vmem:[#allocation2 + $0x2a] sm:$0x1]
        %v2596 = vld [vmem:[#allocation2 + $0x32] sm:$0x1]
        %v2597 = vld [vmem:[#allocation2 + $0x3a] sm:$0x1]
        %v2598 = vpack.c.bf16 %v2590, %v2590
        %v2599 = vpack.c.bf16 %v2591, %v2591
        %v2600 = vpack.c.bf16 %v2592, %v2592
        %v2601 = vpack.c.bf16 %v2593, %v2593
        %v2602 = vpack.c.bf16 %v2594, %v2594
        %v2603 = vpack.c.bf16 %v2595, %v2595
        %v2604 = vpack.c.bf16 %v2596, %v2596
        %v2605 = vpack.c.bf16 %v2597, %v2597
        %s2606 = scalar_lea.vmem %s9, 32
        %v2607 = vld [vmem:[%s2606] sm:$0xf]
        %v2608 = vld [vmem:[%s2606 + $0x4] sm:$0xf]
        %v2609 = vld [vmem:[%s2606 + $0x8] sm:$0xf]
        %v2610 = vld [vmem:[%s2606 + $0xc] sm:$0xf]
        %v2619 = vunpack.c.l.b16 %v2598
        %v2620 = vunpack.c.l.b16 %v2599
        %v2621 = vunpack.c.l.b16 %v2600
        %v2622 = vunpack.c.l.b16 %v2601
        %v2623 = vunpack.c.l.b16 %v2602
        %v2624 = vunpack.c.l.b16 %v2603
        %v2625 = vunpack.c.l.b16 %v2604
        %v2626 = vunpack.c.l.b16 %v2605
        %v2627 = vrot.slane %v2620, 7
        %v2628 = vsel %vm2482, %v2627, %v2619
        %v2629 = vrot.slane %v2621, 6
        %v2630 = vsel %vm2485, %v2629, %v2628
        %v2631 = vrot.slane %v2622, 5
        %v2632 = vsel %vm2488, %v2631, %v2630
        %v2633 = vrot.slane %v2623, 4
        %v2634 = vsel %vm2491, %v2633, %v2632
        %v2635 = vrot.slane %v2624, 3
        %v2636 = vsel %vm2494, %v2635, %v2634
        %v2637 = vrot.slane %v2625, 2
        %v2638 = vsel %vm2497, %v2637, %v2636
        %v2639 = vrot.slane %v2626, 1
        %v2640 = vsel %vm2500, %v2639, %v2638
        %v2641 = vpack.c.b16 %v2640, %v2640
        %v2646 = vunpack.c.l.b16 %v2607
        %v2647 = vunpack.c.l.b16 %v2608
        %v2648 = vunpack.c.l.b16 %v2609
        %v2649 = vunpack.c.l.b16 %v2610
        %v2650 = vpack.c.b16 %v2647, %v2646
        %v2651 = vpack.c.b16 %v2649, %v2648
        %v2655 = vsel %vm645, %v2641, 0
        %2657 = vmatpush.bf16.msra.mxu0 0
        %2658 = vmatpush.bf16.msra.mxu0 0
        %2659 = vmatpush.bf16.msra.mxu0 0
        %2660 = vmatpush.bf16.msra.mxu0 0
        %2661 = vmatpush.bf16.msra.mxu0 0
        %2662 = vmatpush.bf16.msra.mxu0 0
        %2663 = vmatpush.bf16.msra.mxu0 %v2651
        %2664 = vmatpush.bf16.msra.mxu0 %v2650
        %2665 = vmatmul.bf16.gmra.mxu0 %v2655
        %v2666 = vpop.f32.mrf.mxu0
        %v2667 = vadd.f32 0.0, %v2666
        %v2668 = vpop.f32.mrf.mxu0
        %2669 = vdwg.mxu0
        %v2670 = vadd.f32 %v2587, %v2667
        %v2671 = vld [vmem:[#allocation2 + $0x3] sm:$0x1]
        %v2672 = vld [vmem:[#allocation2 + $0xb] sm:$0x1]
        %v2673 = vld [vmem:[#allocation2 + $0x13] sm:$0x1]
        %v2674 = vld [vmem:[#allocation2 + $0x1b] sm:$0x1]
        %v2675 = vld [vmem:[#allocation2 + $0x23] sm:$0x1]
        %v2676 = vld [vmem:[#allocation2 + $0x2b] sm:$0x1]
        %v2677 = vld [vmem:[#allocation2 + $0x33] sm:$0x1]
        %v2678 = vld [vmem:[#allocation2 + $0x3b] sm:$0x1]
        %v2679 = vpack.c.bf16 %v2671, %v2671
        %v2680 = vpack.c.bf16 %v2672, %v2672
        %v2681 = vpack.c.bf16 %v2673, %v2673
        %v2682 = vpack.c.bf16 %v2674, %v2674
        %v2683 = vpack.c.bf16 %v2675, %v2675
        %v2684 = vpack.c.bf16 %v2676, %v2676
        %v2685 = vpack.c.bf16 %v2677, %v2677
        %v2686 = vpack.c.bf16 %v2678, %v2678
        %s2687 = scalar_lea.vmem %s9, 48
        %v2688 = vld [vmem:[%s2687] sm:$0xf]
        %v2689 = vld [vmem:[%s2687 + $0x4] sm:$0xf]
        %v2690 = vld [vmem:[%s2687 + $0x8] sm:$0xf]
        %v2691 = vld [vmem:[%s2687 + $0xc] sm:$0xf]
        %v2700 = vunpack.c.l.b16 %v2679
        %v2701 = vunpack.c.l.b16 %v2680
        %v2702 = vunpack.c.l.b16 %v2681
        %v2703 = vunpack.c.l.b16 %v2682
        %v2704 = vunpack.c.l.b16 %v2683
        %v2705 = vunpack.c.l.b16 %v2684
        %v2706 = vunpack.c.l.b16 %v2685
        %v2707 = vunpack.c.l.b16 %v2686
        %v2708 = vrot.slane %v2701, 7
        %v2709 = vsel %vm2482, %v2708, %v2700
        %v2710 = vrot.slane %v2702, 6
        %v2711 = vsel %vm2485, %v2710, %v2709
        %v2712 = vrot.slane %v2703, 5
        %v2713 = vsel %vm2488, %v2712, %v2711
        %v2714 = vrot.slane %v2704, 4
        %v2715 = vsel %vm2491, %v2714, %v2713
        %v2716 = vrot.slane %v2705, 3
        %v2717 = vsel %vm2494, %v2716, %v2715
        %v2718 = vrot.slane %v2706, 2
        %v2719 = vsel %vm2497, %v2718, %v2717
        %v2720 = vrot.slane %v2707, 1
        %v2721 = vsel %vm2500, %v2720, %v2719
        %v2722 = vpack.c.b16 %v2721, %v2721
        %v2727 = vunpack.c.l.b16 %v2688
        %v2728 = vunpack.c.l.b16 %v2689
        %v2729 = vunpack.c.l.b16 %v2690
        %v2730 = vunpack.c.l.b16 %v2691
        %v2731 = vpack.c.b16 %v2728, %v2727
        %v2732 = vpack.c.b16 %v2730, %v2729
        %v2736 = vsel %vm645, %v2722, 0
        %2738 = vmatpush.bf16.msra.mxu0 0
        %2739 = vmatpush.bf16.msra.mxu0 0
        %2740 = vmatpush.bf16.msra.mxu0 0
        %2741 = vmatpush.bf16.msra.mxu0 0
        %2742 = vmatpush.bf16.msra.mxu0 0
        %2743 = vmatpush.bf16.msra.mxu0 0
        %2744 = vmatpush.bf16.msra.mxu0 %v2732
        %2745 = vmatpush.bf16.msra.mxu0 %v2731
        %2746 = vmatmul.bf16.gmra.mxu0 %v2736
        %v2747 = vpop.f32.mrf.mxu0
        %v2748 = vadd.f32 0.0, %v2747
        %v2749 = vpop.f32.mrf.mxu0
        %2750 = vdwg.mxu0
        %v2751 = vadd.f32 %v2670, %v2748
        %v2752 = vld [vmem:[#allocation2 + $0x4] sm:$0x1]
        %v2753 = vld [vmem:[#allocation2 + $0xc] sm:$0x1]
        %v2754 = vld [vmem:[#allocation2 + $0x14] sm:$0x1]
        %v2755 = vld [vmem:[#allocation2 + $0x1c] sm:$0x1]
        %v2756 = vld [vmem:[#allocation2 + $0x24] sm:$0x1]
        %v2757 = vld [vmem:[#allocation2 + $0x2c] sm:$0x1]
        %v2758 = vld [vmem:[#allocation2 + $0x34] sm:$0x1]
        %v2759 = vld [vmem:[#allocation2 + $0x3c] sm:$0x1]
        %v2760 = vpack.c.bf16 %v2752, %v2752
        %v2761 = vpack.c.bf16 %v2753, %v2753
        %v2762 = vpack.c.bf16 %v2754, %v2754
        %v2763 = vpack.c.bf16 %v2755, %v2755
        %v2764 = vpack.c.bf16 %v2756, %v2756
        %v2765 = vpack.c.bf16 %v2757, %v2757
        %v2766 = vpack.c.bf16 %v2758, %v2758
        %v2767 = vpack.c.bf16 %v2759, %v2759
        %s2768 = scalar_lea.vmem %s9, 64
        %v2769 = vld [vmem:[%s2768] sm:$0xf]
        %v2770 = vld [vmem:[%s2768 + $0x4] sm:$0xf]
        %v2771 = vld [vmem:[%s2768 + $0x8] sm:$0xf]
        %v2772 = vld [vmem:[%s2768 + $0xc] sm:$0xf]
        %v2781 = vunpack.c.l.b16 %v2760
        %v2782 = vunpack.c.l.b16 %v2761
        %v2783 = vunpack.c.l.b16 %v2762
        %v2784 = vunpack.c.l.b16 %v2763
        %v2785 = vunpack.c.l.b16 %v2764
        %v2786 = vunpack.c.l.b16 %v2765
        %v2787 = vunpack.c.l.b16 %v2766
        %v2788 = vunpack.c.l.b16 %v2767
        %v2789 = vrot.slane %v2782, 7
        %v2790 = vsel %vm2482, %v2789, %v2781
        %v2791 = vrot.slane %v2783, 6
        %v2792 = vsel %vm2485, %v2791, %v2790
        %v2793 = vrot.slane %v2784, 5
        %v2794 = vsel %vm2488, %v2793, %v2792
        %v2795 = vrot.slane %v2785, 4
        %v2796 = vsel %vm2491, %v2795, %v2794
        %v2797 = vrot.slane %v2786, 3
        %v2798 = vsel %vm2494, %v2797, %v2796
        %v2799 = vrot.slane %v2787, 2
        %v2800 = vsel %vm2497, %v2799, %v2798
        %v2801 = vrot.slane %v2788, 1
        %v2802 = vsel %vm2500, %v2801, %v2800
        %v2803 = vpack.c.b16 %v2802, %v2802
        %v2808 = vunpack.c.l.b16 %v2769
        %v2809 = vunpack.c.l.b16 %v2770
        %v2810 = vunpack.c.l.b16 %v2771
        %v2811 = vunpack.c.l.b16 %v2772
        %v2812 = vpack.c.b16 %v2809, %v2808
        %v2813 = vpack.c.b16 %v2811, %v2810
        %v2817 = vsel %vm645, %v2803, 0
        %2819 = vmatpush.bf16.msra.mxu0 0
        %2820 = vmatpush.bf16.msra.mxu0 0
        %2821 = vmatpush.bf16.msra.mxu0 0
        %2822 = vmatpush.bf16.msra.mxu0 0
        %2823 = vmatpush.bf16.msra.mxu0 0
        %2824 = vmatpush.bf16.msra.mxu0 0
        %2825 = vmatpush.bf16.msra.mxu0 %v2813
        %2826 = vmatpush.bf16.msra.mxu0 %v2812
        %2827 = vmatmul.bf16.gmra.mxu0 %v2817
        %v2828 = vpop.f32.mrf.mxu0
        %v2829 = vadd.f32 0.0, %v2828
        %v2830 = vpop.f32.mrf.mxu0
        %2831 = vdwg.mxu0
        %v2832 = vadd.f32 %v2751, %v2829
        %v2833 = vld [vmem:[#allocation2 + $0x5] sm:$0x1]
        %v2834 = vld [vmem:[#allocation2 + $0xd] sm:$0x1]
        %v2835 = vld [vmem:[#allocation2 + $0x15] sm:$0x1]
        %v2836 = vld [vmem:[#allocation2 + $0x1d] sm:$0x1]
        %v2837 = vld [vmem:[#allocation2 + $0x25] sm:$0x1]
        %v2838 = vld [vmem:[#allocation2 + $0x2d] sm:$0x1]
        %v2839 = vld [vmem:[#allocation2 + $0x35] sm:$0x1]
        %v2840 = vld [vmem:[#allocation2 + $0x3d] sm:$0x1]
        %v2841 = vpack.c.bf16 %v2833, %v2833
        %v2842 = vpack.c.bf16 %v2834, %v2834
        %v2843 = vpack.c.bf16 %v2835, %v2835
        %v2844 = vpack.c.bf16 %v2836, %v2836
        %v2845 = vpack.c.bf16 %v2837, %v2837
        %v2846 = vpack.c.bf16 %v2838, %v2838
        %v2847 = vpack.c.bf16 %v2839, %v2839
        %v2848 = vpack.c.bf16 %v2840, %v2840
        %s2849 = scalar_lea.vmem %s9, 80
        %v2850 = vld [vmem:[%s2849] sm:$0xf]
        %v2851 = vld [vmem:[%s2849 + $0x4] sm:$0xf]
        %v2852 = vld [vmem:[%s2849 + $0x8] sm:$0xf]
        %v2853 = vld [vmem:[%s2849 + $0xc] sm:$0xf]
        %v2862 = vunpack.c.l.b16 %v2841
        %v2863 = vunpack.c.l.b16 %v2842
        %v2864 = vunpack.c.l.b16 %v2843
        %v2865 = vunpack.c.l.b16 %v2844
        %v2866 = vunpack.c.l.b16 %v2845
        %v2867 = vunpack.c.l.b16 %v2846
        %v2868 = vunpack.c.l.b16 %v2847
        %v2869 = vunpack.c.l.b16 %v2848
        %v2870 = vrot.slane %v2863, 7
        %v2871 = vsel %vm2482, %v2870, %v2862
        %v2872 = vrot.slane %v2864, 6
        %v2873 = vsel %vm2485, %v2872, %v2871
        %v2874 = vrot.slane %v2865, 5
        %v2875 = vsel %vm2488, %v2874, %v2873
        %v2876 = vrot.slane %v2866, 4
        %v2877 = vsel %vm2491, %v2876, %v2875
        %v2878 = vrot.slane %v2867, 3
        %v2879 = vsel %vm2494, %v2878, %v2877
        %v2880 = vrot.slane %v2868, 2
        %v2881 = vsel %vm2497, %v2880, %v2879
        %v2882 = vrot.slane %v2869, 1
        %v2883 = vsel %vm2500, %v2882, %v2881
        %v2884 = vpack.c.b16 %v2883, %v2883
        %v2889 = vunpack.c.l.b16 %v2850
        %v2890 = vunpack.c.l.b16 %v2851
        %v2891 = vunpack.c.l.b16 %v2852
        %v2892 = vunpack.c.l.b16 %v2853
        %v2893 = vpack.c.b16 %v2890, %v2889
        %v2894 = vpack.c.b16 %v2892, %v2891
        %v2898 = vsel %vm645, %v2884, 0
        %2900 = vmatpush.bf16.msra.mxu0 0
        %2901 = vmatpush.bf16.msra.mxu0 0
        %2902 = vmatpush.bf16.msra.mxu0 0
        %2903 = vmatpush.bf16.msra.mxu0 0
        %2904 = vmatpush.bf16.msra.mxu0 0
        %2905 = vmatpush.bf16.msra.mxu0 0
        %2906 = vmatpush.bf16.msra.mxu0 %v2894
        %2907 = vmatpush.bf16.msra.mxu0 %v2893
        %2908 = vmatmul.bf16.gmra.mxu0 %v2898
        %v2909 = vpop.f32.mrf.mxu0
        %v2910 = vadd.f32 0.0, %v2909
        %v2911 = vpop.f32.mrf.mxu0
        %2912 = vdwg.mxu0
        %v2913 = vadd.f32 %v2832, %v2910
        %v2914 = vld [vmem:[#allocation2 + $0x6] sm:$0x1]
        %v2915 = vld [vmem:[#allocation2 + $0xe] sm:$0x1]
        %v2916 = vld [vmem:[#allocation2 + $0x16] sm:$0x1]
        %v2917 = vld [vmem:[#allocation2 + $0x1e] sm:$0x1]
        %v2918 = vld [vmem:[#allocation2 + $0x26] sm:$0x1]
        %v2919 = vld [vmem:[#allocation2 + $0x2e] sm:$0x1]
        %v2920 = vld [vmem:[#allocation2 + $0x36] sm:$0x1]
        %v2921 = vld [vmem:[#allocation2 + $0x3e] sm:$0x1]
        %v2922 = vpack.c.bf16 %v2914, %v2914
        %v2923 = vpack.c.bf16 %v2915, %v2915
        %v2924 = vpack.c.bf16 %v2916, %v2916
        %v2925 = vpack.c.bf16 %v2917, %v2917
        %v2926 = vpack.c.bf16 %v2918, %v2918
        %v2927 = vpack.c.bf16 %v2919, %v2919
        %v2928 = vpack.c.bf16 %v2920, %v2920
        %v2929 = vpack.c.bf16 %v2921, %v2921
        %s2930 = scalar_lea.vmem %s9, 96
        %v2931 = vld [vmem:[%s2930] sm:$0xf]
        %v2932 = vld [vmem:[%s2930 + $0x4] sm:$0xf]
        %v2933 = vld [vmem:[%s2930 + $0x8] sm:$0xf]
        %v2934 = vld [vmem:[%s2930 + $0xc] sm:$0xf]
        %v2943 = vunpack.c.l.b16 %v2922
        %v2944 = vunpack.c.l.b16 %v2923
        %v2945 = vunpack.c.l.b16 %v2924
        %v2946 = vunpack.c.l.b16 %v2925
        %v2947 = vunpack.c.l.b16 %v2926
        %v2948 = vunpack.c.l.b16 %v2927
        %v2949 = vunpack.c.l.b16 %v2928
        %v2950 = vunpack.c.l.b16 %v2929
        %v2951 = vrot.slane %v2944, 7
        %v2952 = vsel %vm2482, %v2951, %v2943
        %v2953 = vrot.slane %v2945, 6
        %v2954 = vsel %vm2485, %v2953, %v2952
        %v2955 = vrot.slane %v2946, 5
        %v2956 = vsel %vm2488, %v2955, %v2954
        %v2957 = vrot.slane %v2947, 4
        %v2958 = vsel %vm2491, %v2957, %v2956
        %v2959 = vrot.slane %v2948, 3
        %v2960 = vsel %vm2494, %v2959, %v2958
        %v2961 = vrot.slane %v2949, 2
        %v2962 = vsel %vm2497, %v2961, %v2960
        %v2963 = vrot.slane %v2950, 1
        %v2964 = vsel %vm2500, %v2963, %v2962
        %v2965 = vpack.c.b16 %v2964, %v2964
        %v2970 = vunpack.c.l.b16 %v2931
        %v2971 = vunpack.c.l.b16 %v2932
        %v2972 = vunpack.c.l.b16 %v2933
        %v2973 = vunpack.c.l.b16 %v2934
        %v2974 = vpack.c.b16 %v2971, %v2970
        %v2975 = vpack.c.b16 %v2973, %v2972
        %v2979 = vsel %vm645, %v2965, 0
        %2981 = vmatpush.bf16.msra.mxu0 0
        %2982 = vmatpush.bf16.msra.mxu0 0
        %2983 = vmatpush.bf16.msra.mxu0 0
        %2984 = vmatpush.bf16.msra.mxu0 0
        %2985 = vmatpush.bf16.msra.mxu0 0
        %2986 = vmatpush.bf16.msra.mxu0 0
        %2987 = vmatpush.bf16.msra.mxu0 %v2975
        %2988 = vmatpush.bf16.msra.mxu0 %v2974
        %2989 = vmatmul.bf16.gmra.mxu0 %v2979
        %v2990 = vpop.f32.mrf.mxu0
        %v2991 = vadd.f32 0.0, %v2990
        %v2992 = vpop.f32.mrf.mxu0
        %2993 = vdwg.mxu0
        %v2994 = vadd.f32 %v2913, %v2991
        %v2995 = vld [vmem:[#allocation2 + $0x7] sm:$0x1]
        %v2996 = vld [vmem:[#allocation2 + $0xf] sm:$0x1]
        %v2997 = vld [vmem:[#allocation2 + $0x17] sm:$0x1]
        %v2998 = vld [vmem:[#allocation2 + $0x1f] sm:$0x1]
        %v2999 = vld [vmem:[#allocation2 + $0x27] sm:$0x1]
        %v3000 = vld [vmem:[#allocation2 + $0x2f] sm:$0x1]
        %v3001 = vld [vmem:[#allocation2 + $0x37] sm:$0x1]
        %v3002 = vld [vmem:[#allocation2 + $0x3f] sm:$0x1]
        %v3003 = vpack.c.bf16 %v2995, %v2995
        %v3004 = vpack.c.bf16 %v2996, %v2996
        %v3005 = vpack.c.bf16 %v2997, %v2997
        %v3006 = vpack.c.bf16 %v2998, %v2998
        %v3007 = vpack.c.bf16 %v2999, %v2999
        %v3008 = vpack.c.bf16 %v3000, %v3000
        %v3009 = vpack.c.bf16 %v3001, %v3001
        %v3010 = vpack.c.bf16 %v3002, %v3002
        %s3011 = scalar_lea.vmem %s9, 112
        %v3012 = vld [vmem:[%s3011] sm:$0xf]
        %v3013 = vld [vmem:[%s3011 + $0x4] sm:$0xf]
        %v3014 = vld [vmem:[%s3011 + $0x8] sm:$0xf]
        %v3015 = vld [vmem:[%s3011 + $0xc] sm:$0xf]
        %v3024 = vunpack.c.l.b16 %v3003
        %v3025 = vunpack.c.l.b16 %v3004
        %v3026 = vunpack.c.l.b16 %v3005
        %v3027 = vunpack.c.l.b16 %v3006
        %v3028 = vunpack.c.l.b16 %v3007
        %v3029 = vunpack.c.l.b16 %v3008
        %v3030 = vunpack.c.l.b16 %v3009
        %v3031 = vunpack.c.l.b16 %v3010
        %v3032 = vrot.slane %v3025, 7
        %v3033 = vsel %vm2482, %v3032, %v3024
        %v3034 = vrot.slane %v3026, 6
        %v3035 = vsel %vm2485, %v3034, %v3033
        %v3036 = vrot.slane %v3027, 5
        %v3037 = vsel %vm2488, %v3036, %v3035
        %v3038 = vrot.slane %v3028, 4
        %v3039 = vsel %vm2491, %v3038, %v3037
        %v3040 = vrot.slane %v3029, 3
        %v3041 = vsel %vm2494, %v3040, %v3039
        %v3042 = vrot.slane %v3030, 2
        %v3043 = vsel %vm2497, %v3042, %v3041
        %v3044 = vrot.slane %v3031, 1
        %v3045 = vsel %vm2500, %v3044, %v3043
        %v3046 = vpack.c.b16 %v3045, %v3045
        %v3051 = vunpack.c.l.b16 %v3012
        %v3052 = vunpack.c.l.b16 %v3013
        %v3053 = vunpack.c.l.b16 %v3014
        %v3054 = vunpack.c.l.b16 %v3015
        %v3055 = vpack.c.b16 %v3052, %v3051
        %v3056 = vpack.c.b16 %v3054, %v3053
        %v3060 = vsel %vm645, %v3046, 0
        %3062 = vmatpush.bf16.msra.mxu0 0
        %3063 = vmatpush.bf16.msra.mxu0 0
        %3064 = vmatpush.bf16.msra.mxu0 0
        %3065 = vmatpush.bf16.msra.mxu0 0
        %3066 = vmatpush.bf16.msra.mxu0 0
        %3067 = vmatpush.bf16.msra.mxu0 0
        %3068 = vmatpush.bf16.msra.mxu0 %v3056
        %3069 = vmatpush.bf16.msra.mxu0 %v3055
        %3070 = vmatmul.bf16.gmra.mxu0 %v3060
        %v3071 = vpop.f32.mrf.mxu0
        %v3072 = vadd.f32 0.0, %v3071
        %v3073 = vpop.f32.mrf.mxu0
        %3074 = vdwg.mxu0
        %v3075 = vadd.f32 %v2994, %v3072
        %v3076 = vld [vmem:[%s10] sm:$0x1]
        %v3078 = vperm.slane %v3076, 0
        %v3080 = vadd.f32 %v3075, %v3078
        %3081 = vst [vmem:[%s495] sm:$0xff] %v3080
      $region72: #{_lambda_.1} parent=63 // pred_fallthru
        _
      %p3082 = scmp.lt.s32.totalorder %s26, 0
      %s3083 = scalar_select %p3082, %s26, 0
      %s3084 = smul.addr %s3083, 8
      %s3085 = scalar_lea.vmem %s11, %s3084
      // Predicated region
      $region73: #{_lambda_.1} parent=63 // pred_check
        %p3086 = pneg %p313
      $region74: #{_lambda_.1} parent=63 // pred_check_branch
        %3088 = sbr.rel (%p3086) target = $region76
      $region75: #{_lambda_.1} parent=63 // pred_region
        _
      $region76: #{_lambda_.1} parent=63 // pred_fallthru
        _
      // Predicated region
      $region77: #{_lambda_.1} parent=63 // pred_check
        %p3089 = pneg %p313
      $region78: #{_lambda_.1} parent=63 // pred_check_branch
        %3091 = sbr.rel (%p3089) target = $region80
      $region79: #{_lambda_.1} parent=63 // pred_region
        %p3092 = scmp.lt.s32.totalorder %s26, 0
        %s3093 = scalar_select %p3092, %s26, 0
        %s3094 = smul.addr %s3093, 8
        %s3095 = scalar_lea.vmem %s11, %s3094
      $region80: #{_lambda_.1} parent=63 // pred_fallthru
        _
    $region64: #{_lambda_.1} parent=5 // pred_fallthru
      _
    %p3096 = scmp.le.s32.totalorder 2, %s17
    // Predicated region
    $region81: #{_lambda_.1} parent=5 // pred_check
      %p3097 = pneg %p3096
    $region82: #{_lambda_.1} parent=5 // pred_check_branch
      %3099 = sbr.rel (%p3097) target = $region84
    $region83: #{_lambda_.1} parent=5 // pred_region
      %s3100 = ssub.s32 %s17, 2
    $region84: #{_lambda_.1} parent=5 // pred_fallthru
      _
  $region6: #{_lambda_.1} parent=0 // loop_footer
    %s21 = sadd.s32 1, %s17
  $region7: #{_lambda_.1} parent=0 // loop_footer_branch
    %16 = sbr.rel target = $region3
  $region8: #{_lambda_.1} parent=0 // loop_exit
    _

</llo_original>
